<compile_context>
chip_gen: v7x
topology: tpu7x:2x2x1
jax: 0.10.0
libtpu: 0.0.40
codegen_flags: <defaults>
</compile_context>

<pallas_src>
import functools

import jax
import jax.numpy as jnp
from jax import lax
from jax.experimental import pallas as pl
from jax.experimental.pallas import tpu as pltpu

NEG = -1e30  # -inf surrogate for masked max


# ----------------------------------------------------------------------------
# Per-graph fused forward kernel
# ----------------------------------------------------------------------------
def _robotnet_kernel(nn_ref,                       # scalar-prefetch: (G,) valid-node counts
                     x_ref, adjT_ref,              # per-graph blocks
                     wf_ref, bl_ref, wua_ref, pwr_ref,
                     w1a_ref, w1b_ref, b1_ref, w2_ref, b2_ref, w3_ref, b3_ref,
                     out_ref):
    g = pl.program_id(0)
    x = x_ref[0]                       # (Ng, C)  node features of this graph
    adjT = adjT_ref[0]                 # (Ng, Ng) target-major: adjT[i, j] = 1 iff edge j -> i
    n, c = x.shape

    ridx = lax.broadcasted_iota(jnp.int32, (n, n), 0)    # target i (sublanes)
    cidx = lax.broadcasted_iota(jnp.int32, (n, n), 1)    # source j (lanes)

    # remove_self_loops + add_self_loops, fused predicate (no eye buffer).  Node-drop
    # masking is applied to msg below, so this adjacency is layer-invariant.
    adjT_sl = jnp.where(ridx == cidx, 1.0, adjT)

    # initial validity column from the per-graph node count (padding support)
    node_iota = lax.broadcasted_iota(jnp.int32, (n, 1), 0)
    vcol = (node_iota < nn_ref[g]).astype(jnp.float32)   # (Ng, 1)

    gmax_acc = jnp.zeros((1, c), jnp.float32)
    gmean_acc = jnp.zeros((1, c), jnp.float32)

    for l in range(3):  # conv1/pool1 .. conv3/pool3 (params stacked along dim 0)
        # ---- fused x-LHS matmul: [msg_pre | upd_x] = x @ [wl | wu_x]  (C -> 2C)
        xw = jnp.dot(x, wf_ref[l], preferred_element_type=jnp.float32)   # (Ng, 2C)
        # message = relu(lin(x_j)); dropped / padded sources masked to 0 (msg >= 0 and
        # every node keeps a self loop, so zeros never win a valid node's max).
        msg = jnp.maximum(xw[:, :c] + bl_ref[l], 0.0) * vcol             # (Ng, C)
        upd_x = xw[:, c:]                                                # (Ng, C)

        # ---- SAGE max-aggregation: aggr[i, :] = max_j adjT_sl[i, j] * msg[j, :]
        # Chain of rank-2 outer-product maxima; adjT columns are already sublane-major,
        # msg rows broadcast over sublanes -> pure vmul + vmax, no rank-3 intermediate,
        # no lane<->sublane relayout.  Static unroll: Ng is the small per-graph block.
        aggr = adjT_sl[:, 0:1] * msg[0:1, :]
        for j in range(1, n):
            aggr = jnp.maximum(aggr, adjT_sl[:, j:j + 1] * msg[j:j + 1, :])

        # update = relu([aggr | x] @ wu) ; outer F.relu is idempotent on this.
        x = jnp.maximum(
            jnp.dot(aggr, wua_ref[l], preferred_element_type=jnp.float32) + upd_x, 0.0)

        # ---- TopKPooling(ratio=0.8): score = tanh(x . w / ||w||)   (norm folded into pwr)
        scol = jnp.tanh(jnp.sum(x * pwr_ref[l], axis=1, keepdims=True))  # (Ng, 1)
        s_i = jnp.where(vcol > 0.0, scol, NEG)                           # invalid -> -inf
        # column -> row form (relayout-free iota-select + sublane max; Ng^2, negligible
        # per graph block; a skinny XLU transpose would be an alternative).
        s_row = jnp.max(jnp.where(ridx == cidx, s_i, NEG), axis=0, keepdims=True)  # (1, Ng)

        # rank[i] = #{j : s_j > s_i  or (s_j == s_i and j < i)}; invalid j have s = NEG
        # and can never outrank a valid node, so no separate row-validity mask is needed.
        better = (s_row > s_i) | ((s_row == s_i) & (cidx < ridx))
        rank = jnp.sum(better.astype(jnp.float32), axis=1, keepdims=True)  # (Ng, 1)
        count = jnp.sum(vcol)
        k = jnp.ceil(0.8 * count)
        keep = jnp.where((vcol > 0.0) & (rank < k), 1.0, 0.0)              # (Ng, 1)

        x = x * scol          # gate features (dropped rows are masked from every reduction)
        vcol = keep

        # ---- readout for this layer: [global_max_pool | global_mean_pool] over kept nodes
        gmax_acc = gmax_acc + jnp.max(jnp.where(vcol > 0.0, x, NEG), axis=0, keepdims=True)
        cnt = jnp.maximum(jnp.sum(vcol), 1.0)
        gmean_acc = gmean_acc + jnp.sum(x * vcol, axis=0, keepdims=True) / cnt  # exact mean

    # ---- MLP head (lin1 split across the [gmp | gap] concat boundary)
    h = (jnp.dot(gmax_acc, w1a_ref[...], preferred_element_type=jnp.float32)
         + jnp.dot(gmean_acc, w1b_ref[...], preferred_element_type=jnp.float32)
         + b1_ref[...])
    h = jnp.maximum(h, 0.0)
    h = jnp.maximum(jnp.dot(h, w2_ref[...], preferred_element_type=jnp.float32)
                    + b2_ref[...], 0.0)
    # TODO(synk): F.dropout(p=0.5) is a train-time random mask; identity at inference.
    y = jnp.dot(h, w3_ref[...], preferred_element_type=jnp.float32) + b3_ref[...]   # (1, 1)

    # numerically-safe sigmoid
    ey = jnp.exp(-jnp.abs(y))
    pos = 1.0 / (1.0 + ey)
    sig = jnp.where(y >= 0.0, pos, 1.0 - pos)

    out_ref[...] = jnp.broadcast_to(sig[None], out_ref.shape)   # lane-dense (1,1,128) write


# ----------------------------------------------------------------------------
# Wrapper: parameter packing + gridded pallas_call
# ----------------------------------------------------------------------------
def robotnet_forward(params, node_ids, adjT_blocks, nnodes, *, nodes_per_graph):
    G, Ng = adjT_blocks.shape[0], nodes_per_graph
    C = params["embedding"].shape[1]

    # Embedding lookup as an O(N*C) gather in the wrapper, reshaped to per-graph blocks.
    x0 = params["embedding"][node_ids[:, 0]].reshape(G, Ng, C)

    convs = [params["conv1"], params["conv2"], params["conv3"]]
    # fused x-LHS weight [wl | wu_x] (C, 2C); aggr half of update_lin kept separate.
    wf = jnp.stack([jnp.concatenate([p["wl"], p["wu"][C:]], axis=1) for p in convs])
    bl = jnp.stack([p["bl"] for p in convs])                     # (3, 1, C)
    wua = jnp.stack([p["wu"][:C] for p in convs])                # (3, C, C)
    # pool weight: row-major, unit-normalised (fold 1/||w|| in here, not in-kernel)
    pwr = jnp.stack([
        (params[f"pool{i}_w"] / jnp.sqrt(jnp.sum(params[f"pool{i}_w"] ** 2))).reshape(1, C)
        for i in (1, 2, 3)])                                      # (3, 1, C)

    w1a = params["lin1_w"][:C]      # gmax half of lin1
    w1b = params["lin1_w"][C:]      # gmean half of lin1

    def fullspec(shape):
        nd = len(shape)
        return pl.BlockSpec(shape, lambda g, nn, _nd=nd: (0,) * _nd)   # resident, DMA'd once

    grid_spec = pltpu.PrefetchScalarGridSpec(
        num_scalar_prefetch=1,
        grid=(G,),
        in_specs=[
            pl.BlockSpec((1, Ng, C), lambda g, nn: (g, 0, 0)),    # x block (pipelined)
            pl.BlockSpec((1, Ng, Ng), lambda g, nn: (g, 0, 0)),   # adjT block (pipelined)
            fullspec(wf.shape), fullspec(bl.shape), fullspec(wua.shape), fullspec(pwr.shape),
            fullspec(w1a.shape), fullspec(w1b.shape), fullspec(params["lin1_b"].shape),
            fullspec(params["lin2_w"].shape), fullspec(params["lin2_b"].shape),
            fullspec(params["lin3_w"].shape), fullspec(params["lin3_b"].shape),
        ],
        out_specs=pl.BlockSpec((1, 1, C), lambda g, nn: (g, 0, 0)),
    )

    out = pl.pallas_call(
        _robotnet_kernel,
        out_shape=jax.ShapeDtypeStruct((G, 1, C), jnp.float32),
        grid_spec=grid_spec,
        compiler_params=pltpu.CompilerParams(
            dimension_semantics=("parallel",),          # graphs independent -> both TCs on v7x
            vmem_limit_bytes=32 * 1024 * 1024),
    )(nnodes, x0, adjT_blocks, wf, bl, wua, pwr,
      w1a, w1b, params["lin1_b"], params["lin2_w"], params["lin2_b"],
      params["lin3_w"], params["lin3_b"])
    return out[:, 0, 0]                                           # (G,)


# ----------------------------------------------------------------------------
# Deterministic parameter init (matches module's __init__ shapes)
# ----------------------------------------------------------------------------
def init_params(key, vocab, embed_dim=128):
    keys = jax.random.split(key, 12)

    def lin(k, fan_in, fan_out):
        bound = 1.0 / float(fan_in) ** 0.5
        kw, kb = jax.random.split(k)
        w = jax.random.uniform(kw, (fan_in, fan_out), jnp.float32, -bound, bound)
        b = jax.random.uniform(kb, (1, fan_out), jnp.float32, -bound, bound)
        return w, b

    def sage(k, cin, cout):
        k1, k2 = jax.random.split(k)
        wl, bl = lin(k1, cin, cout)
        wu, _ = lin(k2, cin + cout, cin)   # update_lin: bias=False
        return {"wl": wl, "bl": bl, "wu": wu}

    p = {}
    p["embedding"] = jax.random.normal(keys[0], (vocab, embed_dim), jnp.float32)
    p["conv1"] = sage(keys[1], embed_dim, 128)
    p["conv2"] = sage(keys[2], 128, 128)
    p["conv3"] = sage(keys[3], 128, 128)
    p["pool1_w"] = jax.random.uniform(keys[4], (128, 1), jnp.float32, -1.0, 1.0)
    p["pool2_w"] = jax.random.uniform(keys[5], (128, 1), jnp.float32, -1.0, 1.0)
    p["pool3_w"] = jax.random.uniform(keys[6], (128, 1), jnp.float32, -1.0, 1.0)
    p["lin1_w"], p["lin1_b"] = lin(keys[7], 256, 128)
    p["lin2_w"], p["lin2_b"] = lin(keys[8], 128, 64)
    p["lin3_w"], p["lin3_b"] = lin(keys[9], 64, 1)
    # bn1 / bn2 exist in __init__ but are never used in forward -> omitted.
    return p


# ----------------------------------------------------------------------------
# Demo
# ----------------------------------------------------------------------------
if __name__ == "__main__":
    NUM_GRAPHS = 2
    NODES_PER_GRAPH = 16
    N = NUM_GRAPHS * NODES_PER_GRAPH
    VOCAB = 64  # df.shape[0] + 1 (synthetic)

    key = jax.random.PRNGKey(0)
    k_params, k_ids = jax.random.split(key)
    params = init_params(k_params, VOCAB)

    # Deterministic batch of 2 graphs: ring + chord edges per graph (all edges intra-graph).
    src, dst = [], []
    for gi in range(NUM_GRAPHS):
        base = gi * NODES_PER_GRAPH
        for i in range(NODES_PER_GRAPH):
            j = (i + 1) % NODES_PER_GRAPH
            ch = (i + 5) % NODES_PER_GRAPH
            src += [base + i, base + j, base + i]
            dst += [base + j, base + i, base + ch]
    src = jnp.array(src, jnp.int32)
    dst = jnp.array(dst, jnp.int32)

    # Per-graph target-major adjacency blocks: adjT[g, i_loc, j_loc] = 1 iff edge j -> i.
    adjT = jnp.zeros((NUM_GRAPHS, NODES_PER_GRAPH, NODES_PER_GRAPH), jnp.float32)
    adjT = adjT.at[dst // NODES_PER_GRAPH, dst % NODES_PER_GRAPH, src % NODES_PER_GRAPH].set(1.0)

    nnodes = jnp.full((NUM_GRAPHS,), NODES_PER_GRAPH, jnp.int32)   # valid nodes per graph
    node_ids = jax.random.randint(k_ids, (N, 1), 0, VOCAB, dtype=jnp.int32)

    fwd = jax.jit(functools.partial(robotnet_forward, nodes_per_graph=NODES_PER_GRAPH))
    out = fwd(params, node_ids, adjT, nnodes)
    out = jax.block_until_ready(out)

    assert out.shape == (NUM_GRAPHS,)
    assert bool(jnp.all(jnp.isfinite(out)))
    assert bool(jnp.all((out >= 0.0) & (out <= 1.0)))
    print("KERNEL_OK")
</pallas_src>

<mosaic_0001>
module attributes {stable_mosaic.version = 11 : i64} {
  func.func @_robotnet_kernel(%arg0: i32, %arg1: memref<2xi32, #tpu.memory_space<smem>>, %arg2: memref<1x16x128xf32, #tpu.memory_space<vmem>>, %arg3: memref<1x16x16xf32, #tpu.memory_space<vmem>>, %arg4: memref<3x128x256xf32, #tpu.memory_space<vmem>>, %arg5: memref<3x1x128xf32, #tpu.memory_space<vmem>>, %arg6: memref<3x128x128xf32, #tpu.memory_space<vmem>>, %arg7: memref<3x1x128xf32, #tpu.memory_space<vmem>>, %arg8: memref<128x128xf32, #tpu.memory_space<vmem>>, %arg9: memref<128x128xf32, #tpu.memory_space<vmem>>, %arg10: memref<1x128xf32, #tpu.memory_space<vmem>>, %arg11: memref<128x64xf32, #tpu.memory_space<vmem>>, %arg12: memref<1x64xf32, #tpu.memory_space<vmem>>, %arg13: memref<64x1xf32, #tpu.memory_space<vmem>>, %arg14: memref<1x1xf32, #tpu.memory_space<vmem>>, %arg15: memref<1x1x128xf32, #tpu.memory_space<vmem>>) attributes {dimension_semantics = [#tpu.dimension_semantics<parallel>], iteration_bounds = array<i64: 2>, scalar_prefetch = 1 : i64, scratch_operands = 0 : i64, tpu.core_type = #tpu.core_type<tc>, window_params = [{transform_indices = @transform_0, window_bounds = array<i64: 1, 16, 128>}, {transform_indices = @transform_1, window_bounds = array<i64: 1, 16, 16>}, {pipeline_mode = #tpu.pipeline_mode<synchronous>, transform_indices = @transform_2, window_bounds = array<i64: 3, 128, 256>}, {pipeline_mode = #tpu.pipeline_mode<synchronous>, transform_indices = @transform_3, window_bounds = array<i64: 3, 1, 128>}, {pipeline_mode = #tpu.pipeline_mode<synchronous>, transform_indices = @transform_4, window_bounds = array<i64: 3, 128, 128>}, {pipeline_mode = #tpu.pipeline_mode<synchronous>, transform_indices = @transform_5, window_bounds = array<i64: 3, 1, 128>}, {pipeline_mode = #tpu.pipeline_mode<synchronous>, transform_indices = @transform_6, window_bounds = array<i64: 128, 128>}, {pipeline_mode = #tpu.pipeline_mode<synchronous>, transform_indices = @transform_7, window_bounds = array<i64: 128, 128>}, {pipeline_mode = #tpu.pipeline_mode<synchronous>, transform_indices = @transform_8, window_bounds = array<i64: 1, 128>}, {pipeline_mode = #tpu.pipeline_mode<synchronous>, transform_indices = @transform_9, window_bounds = array<i64: 128, 64>}, {pipeline_mode = #tpu.pipeline_mode<synchronous>, transform_indices = @transform_10, window_bounds = array<i64: 1, 64>}, {pipeline_mode = #tpu.pipeline_mode<synchronous>, transform_indices = @transform_11, window_bounds = array<i64: 64, 1>}, {pipeline_mode = #tpu.pipeline_mode<synchronous>, transform_indices = @transform_12, window_bounds = array<i64: 1, 1>}, {transform_indices = @transform_13, window_bounds = array<i64: 1, 1, 128>}]} {
    %c0 = arith.constant 0 : index
    %c0_0 = arith.constant 0 : index
    %c0_1 = arith.constant 0 : index
    %0 = vector.load %arg2[%c0, %c0_0, %c0_1] : memref<1x16x128xf32, #tpu.memory_space<vmem>>, vector<1x16x128xf32>
    %1 = vector.shape_cast %0 : vector<1x16x128xf32> to vector<16x128xf32>
    %c0_2 = arith.constant 0 : index
    %c0_3 = arith.constant 0 : index
    %c0_4 = arith.constant 0 : index
    %2 = vector.load %arg3[%c0_2, %c0_3, %c0_4] : memref<1x16x16xf32, #tpu.memory_space<vmem>>, vector<1x16x16xf32>
    %3 = vector.shape_cast %2 : vector<1x16x16xf32> to vector<16x16xf32>
    %4 = tpu.iota {dimensions = array<i32: 0>} : vector<16x16xi32>
    %5 = tpu.iota {dimensions = array<i32: 1>} : vector<16x16xi32>
    %6 = arith.cmpi eq, %4, %5 : vector<16x16xi32>
    %cst = arith.constant 1.000000e+00 : f32
    %7 = vector.broadcast %cst : f32 to vector<16x16xf32>
    %8 = arith.select %6, %7, %3 : vector<16x16xi1>, vector<16x16xf32>
    %9 = tpu.iota {dimensions = array<i32: 0>} : vector<16x1xi32>
    %10 = arith.index_cast %arg0 : i32 to index
    %11 = memref.load %arg1[%10] : memref<2xi32, #tpu.memory_space<smem>>
    %12 = vector.broadcast %11 : i32 to vector<16x1xi32>
    %13 = arith.cmpi slt, %9, %12 : vector<16x1xi32>
    %14 = arith.extui %13 : vector<16x1xi1> to vector<16x1xi32>
    %15 = arith.sitofp %14 : vector<16x1xi32> to vector<16x1xf32>
    %cst_5 = arith.constant 0.000000e+00 : f32
    %16 = vector.broadcast %cst_5 : f32 to vector<1x128xf32>
    %cst_6 = arith.constant 0.000000e+00 : f32
    %17 = vector.broadcast %cst_6 : f32 to vector<1x128xf32>
    %c0_7 = arith.constant 0 : index
    %c0_8 = arith.constant 0 : index
    %c0_9 = arith.constant 0 : index
    %18 = vector.load %arg4[%c0_7, %c0_8, %c0_9] : memref<3x128x256xf32, #tpu.memory_space<vmem>>, vector<1x128x256xf32>
    %19 = vector.shape_cast %18 : vector<1x128x256xf32> to vector<128x256xf32>
    %cst_10 = arith.constant dense<0.000000e+00> : vector<16x256xf32>
    %20 = tpu.matmul %1, %19, %cst_10 {dimension_numbers = #tpu.dot_dimension_numbers<[1], [0], [0], [1], [0, 0, 1, 1], [], []>} : vector<16x128xf32>, vector<128x256xf32>, vector<16x256xf32> -> vector<16x256xf32>
    %21 = vector.extract_strided_slice %20 {offsets = [0, 0], sizes = [16, 128], strides = [1, 1]} : vector<16x256xf32> to vector<16x128xf32>
    %c0_11 = arith.constant 0 : index
    %c0_12 = arith.constant 0 : index
    %c0_13 = arith.constant 0 : index
    %22 = vector.load %arg5[%c0_11, %c0_12, %c0_13] : memref<3x1x128xf32, #tpu.memory_space<vmem>>, vector<1x1x128xf32>
    %23 = vector.shape_cast %22 : vector<1x1x128xf32> to vector<1x128xf32>
    %24 = vector.broadcast %23 : vector<1x128xf32> to vector<16x128xf32>
    %25 = arith.addf %21, %24 : vector<16x128xf32>
    %cst_14 = arith.constant 0.000000e+00 : f32
    %26 = vector.broadcast %cst_14 : f32 to vector<16x128xf32>
    %27 = arith.maximumf %25, %26 : vector<16x128xf32>
    %28 = vector.broadcast %15 : vector<16x1xf32> to vector<16x128xf32>
    %29 = arith.mulf %27, %28 : vector<16x128xf32>
    %30 = vector.extract_strided_slice %20 {offsets = [0, 128], sizes = [16, 128], strides = [1, 1]} : vector<16x256xf32> to vector<16x128xf32>
    %31 = vector.extract_strided_slice %8 {offsets = [0, 0], sizes = [16, 1], strides = [1, 1]} : vector<16x16xf32> to vector<16x1xf32>
    %32 = vector.extract_strided_slice %29 {offsets = [0, 0], sizes = [1, 128], strides = [1, 1]} : vector<16x128xf32> to vector<1x128xf32>
    %33 = vector.broadcast %31 : vector<16x1xf32> to vector<16x128xf32>
    %34 = vector.broadcast %32 : vector<1x128xf32> to vector<16x128xf32>
    %35 = arith.mulf %33, %34 : vector<16x128xf32>
    %36 = vector.extract_strided_slice %8 {offsets = [0, 1], sizes = [16, 1], strides = [1, 1]} : vector<16x16xf32> to vector<16x1xf32>
    %37 = vector.extract_strided_slice %29 {offsets = [1, 0], sizes = [1, 128], strides = [1, 1]} : vector<16x128xf32> to vector<1x128xf32>
    %38 = vector.broadcast %36 : vector<16x1xf32> to vector<16x128xf32>
    %39 = vector.broadcast %37 : vector<1x128xf32> to vector<16x128xf32>
    %40 = arith.mulf %38, %39 : vector<16x128xf32>
    %41 = arith.maximumf %35, %40 : vector<16x128xf32>
    %42 = vector.extract_strided_slice %8 {offsets = [0, 2], sizes = [16, 1], strides = [1, 1]} : vector<16x16xf32> to vector<16x1xf32>
    %43 = vector.extract_strided_slice %29 {offsets = [2, 0], sizes = [1, 128], strides = [1, 1]} : vector<16x128xf32> to vector<1x128xf32>
    %44 = vector.broadcast %42 : vector<16x1xf32> to vector<16x128xf32>
    %45 = vector.broadcast %43 : vector<1x128xf32> to vector<16x128xf32>
    %46 = arith.mulf %44, %45 : vector<16x128xf32>
    %47 = arith.maximumf %41, %46 : vector<16x128xf32>
    %48 = vector.extract_strided_slice %8 {offsets = [0, 3], sizes = [16, 1], strides = [1, 1]} : vector<16x16xf32> to vector<16x1xf32>
    %49 = vector.extract_strided_slice %29 {offsets = [3, 0], sizes = [1, 128], strides = [1, 1]} : vector<16x128xf32> to vector<1x128xf32>
    %50 = vector.broadcast %48 : vector<16x1xf32> to vector<16x128xf32>
    %51 = vector.broadcast %49 : vector<1x128xf32> to vector<16x128xf32>
    %52 = arith.mulf %50, %51 : vector<16x128xf32>
    %53 = arith.maximumf %47, %52 : vector<16x128xf32>
    %54 = vector.extract_strided_slice %8 {offsets = [0, 4], sizes = [16, 1], strides = [1, 1]} : vector<16x16xf32> to vector<16x1xf32>
    %55 = vector.extract_strided_slice %29 {offsets = [4, 0], sizes = [1, 128], strides = [1, 1]} : vector<16x128xf32> to vector<1x128xf32>
    %56 = vector.broadcast %54 : vector<16x1xf32> to vector<16x128xf32>
    %57 = vector.broadcast %55 : vector<1x128xf32> to vector<16x128xf32>
    %58 = arith.mulf %56, %57 : vector<16x128xf32>
    %59 = arith.maximumf %53, %58 : vector<16x128xf32>
    %60 = vector.extract_strided_slice %8 {offsets = [0, 5], sizes = [16, 1], strides = [1, 1]} : vector<16x16xf32> to vector<16x1xf32>
    %61 = vector.extract_strided_slice %29 {offsets = [5, 0], sizes = [1, 128], strides = [1, 1]} : vector<16x128xf32> to vector<1x128xf32>
    %62 = vector.broadcast %60 : vector<16x1xf32> to vector<16x128xf32>
    %63 = vector.broadcast %61 : vector<1x128xf32> to vector<16x128xf32>
    %64 = arith.mulf %62, %63 : vector<16x128xf32>
    %65 = arith.maximumf %59, %64 : vector<16x128xf32>
    %66 = vector.extract_strided_slice %8 {offsets = [0, 6], sizes = [16, 1], strides = [1, 1]} : vector<16x16xf32> to vector<16x1xf32>
    %67 = vector.extract_strided_slice %29 {offsets = [6, 0], sizes = [1, 128], strides = [1, 1]} : vector<16x128xf32> to vector<1x128xf32>
    %68 = vector.broadcast %66 : vector<16x1xf32> to vector<16x128xf32>
    %69 = vector.broadcast %67 : vector<1x128xf32> to vector<16x128xf32>
    %70 = arith.mulf %68, %69 : vector<16x128xf32>
    %71 = arith.maximumf %65, %70 : vector<16x128xf32>
    %72 = vector.extract_strided_slice %8 {offsets = [0, 7], sizes = [16, 1], strides = [1, 1]} : vector<16x16xf32> to vector<16x1xf32>
    %73 = vector.extract_strided_slice %29 {offsets = [7, 0], sizes = [1, 128], strides = [1, 1]} : vector<16x128xf32> to vector<1x128xf32>
    %74 = vector.broadcast %72 : vector<16x1xf32> to vector<16x128xf32>
    %75 = vector.broadcast %73 : vector<1x128xf32> to vector<16x128xf32>
    %76 = arith.mulf %74, %75 : vector<16x128xf32>
    %77 = arith.maximumf %71, %76 : vector<16x128xf32>
    %78 = vector.extract_strided_slice %8 {offsets = [0, 8], sizes = [16, 1], strides = [1, 1]} : vector<16x16xf32> to vector<16x1xf32>
    %79 = vector.extract_strided_slice %29 {offsets = [8, 0], sizes = [1, 128], strides = [1, 1]} : vector<16x128xf32> to vector<1x128xf32>
    %80 = vector.broadcast %78 : vector<16x1xf32> to vector<16x128xf32>
    %81 = vector.broadcast %79 : vector<1x128xf32> to vector<16x128xf32>
    %82 = arith.mulf %80, %81 : vector<16x128xf32>
    %83 = arith.maximumf %77, %82 : vector<16x128xf32>
    %84 = vector.extract_strided_slice %8 {offsets = [0, 9], sizes = [16, 1], strides = [1, 1]} : vector<16x16xf32> to vector<16x1xf32>
    %85 = vector.extract_strided_slice %29 {offsets = [9, 0], sizes = [1, 128], strides = [1, 1]} : vector<16x128xf32> to vector<1x128xf32>
    %86 = vector.broadcast %84 : vector<16x1xf32> to vector<16x128xf32>
    %87 = vector.broadcast %85 : vector<1x128xf32> to vector<16x128xf32>
    %88 = arith.mulf %86, %87 : vector<16x128xf32>
    %89 = arith.maximumf %83, %88 : vector<16x128xf32>
    %90 = vector.extract_strided_slice %8 {offsets = [0, 10], sizes = [16, 1], strides = [1, 1]} : vector<16x16xf32> to vector<16x1xf32>
    %91 = vector.extract_strided_slice %29 {offsets = [10, 0], sizes = [1, 128], strides = [1, 1]} : vector<16x128xf32> to vector<1x128xf32>
    %92 = vector.broadcast %90 : vector<16x1xf32> to vector<16x128xf32>
    %93 = vector.broadcast %91 : vector<1x128xf32> to vector<16x128xf32>
    %94 = arith.mulf %92, %93 : vector<16x128xf32>
    %95 = arith.maximumf %89, %94 : vector<16x128xf32>
    %96 = vector.extract_strided_slice %8 {offsets = [0, 11], sizes = [16, 1], strides = [1, 1]} : vector<16x16xf32> to vector<16x1xf32>
    %97 = vector.extract_strided_slice %29 {offsets = [11, 0], sizes = [1, 128], strides = [1, 1]} : vector<16x128xf32> to vector<1x128xf32>
    %98 = vector.broadcast %96 : vector<16x1xf32> to vector<16x128xf32>
    %99 = vector.broadcast %97 : vector<1x128xf32> to vector<16x128xf32>
    %100 = arith.mulf %98, %99 : vector<16x128xf32>
    %101 = arith.maximumf %95, %100 : vector<16x128xf32>
    %102 = vector.extract_strided_slice %8 {offsets = [0, 12], sizes = [16, 1], strides = [1, 1]} : vector<16x16xf32> to vector<16x1xf32>
    %103 = vector.extract_strided_slice %29 {offsets = [12, 0], sizes = [1, 128], strides = [1, 1]} : vector<16x128xf32> to vector<1x128xf32>
    %104 = vector.broadcast %102 : vector<16x1xf32> to vector<16x128xf32>
    %105 = vector.broadcast %103 : vector<1x128xf32> to vector<16x128xf32>
    %106 = arith.mulf %104, %105 : vector<16x128xf32>
    %107 = arith.maximumf %101, %106 : vector<16x128xf32>
    %108 = vector.extract_strided_slice %8 {offsets = [0, 13], sizes = [16, 1], strides = [1, 1]} : vector<16x16xf32> to vector<16x1xf32>
    %109 = vector.extract_strided_slice %29 {offsets = [13, 0], sizes = [1, 128], strides = [1, 1]} : vector<16x128xf32> to vector<1x128xf32>
    %110 = vector.broadcast %108 : vector<16x1xf32> to vector<16x128xf32>
    %111 = vector.broadcast %109 : vector<1x128xf32> to vector<16x128xf32>
    %112 = arith.mulf %110, %111 : vector<16x128xf32>
    %113 = arith.maximumf %107, %112 : vector<16x128xf32>
    %114 = vector.extract_strided_slice %8 {offsets = [0, 14], sizes = [16, 1], strides = [1, 1]} : vector<16x16xf32> to vector<16x1xf32>
    %115 = vector.extract_strided_slice %29 {offsets = [14, 0], sizes = [1, 128], strides = [1, 1]} : vector<16x128xf32> to vector<1x128xf32>
    %116 = vector.broadcast %114 : vector<16x1xf32> to vector<16x128xf32>
    %117 = vector.broadcast %115 : vector<1x128xf32> to vector<16x128xf32>
    %118 = arith.mulf %116, %117 : vector<16x128xf32>
    %119 = arith.maximumf %113, %118 : vector<16x128xf32>
    %120 = vector.extract_strided_slice %8 {offsets = [0, 15], sizes = [16, 1], strides = [1, 1]} : vector<16x16xf32> to vector<16x1xf32>
    %121 = vector.extract_strided_slice %29 {offsets = [15, 0], sizes = [1, 128], strides = [1, 1]} : vector<16x128xf32> to vector<1x128xf32>
    %122 = vector.broadcast %120 : vector<16x1xf32> to vector<16x128xf32>
    %123 = vector.broadcast %121 : vector<1x128xf32> to vector<16x128xf32>
    %124 = arith.mulf %122, %123 : vector<16x128xf32>
    %125 = arith.maximumf %119, %124 : vector<16x128xf32>
    %c0_15 = arith.constant 0 : index
    %c0_16 = arith.constant 0 : index
    %c0_17 = arith.constant 0 : index
    %126 = vector.load %arg6[%c0_15, %c0_16, %c0_17] : memref<3x128x128xf32, #tpu.memory_space<vmem>>, vector<1x128x128xf32>
    %127 = vector.shape_cast %126 : vector<1x128x128xf32> to vector<128x128xf32>
    %cst_18 = arith.constant dense<0.000000e+00> : vector<16x128xf32>
    %128 = tpu.matmul %125, %127, %cst_18 {dimension_numbers = #tpu.dot_dimension_numbers<[1], [0], [0], [1], [0, 0, 1, 1], [], []>} : vector<16x128xf32>, vector<128x128xf32>, vector<16x128xf32> -> vector<16x128xf32>
    %129 = arith.addf %128, %30 : vector<16x128xf32>
    %cst_19 = arith.constant 0.000000e+00 : f32
    %130 = vector.broadcast %cst_19 : f32 to vector<16x128xf32>
    %131 = arith.maximumf %129, %130 : vector<16x128xf32>
    %c0_20 = arith.constant 0 : index
    %c0_21 = arith.constant 0 : index
    %c0_22 = arith.constant 0 : index
    %132 = vector.load %arg7[%c0_20, %c0_21, %c0_22] : memref<3x1x128xf32, #tpu.memory_space<vmem>>, vector<1x1x128xf32>
    %133 = vector.shape_cast %132 : vector<1x1x128xf32> to vector<1x128xf32>
    %134 = vector.broadcast %133 : vector<1x128xf32> to vector<16x128xf32>
    %135 = arith.mulf %131, %134 : vector<16x128xf32>
    %cst_23 = arith.constant dense<0.000000e+00> : vector<16xf32>
    %136 = vector.multi_reduction <add>, %135, %cst_23 [1] : vector<16x128xf32> to vector<16xf32>
    %137 = vector.shape_cast %136 : vector<16xf32> to vector<16x1xf32>
    %138 = math.tanh %137 : vector<16x1xf32>
    %cst_24 = arith.constant 0.000000e+00 : f32
    %139 = vector.broadcast %cst_24 : f32 to vector<16x1xf32>
    %140 = arith.cmpf ogt, %15, %139 : vector<16x1xf32>
    %cst_25 = arith.constant -1.000000e+30 : f32
    %141 = vector.broadcast %cst_25 : f32 to vector<16x1xf32>
    %142 = arith.select %140, %138, %141 : vector<16x1xi1>, vector<16x1xf32>
    %143 = arith.cmpi eq, %4, %5 : vector<16x16xi32>
    %cst_26 = arith.constant -1.000000e+30 : f32
    %144 = vector.shape_cast %142 : vector<16x1xf32> to vector<16x1xf32>
    %145 = vector.broadcast %144 : vector<16x1xf32> to vector<16x16xf32>
    %146 = vector.broadcast %cst_26 : f32 to vector<16x16xf32>
    %147 = arith.select %143, %145, %146 : vector<16x16xi1>, vector<16x16xf32>
    %cst_27 = arith.constant dense<0xFF800000> : vector<16xf32>
    %148 = vector.multi_reduction <maximumf>, %147, %cst_27 [0] : vector<16x16xf32> to vector<16xf32>
    %149 = vector.shape_cast %148 : vector<16xf32> to vector<1x16xf32>
    %150 = vector.broadcast %149 : vector<1x16xf32> to vector<16x16xf32>
    %151 = vector.broadcast %142 : vector<16x1xf32> to vector<16x16xf32>
    %152 = arith.cmpf ogt, %150, %151 : vector<16x16xf32>
    %153 = vector.broadcast %149 : vector<1x16xf32> to vector<16x16xf32>
    %154 = vector.broadcast %142 : vector<16x1xf32> to vector<16x16xf32>
    %155 = arith.cmpf oeq, %153, %154 : vector<16x16xf32>
    %156 = arith.cmpi slt, %5, %4 : vector<16x16xi32>
    %157 = arith.andi %155, %156 : vector<16x16xi1>
    %158 = arith.ori %152, %157 : vector<16x16xi1>
    %159 = arith.extui %158 : vector<16x16xi1> to vector<16x16xi32>
    %160 = arith.sitofp %159 : vector<16x16xi32> to vector<16x16xf32>
    %cst_28 = arith.constant dense<0.000000e+00> : vector<16xf32>
    %161 = vector.multi_reduction <add>, %160, %cst_28 [1] : vector<16x16xf32> to vector<16xf32>
    %162 = vector.shape_cast %161 : vector<16xf32> to vector<16x1xf32>
    %163 = vector.shape_cast %15 : vector<16x1xf32> to vector<1x16x1xf32>
    %cst_29 = arith.constant dense<0.000000e+00> : vector<1xf32>
    %164 = vector.multi_reduction <add>, %163, %cst_29 [1, 2] : vector<1x16x1xf32> to vector<1xf32>
    %165 = vector.shape_cast %164 : vector<1xf32> to vector<1x1x1xf32>
    %166 = vector.extract %165[0, 0, 0] : f32 from vector<1x1x1xf32>
    %cst_30 = arith.constant 8.000000e-01 : f32
    %167 = arith.mulf %cst_30, %166 : f32
    %168 = math.ceil %167 : f32
    %cst_31 = arith.constant 0.000000e+00 : f32
    %169 = vector.broadcast %cst_31 : f32 to vector<16x1xf32>
    %170 = arith.cmpf ogt, %15, %169 : vector<16x1xf32>
    %171 = vector.broadcast %168 : f32 to vector<16x1xf32>
    %172 = arith.cmpf olt, %162, %171 : vector<16x1xf32>
    %173 = arith.andi %170, %172 : vector<16x1xi1>
    %cst_32 = arith.constant 1.000000e+00 : f32
    %cst_33 = arith.constant 0.000000e+00 : f32
    %174 = vector.broadcast %cst_32 : f32 to vector<16x1xf32>
    %175 = vector.broadcast %cst_33 : f32 to vector<16x1xf32>
    %176 = arith.select %173, %174, %175 : vector<16x1xi1>, vector<16x1xf32>
    %177 = vector.broadcast %138 : vector<16x1xf32> to vector<16x128xf32>
    %178 = arith.mulf %131, %177 : vector<16x128xf32>
    %cst_34 = arith.constant 0.000000e+00 : f32
    %179 = vector.broadcast %cst_34 : f32 to vector<16x1xf32>
    %180 = arith.cmpf ogt, %176, %179 : vector<16x1xf32>
    %cst_35 = arith.constant -1.000000e+30 : f32
    %181 = vector.shape_cast %180 : vector<16x1xi1> to vector<16x1xi1>
    %182 = vector.broadcast %181 : vector<16x1xi1> to vector<16x128xi1>
    %183 = vector.broadcast %cst_35 : f32 to vector<16x128xf32>
    %184 = arith.select %182, %178, %183 : vector<16x128xi1>, vector<16x128xf32>
    %cst_36 = arith.constant dense<0xFF800000> : vector<128xf32>
    %185 = vector.multi_reduction <maximumf>, %184, %cst_36 [0] : vector<16x128xf32> to vector<128xf32>
    %186 = vector.shape_cast %185 : vector<128xf32> to vector<1x128xf32>
    %187 = arith.addf %16, %186 : vector<1x128xf32>
    %188 = vector.shape_cast %176 : vector<16x1xf32> to vector<1x16x1xf32>
    %cst_37 = arith.constant dense<0.000000e+00> : vector<1xf32>
    %189 = vector.multi_reduction <add>, %188, %cst_37 [1, 2] : vector<1x16x1xf32> to vector<1xf32>
    %190 = vector.shape_cast %189 : vector<1xf32> to vector<1x1x1xf32>
    %191 = vector.extract %190[0, 0, 0] : f32 from vector<1x1x1xf32>
    %cst_38 = arith.constant 1.000000e+00 : f32
    %192 = arith.maximumf %191, %cst_38 : f32
    %193 = vector.broadcast %176 : vector<16x1xf32> to vector<16x128xf32>
    %194 = arith.mulf %178, %193 : vector<16x128xf32>
    %cst_39 = arith.constant dense<0.000000e+00> : vector<128xf32>
    %195 = vector.multi_reduction <add>, %194, %cst_39 [0] : vector<16x128xf32> to vector<128xf32>
    %196 = vector.shape_cast %195 : vector<128xf32> to vector<1x128xf32>
    %197 = vector.broadcast %192 : f32 to vector<1x128xf32>
    %198 = arith.divf %196, %197 : vector<1x128xf32>
    %199 = arith.addf %17, %198 : vector<1x128xf32>
    %c1 = arith.constant 1 : index
    %c0_40 = arith.constant 0 : index
    %c0_41 = arith.constant 0 : index
    %200 = vector.load %arg4[%c1, %c0_40, %c0_41] : memref<3x128x256xf32, #tpu.memory_space<vmem>>, vector<1x128x256xf32>
    %201 = vector.shape_cast %200 : vector<1x128x256xf32> to vector<128x256xf32>
    %cst_42 = arith.constant dense<0.000000e+00> : vector<16x256xf32>
    %202 = tpu.matmul %178, %201, %cst_42 {dimension_numbers = #tpu.dot_dimension_numbers<[1], [0], [0], [1], [0, 0, 1, 1], [], []>} : vector<16x128xf32>, vector<128x256xf32>, vector<16x256xf32> -> vector<16x256xf32>
    %203 = vector.extract_strided_slice %202 {offsets = [0, 0], sizes = [16, 128], strides = [1, 1]} : vector<16x256xf32> to vector<16x128xf32>
    %c1_43 = arith.constant 1 : index
    %c0_44 = arith.constant 0 : index
    %c0_45 = arith.constant 0 : index
    %204 = vector.load %arg5[%c1_43, %c0_44, %c0_45] : memref<3x1x128xf32, #tpu.memory_space<vmem>>, vector<1x1x128xf32>
    %205 = vector.shape_cast %204 : vector<1x1x128xf32> to vector<1x128xf32>
    %206 = vector.broadcast %205 : vector<1x128xf32> to vector<16x128xf32>
    %207 = arith.addf %203, %206 : vector<16x128xf32>
    %cst_46 = arith.constant 0.000000e+00 : f32
    %208 = vector.broadcast %cst_46 : f32 to vector<16x128xf32>
    %209 = arith.maximumf %207, %208 : vector<16x128xf32>
    %210 = vector.broadcast %176 : vector<16x1xf32> to vector<16x128xf32>
    %211 = arith.mulf %209, %210 : vector<16x128xf32>
    %212 = vector.extract_strided_slice %202 {offsets = [0, 128], sizes = [16, 128], strides = [1, 1]} : vector<16x256xf32> to vector<16x128xf32>
    %213 = vector.extract_strided_slice %8 {offsets = [0, 0], sizes = [16, 1], strides = [1, 1]} : vector<16x16xf32> to vector<16x1xf32>
    %214 = vector.extract_strided_slice %211 {offsets = [0, 0], sizes = [1, 128], strides = [1, 1]} : vector<16x128xf32> to vector<1x128xf32>
    %215 = vector.broadcast %213 : vector<16x1xf32> to vector<16x128xf32>
    %216 = vector.broadcast %214 : vector<1x128xf32> to vector<16x128xf32>
    %217 = arith.mulf %215, %216 : vector<16x128xf32>
    %218 = vector.extract_strided_slice %8 {offsets = [0, 1], sizes = [16, 1], strides = [1, 1]} : vector<16x16xf32> to vector<16x1xf32>
    %219 = vector.extract_strided_slice %211 {offsets = [1, 0], sizes = [1, 128], strides = [1, 1]} : vector<16x128xf32> to vector<1x128xf32>
    %220 = vector.broadcast %218 : vector<16x1xf32> to vector<16x128xf32>
    %221 = vector.broadcast %219 : vector<1x128xf32> to vector<16x128xf32>
    %222 = arith.mulf %220, %221 : vector<16x128xf32>
    %223 = arith.maximumf %217, %222 : vector<16x128xf32>
    %224 = vector.extract_strided_slice %8 {offsets = [0, 2], sizes = [16, 1], strides = [1, 1]} : vector<16x16xf32> to vector<16x1xf32>
    %225 = vector.extract_strided_slice %211 {offsets = [2, 0], sizes = [1, 128], strides = [1, 1]} : vector<16x128xf32> to vector<1x128xf32>
    %226 = vector.broadcast %224 : vector<16x1xf32> to vector<16x128xf32>
    %227 = vector.broadcast %225 : vector<1x128xf32> to vector<16x128xf32>
    %228 = arith.mulf %226, %227 : vector<16x128xf32>
    %229 = arith.maximumf %223, %228 : vector<16x128xf32>
    %230 = vector.extract_strided_slice %8 {offsets = [0, 3], sizes = [16, 1], strides = [1, 1]} : vector<16x16xf32> to vector<16x1xf32>
    %231 = vector.extract_strided_slice %211 {offsets = [3, 0], sizes = [1, 128], strides = [1, 1]} : vector<16x128xf32> to vector<1x128xf32>
    %232 = vector.broadcast %230 : vector<16x1xf32> to vector<16x128xf32>
    %233 = vector.broadcast %231 : vector<1x128xf32> to vector<16x128xf32>
    %234 = arith.mulf %232, %233 : vector<16x128xf32>
    %235 = arith.maximumf %229, %234 : vector<16x128xf32>
    %236 = vector.extract_strided_slice %8 {offsets = [0, 4], sizes = [16, 1], strides = [1, 1]} : vector<16x16xf32> to vector<16x1xf32>
    %237 = vector.extract_strided_slice %211 {offsets = [4, 0], sizes = [1, 128], strides = [1, 1]} : vector<16x128xf32> to vector<1x128xf32>
    %238 = vector.broadcast %236 : vector<16x1xf32> to vector<16x128xf32>
    %239 = vector.broadcast %237 : vector<1x128xf32> to vector<16x128xf32>
    %240 = arith.mulf %238, %239 : vector<16x128xf32>
    %241 = arith.maximumf %235, %240 : vector<16x128xf32>
    %242 = vector.extract_strided_slice %8 {offsets = [0, 5], sizes = [16, 1], strides = [1, 1]} : vector<16x16xf32> to vector<16x1xf32>
    %243 = vector.extract_strided_slice %211 {offsets = [5, 0], sizes = [1, 128], strides = [1, 1]} : vector<16x128xf32> to vector<1x128xf32>
    %244 = vector.broadcast %242 : vector<16x1xf32> to vector<16x128xf32>
    %245 = vector.broadcast %243 : vector<1x128xf32> to vector<16x128xf32>
    %246 = arith.mulf %244, %245 : vector<16x128xf32>
    %247 = arith.maximumf %241, %246 : vector<16x128xf32>
    %248 = vector.extract_strided_slice %8 {offsets = [0, 6], sizes = [16, 1], strides = [1, 1]} : vector<16x16xf32> to vector<16x1xf32>
    %249 = vector.extract_strided_slice %211 {offsets = [6, 0], sizes = [1, 128], strides = [1, 1]} : vector<16x128xf32> to vector<1x128xf32>
    %250 = vector.broadcast %248 : vector<16x1xf32> to vector<16x128xf32>
    %251 = vector.broadcast %249 : vector<1x128xf32> to vector<16x128xf32>
    %252 = arith.mulf %250, %251 : vector<16x128xf32>
    %253 = arith.maximumf %247, %252 : vector<16x128xf32>
    %254 = vector.extract_strided_slice %8 {offsets = [0, 7], sizes = [16, 1], strides = [1, 1]} : vector<16x16xf32> to vector<16x1xf32>
    %255 = vector.extract_strided_slice %211 {offsets = [7, 0], sizes = [1, 128], strides = [1, 1]} : vector<16x128xf32> to vector<1x128xf32>
    %256 = vector.broadcast %254 : vector<16x1xf32> to vector<16x128xf32>
    %257 = vector.broadcast %255 : vector<1x128xf32> to vector<16x128xf32>
    %258 = arith.mulf %256, %257 : vector<16x128xf32>
    %259 = arith.maximumf %253, %258 : vector<16x128xf32>
    %260 = vector.extract_strided_slice %8 {offsets = [0, 8], sizes = [16, 1], strides = [1, 1]} : vector<16x16xf32> to vector<16x1xf32>
    %261 = vector.extract_strided_slice %211 {offsets = [8, 0], sizes = [1, 128], strides = [1, 1]} : vector<16x128xf32> to vector<1x128xf32>
    %262 = vector.broadcast %260 : vector<16x1xf32> to vector<16x128xf32>
    %263 = vector.broadcast %261 : vector<1x128xf32> to vector<16x128xf32>
    %264 = arith.mulf %262, %263 : vector<16x128xf32>
    %265 = arith.maximumf %259, %264 : vector<16x128xf32>
    %266 = vector.extract_strided_slice %8 {offsets = [0, 9], sizes = [16, 1], strides = [1, 1]} : vector<16x16xf32> to vector<16x1xf32>
    %267 = vector.extract_strided_slice %211 {offsets = [9, 0], sizes = [1, 128], strides = [1, 1]} : vector<16x128xf32> to vector<1x128xf32>
    %268 = vector.broadcast %266 : vector<16x1xf32> to vector<16x128xf32>
    %269 = vector.broadcast %267 : vector<1x128xf32> to vector<16x128xf32>
    %270 = arith.mulf %268, %269 : vector<16x128xf32>
    %271 = arith.maximumf %265, %270 : vector<16x128xf32>
    %272 = vector.extract_strided_slice %8 {offsets = [0, 10], sizes = [16, 1], strides = [1, 1]} : vector<16x16xf32> to vector<16x1xf32>
    %273 = vector.extract_strided_slice %211 {offsets = [10, 0], sizes = [1, 128], strides = [1, 1]} : vector<16x128xf32> to vector<1x128xf32>
    %274 = vector.broadcast %272 : vector<16x1xf32> to vector<16x128xf32>
    %275 = vector.broadcast %273 : vector<1x128xf32> to vector<16x128xf32>
    %276 = arith.mulf %274, %275 : vector<16x128xf32>
    %277 = arith.maximumf %271, %276 : vector<16x128xf32>
    %278 = vector.extract_strided_slice %8 {offsets = [0, 11], sizes = [16, 1], strides = [1, 1]} : vector<16x16xf32> to vector<16x1xf32>
    %279 = vector.extract_strided_slice %211 {offsets = [11, 0], sizes = [1, 128], strides = [1, 1]} : vector<16x128xf32> to vector<1x128xf32>
    %280 = vector.broadcast %278 : vector<16x1xf32> to vector<16x128xf32>
    %281 = vector.broadcast %279 : vector<1x128xf32> to vector<16x128xf32>
    %282 = arith.mulf %280, %281 : vector<16x128xf32>
    %283 = arith.maximumf %277, %282 : vector<16x128xf32>
    %284 = vector.extract_strided_slice %8 {offsets = [0, 12], sizes = [16, 1], strides = [1, 1]} : vector<16x16xf32> to vector<16x1xf32>
    %285 = vector.extract_strided_slice %211 {offsets = [12, 0], sizes = [1, 128], strides = [1, 1]} : vector<16x128xf32> to vector<1x128xf32>
    %286 = vector.broadcast %284 : vector<16x1xf32> to vector<16x128xf32>
    %287 = vector.broadcast %285 : vector<1x128xf32> to vector<16x128xf32>
    %288 = arith.mulf %286, %287 : vector<16x128xf32>
    %289 = arith.maximumf %283, %288 : vector<16x128xf32>
    %290 = vector.extract_strided_slice %8 {offsets = [0, 13], sizes = [16, 1], strides = [1, 1]} : vector<16x16xf32> to vector<16x1xf32>
    %291 = vector.extract_strided_slice %211 {offsets = [13, 0], sizes = [1, 128], strides = [1, 1]} : vector<16x128xf32> to vector<1x128xf32>
    %292 = vector.broadcast %290 : vector<16x1xf32> to vector<16x128xf32>
    %293 = vector.broadcast %291 : vector<1x128xf32> to vector<16x128xf32>
    %294 = arith.mulf %292, %293 : vector<16x128xf32>
    %295 = arith.maximumf %289, %294 : vector<16x128xf32>
    %296 = vector.extract_strided_slice %8 {offsets = [0, 14], sizes = [16, 1], strides = [1, 1]} : vector<16x16xf32> to vector<16x1xf32>
    %297 = vector.extract_strided_slice %211 {offsets = [14, 0], sizes = [1, 128], strides = [1, 1]} : vector<16x128xf32> to vector<1x128xf32>
    %298 = vector.broadcast %296 : vector<16x1xf32> to vector<16x128xf32>
    %299 = vector.broadcast %297 : vector<1x128xf32> to vector<16x128xf32>
    %300 = arith.mulf %298, %299 : vector<16x128xf32>
    %301 = arith.maximumf %295, %300 : vector<16x128xf32>
    %302 = vector.extract_strided_slice %8 {offsets = [0, 15], sizes = [16, 1], strides = [1, 1]} : vector<16x16xf32> to vector<16x1xf32>
    %303 = vector.extract_strided_slice %211 {offsets = [15, 0], sizes = [1, 128], strides = [1, 1]} : vector<16x128xf32> to vector<1x128xf32>
    %304 = vector.broadcast %302 : vector<16x1xf32> to vector<16x128xf32>
    %305 = vector.broadcast %303 : vector<1x128xf32> to vector<16x128xf32>
    %306 = arith.mulf %304, %305 : vector<16x128xf32>
    %307 = arith.maximumf %301, %306 : vector<16x128xf32>
    %c1_47 = arith.constant 1 : index
    %c0_48 = arith.constant 0 : index
    %c0_49 = arith.constant 0 : index
    %308 = vector.load %arg6[%c1_47, %c0_48, %c0_49] : memref<3x128x128xf32, #tpu.memory_space<vmem>>, vector<1x128x128xf32>
    %309 = vector.shape_cast %308 : vector<1x128x128xf32> to vector<128x128xf32>
    %cst_50 = arith.constant dense<0.000000e+00> : vector<16x128xf32>
    %310 = tpu.matmul %307, %309, %cst_50 {dimension_numbers = #tpu.dot_dimension_numbers<[1], [0], [0], [1], [0, 0, 1, 1], [], []>} : vector<16x128xf32>, vector<128x128xf32>, vector<16x128xf32> -> vector<16x128xf32>
    %311 = arith.addf %310, %212 : vector<16x128xf32>
    %cst_51 = arith.constant 0.000000e+00 : f32
    %312 = vector.broadcast %cst_51 : f32 to vector<16x128xf32>
    %313 = arith.maximumf %311, %312 : vector<16x128xf32>
    %c1_52 = arith.constant 1 : index
    %c0_53 = arith.constant 0 : index
    %c0_54 = arith.constant 0 : index
    %314 = vector.load %arg7[%c1_52, %c0_53, %c0_54] : memref<3x1x128xf32, #tpu.memory_space<vmem>>, vector<1x1x128xf32>
    %315 = vector.shape_cast %314 : vector<1x1x128xf32> to vector<1x128xf32>
    %316 = vector.broadcast %315 : vector<1x128xf32> to vector<16x128xf32>
    %317 = arith.mulf %313, %316 : vector<16x128xf32>
    %cst_55 = arith.constant dense<0.000000e+00> : vector<16xf32>
    %318 = vector.multi_reduction <add>, %317, %cst_55 [1] : vector<16x128xf32> to vector<16xf32>
    %319 = vector.shape_cast %318 : vector<16xf32> to vector<16x1xf32>
    %320 = math.tanh %319 : vector<16x1xf32>
    %cst_56 = arith.constant 0.000000e+00 : f32
    %321 = vector.broadcast %cst_56 : f32 to vector<16x1xf32>
    %322 = arith.cmpf ogt, %176, %321 : vector<16x1xf32>
    %cst_57 = arith.constant -1.000000e+30 : f32
    %323 = vector.broadcast %cst_57 : f32 to vector<16x1xf32>
    %324 = arith.select %322, %320, %323 : vector<16x1xi1>, vector<16x1xf32>
    %325 = arith.cmpi eq, %4, %5 : vector<16x16xi32>
    %cst_58 = arith.constant -1.000000e+30 : f32
    %326 = vector.shape_cast %324 : vector<16x1xf32> to vector<16x1xf32>
    %327 = vector.broadcast %326 : vector<16x1xf32> to vector<16x16xf32>
    %328 = vector.broadcast %cst_58 : f32 to vector<16x16xf32>
    %329 = arith.select %325, %327, %328 : vector<16x16xi1>, vector<16x16xf32>
    %cst_59 = arith.constant dense<0xFF800000> : vector<16xf32>
    %330 = vector.multi_reduction <maximumf>, %329, %cst_59 [0] : vector<16x16xf32> to vector<16xf32>
    %331 = vector.shape_cast %330 : vector<16xf32> to vector<1x16xf32>
    %332 = vector.broadcast %331 : vector<1x16xf32> to vector<16x16xf32>
    %333 = vector.broadcast %324 : vector<16x1xf32> to vector<16x16xf32>
    %334 = arith.cmpf ogt, %332, %333 : vector<16x16xf32>
    %335 = vector.broadcast %331 : vector<1x16xf32> to vector<16x16xf32>
    %336 = vector.broadcast %324 : vector<16x1xf32> to vector<16x16xf32>
    %337 = arith.cmpf oeq, %335, %336 : vector<16x16xf32>
    %338 = arith.cmpi slt, %5, %4 : vector<16x16xi32>
    %339 = arith.andi %337, %338 : vector<16x16xi1>
    %340 = arith.ori %334, %339 : vector<16x16xi1>
    %341 = arith.extui %340 : vector<16x16xi1> to vector<16x16xi32>
    %342 = arith.sitofp %341 : vector<16x16xi32> to vector<16x16xf32>
    %cst_60 = arith.constant dense<0.000000e+00> : vector<16xf32>
    %343 = vector.multi_reduction <add>, %342, %cst_60 [1] : vector<16x16xf32> to vector<16xf32>
    %344 = vector.shape_cast %343 : vector<16xf32> to vector<16x1xf32>
    %345 = vector.shape_cast %176 : vector<16x1xf32> to vector<1x16x1xf32>
    %cst_61 = arith.constant dense<0.000000e+00> : vector<1xf32>
    %346 = vector.multi_reduction <add>, %345, %cst_61 [1, 2] : vector<1x16x1xf32> to vector<1xf32>
    %347 = vector.shape_cast %346 : vector<1xf32> to vector<1x1x1xf32>
    %348 = vector.extract %347[0, 0, 0] : f32 from vector<1x1x1xf32>
    %cst_62 = arith.constant 8.000000e-01 : f32
    %349 = arith.mulf %cst_62, %348 : f32
    %350 = math.ceil %349 : f32
    %cst_63 = arith.constant 0.000000e+00 : f32
    %351 = vector.broadcast %cst_63 : f32 to vector<16x1xf32>
    %352 = arith.cmpf ogt, %176, %351 : vector<16x1xf32>
    %353 = vector.broadcast %350 : f32 to vector<16x1xf32>
    %354 = arith.cmpf olt, %344, %353 : vector<16x1xf32>
    %355 = arith.andi %352, %354 : vector<16x1xi1>
    %cst_64 = arith.constant 1.000000e+00 : f32
    %cst_65 = arith.constant 0.000000e+00 : f32
    %356 = vector.broadcast %cst_64 : f32 to vector<16x1xf32>
    %357 = vector.broadcast %cst_65 : f32 to vector<16x1xf32>
    %358 = arith.select %355, %356, %357 : vector<16x1xi1>, vector<16x1xf32>
    %359 = vector.broadcast %320 : vector<16x1xf32> to vector<16x128xf32>
    %360 = arith.mulf %313, %359 : vector<16x128xf32>
    %cst_66 = arith.constant 0.000000e+00 : f32
    %361 = vector.broadcast %cst_66 : f32 to vector<16x1xf32>
    %362 = arith.cmpf ogt, %358, %361 : vector<16x1xf32>
    %cst_67 = arith.constant -1.000000e+30 : f32
    %363 = vector.shape_cast %362 : vector<16x1xi1> to vector<16x1xi1>
    %364 = vector.broadcast %363 : vector<16x1xi1> to vector<16x128xi1>
    %365 = vector.broadcast %cst_67 : f32 to vector<16x128xf32>
    %366 = arith.select %364, %360, %365 : vector<16x128xi1>, vector<16x128xf32>
    %cst_68 = arith.constant dense<0xFF800000> : vector<128xf32>
    %367 = vector.multi_reduction <maximumf>, %366, %cst_68 [0] : vector<16x128xf32> to vector<128xf32>
    %368 = vector.shape_cast %367 : vector<128xf32> to vector<1x128xf32>
    %369 = arith.addf %187, %368 : vector<1x128xf32>
    %370 = vector.shape_cast %358 : vector<16x1xf32> to vector<1x16x1xf32>
    %cst_69 = arith.constant dense<0.000000e+00> : vector<1xf32>
    %371 = vector.multi_reduction <add>, %370, %cst_69 [1, 2] : vector<1x16x1xf32> to vector<1xf32>
    %372 = vector.shape_cast %371 : vector<1xf32> to vector<1x1x1xf32>
    %373 = vector.extract %372[0, 0, 0] : f32 from vector<1x1x1xf32>
    %cst_70 = arith.constant 1.000000e+00 : f32
    %374 = arith.maximumf %373, %cst_70 : f32
    %375 = vector.broadcast %358 : vector<16x1xf32> to vector<16x128xf32>
    %376 = arith.mulf %360, %375 : vector<16x128xf32>
    %cst_71 = arith.constant dense<0.000000e+00> : vector<128xf32>
    %377 = vector.multi_reduction <add>, %376, %cst_71 [0] : vector<16x128xf32> to vector<128xf32>
    %378 = vector.shape_cast %377 : vector<128xf32> to vector<1x128xf32>
    %379 = vector.broadcast %374 : f32 to vector<1x128xf32>
    %380 = arith.divf %378, %379 : vector<1x128xf32>
    %381 = arith.addf %199, %380 : vector<1x128xf32>
    %c2 = arith.constant 2 : index
    %c0_72 = arith.constant 0 : index
    %c0_73 = arith.constant 0 : index
    %382 = vector.load %arg4[%c2, %c0_72, %c0_73] : memref<3x128x256xf32, #tpu.memory_space<vmem>>, vector<1x128x256xf32>
    %383 = vector.shape_cast %382 : vector<1x128x256xf32> to vector<128x256xf32>
    %cst_74 = arith.constant dense<0.000000e+00> : vector<16x256xf32>
    %384 = tpu.matmul %360, %383, %cst_74 {dimension_numbers = #tpu.dot_dimension_numbers<[1], [0], [0], [1], [0, 0, 1, 1], [], []>} : vector<16x128xf32>, vector<128x256xf32>, vector<16x256xf32> -> vector<16x256xf32>
    %385 = vector.extract_strided_slice %384 {offsets = [0, 0], sizes = [16, 128], strides = [1, 1]} : vector<16x256xf32> to vector<16x128xf32>
    %c2_75 = arith.constant 2 : index
    %c0_76 = arith.constant 0 : index
    %c0_77 = arith.constant 0 : index
    %386 = vector.load %arg5[%c2_75, %c0_76, %c0_77] : memref<3x1x128xf32, #tpu.memory_space<vmem>>, vector<1x1x128xf32>
    %387 = vector.shape_cast %386 : vector<1x1x128xf32> to vector<1x128xf32>
    %388 = vector.broadcast %387 : vector<1x128xf32> to vector<16x128xf32>
    %389 = arith.addf %385, %388 : vector<16x128xf32>
    %cst_78 = arith.constant 0.000000e+00 : f32
    %390 = vector.broadcast %cst_78 : f32 to vector<16x128xf32>
    %391 = arith.maximumf %389, %390 : vector<16x128xf32>
    %392 = vector.broadcast %358 : vector<16x1xf32> to vector<16x128xf32>
    %393 = arith.mulf %391, %392 : vector<16x128xf32>
    %394 = vector.extract_strided_slice %384 {offsets = [0, 128], sizes = [16, 128], strides = [1, 1]} : vector<16x256xf32> to vector<16x128xf32>
    %395 = vector.extract_strided_slice %8 {offsets = [0, 0], sizes = [16, 1], strides = [1, 1]} : vector<16x16xf32> to vector<16x1xf32>
    %396 = vector.extract_strided_slice %393 {offsets = [0, 0], sizes = [1, 128], strides = [1, 1]} : vector<16x128xf32> to vector<1x128xf32>
    %397 = vector.broadcast %395 : vector<16x1xf32> to vector<16x128xf32>
    %398 = vector.broadcast %396 : vector<1x128xf32> to vector<16x128xf32>
    %399 = arith.mulf %397, %398 : vector<16x128xf32>
    %400 = vector.extract_strided_slice %8 {offsets = [0, 1], sizes = [16, 1], strides = [1, 1]} : vector<16x16xf32> to vector<16x1xf32>
    %401 = vector.extract_strided_slice %393 {offsets = [1, 0], sizes = [1, 128], strides = [1, 1]} : vector<16x128xf32> to vector<1x128xf32>
    %402 = vector.broadcast %400 : vector<16x1xf32> to vector<16x128xf32>
    %403 = vector.broadcast %401 : vector<1x128xf32> to vector<16x128xf32>
    %404 = arith.mulf %402, %403 : vector<16x128xf32>
    %405 = arith.maximumf %399, %404 : vector<16x128xf32>
    %406 = vector.extract_strided_slice %8 {offsets = [0, 2], sizes = [16, 1], strides = [1, 1]} : vector<16x16xf32> to vector<16x1xf32>
    %407 = vector.extract_strided_slice %393 {offsets = [2, 0], sizes = [1, 128], strides = [1, 1]} : vector<16x128xf32> to vector<1x128xf32>
    %408 = vector.broadcast %406 : vector<16x1xf32> to vector<16x128xf32>
    %409 = vector.broadcast %407 : vector<1x128xf32> to vector<16x128xf32>
    %410 = arith.mulf %408, %409 : vector<16x128xf32>
    %411 = arith.maximumf %405, %410 : vector<16x128xf32>
    %412 = vector.extract_strided_slice %8 {offsets = [0, 3], sizes = [16, 1], strides = [1, 1]} : vector<16x16xf32> to vector<16x1xf32>
    %413 = vector.extract_strided_slice %393 {offsets = [3, 0], sizes = [1, 128], strides = [1, 1]} : vector<16x128xf32> to vector<1x128xf32>
    %414 = vector.broadcast %412 : vector<16x1xf32> to vector<16x128xf32>
    %415 = vector.broadcast %413 : vector<1x128xf32> to vector<16x128xf32>
    %416 = arith.mulf %414, %415 : vector<16x128xf32>
    %417 = arith.maximumf %411, %416 : vector<16x128xf32>
    %418 = vector.extract_strided_slice %8 {offsets = [0, 4], sizes = [16, 1], strides = [1, 1]} : vector<16x16xf32> to vector<16x1xf32>
    %419 = vector.extract_strided_slice %393 {offsets = [4, 0], sizes = [1, 128], strides = [1, 1]} : vector<16x128xf32> to vector<1x128xf32>
    %420 = vector.broadcast %418 : vector<16x1xf32> to vector<16x128xf32>
    %421 = vector.broadcast %419 : vector<1x128xf32> to vector<16x128xf32>
    %422 = arith.mulf %420, %421 : vector<16x128xf32>
    %423 = arith.maximumf %417, %422 : vector<16x128xf32>
    %424 = vector.extract_strided_slice %8 {offsets = [0, 5], sizes = [16, 1], strides = [1, 1]} : vector<16x16xf32> to vector<16x1xf32>
    %425 = vector.extract_strided_slice %393 {offsets = [5, 0], sizes = [1, 128], strides = [1, 1]} : vector<16x128xf32> to vector<1x128xf32>
    %426 = vector.broadcast %424 : vector<16x1xf32> to vector<16x128xf32>
    %427 = vector.broadcast %425 : vector<1x128xf32> to vector<16x128xf32>
    %428 = arith.mulf %426, %427 : vector<16x128xf32>
    %429 = arith.maximumf %423, %428 : vector<16x128xf32>
    %430 = vector.extract_strided_slice %8 {offsets = [0, 6], sizes = [16, 1], strides = [1, 1]} : vector<16x16xf32> to vector<16x1xf32>
    %431 = vector.extract_strided_slice %393 {offsets = [6, 0], sizes = [1, 128], strides = [1, 1]} : vector<16x128xf32> to vector<1x128xf32>
    %432 = vector.broadcast %430 : vector<16x1xf32> to vector<16x128xf32>
    %433 = vector.broadcast %431 : vector<1x128xf32> to vector<16x128xf32>
    %434 = arith.mulf %432, %433 : vector<16x128xf32>
    %435 = arith.maximumf %429, %434 : vector<16x128xf32>
    %436 = vector.extract_strided_slice %8 {offsets = [0, 7], sizes = [16, 1], strides = [1, 1]} : vector<16x16xf32> to vector<16x1xf32>
    %437 = vector.extract_strided_slice %393 {offsets = [7, 0], sizes = [1, 128], strides = [1, 1]} : vector<16x128xf32> to vector<1x128xf32>
    %438 = vector.broadcast %436 : vector<16x1xf32> to vector<16x128xf32>
    %439 = vector.broadcast %437 : vector<1x128xf32> to vector<16x128xf32>
    %440 = arith.mulf %438, %439 : vector<16x128xf32>
    %441 = arith.maximumf %435, %440 : vector<16x128xf32>
    %442 = vector.extract_strided_slice %8 {offsets = [0, 8], sizes = [16, 1], strides = [1, 1]} : vector<16x16xf32> to vector<16x1xf32>
    %443 = vector.extract_strided_slice %393 {offsets = [8, 0], sizes = [1, 128], strides = [1, 1]} : vector<16x128xf32> to vector<1x128xf32>
    %444 = vector.broadcast %442 : vector<16x1xf32> to vector<16x128xf32>
    %445 = vector.broadcast %443 : vector<1x128xf32> to vector<16x128xf32>
    %446 = arith.mulf %444, %445 : vector<16x128xf32>
    %447 = arith.maximumf %441, %446 : vector<16x128xf32>
    %448 = vector.extract_strided_slice %8 {offsets = [0, 9], sizes = [16, 1], strides = [1, 1]} : vector<16x16xf32> to vector<16x1xf32>
    %449 = vector.extract_strided_slice %393 {offsets = [9, 0], sizes = [1, 128], strides = [1, 1]} : vector<16x128xf32> to vector<1x128xf32>
    %450 = vector.broadcast %448 : vector<16x1xf32> to vector<16x128xf32>
    %451 = vector.broadcast %449 : vector<1x128xf32> to vector<16x128xf32>
    %452 = arith.mulf %450, %451 : vector<16x128xf32>
    %453 = arith.maximumf %447, %452 : vector<16x128xf32>
    %454 = vector.extract_strided_slice %8 {offsets = [0, 10], sizes = [16, 1], strides = [1, 1]} : vector<16x16xf32> to vector<16x1xf32>
    %455 = vector.extract_strided_slice %393 {offsets = [10, 0], sizes = [1, 128], strides = [1, 1]} : vector<16x128xf32> to vector<1x128xf32>
    %456 = vector.broadcast %454 : vector<16x1xf32> to vector<16x128xf32>
    %457 = vector.broadcast %455 : vector<1x128xf32> to vector<16x128xf32>
    %458 = arith.mulf %456, %457 : vector<16x128xf32>
    %459 = arith.maximumf %453, %458 : vector<16x128xf32>
    %460 = vector.extract_strided_slice %8 {offsets = [0, 11], sizes = [16, 1], strides = [1, 1]} : vector<16x16xf32> to vector<16x1xf32>
    %461 = vector.extract_strided_slice %393 {offsets = [11, 0], sizes = [1, 128], strides = [1, 1]} : vector<16x128xf32> to vector<1x128xf32>
    %462 = vector.broadcast %460 : vector<16x1xf32> to vector<16x128xf32>
    %463 = vector.broadcast %461 : vector<1x128xf32> to vector<16x128xf32>
    %464 = arith.mulf %462, %463 : vector<16x128xf32>
    %465 = arith.maximumf %459, %464 : vector<16x128xf32>
    %466 = vector.extract_strided_slice %8 {offsets = [0, 12], sizes = [16, 1], strides = [1, 1]} : vector<16x16xf32> to vector<16x1xf32>
    %467 = vector.extract_strided_slice %393 {offsets = [12, 0], sizes = [1, 128], strides = [1, 1]} : vector<16x128xf32> to vector<1x128xf32>
    %468 = vector.broadcast %466 : vector<16x1xf32> to vector<16x128xf32>
    %469 = vector.broadcast %467 : vector<1x128xf32> to vector<16x128xf32>
    %470 = arith.mulf %468, %469 : vector<16x128xf32>
    %471 = arith.maximumf %465, %470 : vector<16x128xf32>
    %472 = vector.extract_strided_slice %8 {offsets = [0, 13], sizes = [16, 1], strides = [1, 1]} : vector<16x16xf32> to vector<16x1xf32>
    %473 = vector.extract_strided_slice %393 {offsets = [13, 0], sizes = [1, 128], strides = [1, 1]} : vector<16x128xf32> to vector<1x128xf32>
    %474 = vector.broadcast %472 : vector<16x1xf32> to vector<16x128xf32>
    %475 = vector.broadcast %473 : vector<1x128xf32> to vector<16x128xf32>
    %476 = arith.mulf %474, %475 : vector<16x128xf32>
    %477 = arith.maximumf %471, %476 : vector<16x128xf32>
    %478 = vector.extract_strided_slice %8 {offsets = [0, 14], sizes = [16, 1], strides = [1, 1]} : vector<16x16xf32> to vector<16x1xf32>
    %479 = vector.extract_strided_slice %393 {offsets = [14, 0], sizes = [1, 128], strides = [1, 1]} : vector<16x128xf32> to vector<1x128xf32>
    %480 = vector.broadcast %478 : vector<16x1xf32> to vector<16x128xf32>
    %481 = vector.broadcast %479 : vector<1x128xf32> to vector<16x128xf32>
    %482 = arith.mulf %480, %481 : vector<16x128xf32>
    %483 = arith.maximumf %477, %482 : vector<16x128xf32>
    %484 = vector.extract_strided_slice %8 {offsets = [0, 15], sizes = [16, 1], strides = [1, 1]} : vector<16x16xf32> to vector<16x1xf32>
    %485 = vector.extract_strided_slice %393 {offsets = [15, 0], sizes = [1, 128], strides = [1, 1]} : vector<16x128xf32> to vector<1x128xf32>
    %486 = vector.broadcast %484 : vector<16x1xf32> to vector<16x128xf32>
    %487 = vector.broadcast %485 : vector<1x128xf32> to vector<16x128xf32>
    %488 = arith.mulf %486, %487 : vector<16x128xf32>
    %489 = arith.maximumf %483, %488 : vector<16x128xf32>
    %c2_79 = arith.constant 2 : index
    %c0_80 = arith.constant 0 : index
    %c0_81 = arith.constant 0 : index
    %490 = vector.load %arg6[%c2_79, %c0_80, %c0_81] : memref<3x128x128xf32, #tpu.memory_space<vmem>>, vector<1x128x128xf32>
    %491 = vector.shape_cast %490 : vector<1x128x128xf32> to vector<128x128xf32>
    %cst_82 = arith.constant dense<0.000000e+00> : vector<16x128xf32>
    %492 = tpu.matmul %489, %491, %cst_82 {dimension_numbers = #tpu.dot_dimension_numbers<[1], [0], [0], [1], [0, 0, 1, 1], [], []>} : vector<16x128xf32>, vector<128x128xf32>, vector<16x128xf32> -> vector<16x128xf32>
    %493 = arith.addf %492, %394 : vector<16x128xf32>
    %cst_83 = arith.constant 0.000000e+00 : f32
    %494 = vector.broadcast %cst_83 : f32 to vector<16x128xf32>
    %495 = arith.maximumf %493, %494 : vector<16x128xf32>
    %c2_84 = arith.constant 2 : index
    %c0_85 = arith.constant 0 : index
    %c0_86 = arith.constant 0 : index
    %496 = vector.load %arg7[%c2_84, %c0_85, %c0_86] : memref<3x1x128xf32, #tpu.memory_space<vmem>>, vector<1x1x128xf32>
    %497 = vector.shape_cast %496 : vector<1x1x128xf32> to vector<1x128xf32>
    %498 = vector.broadcast %497 : vector<1x128xf32> to vector<16x128xf32>
    %499 = arith.mulf %495, %498 : vector<16x128xf32>
    %cst_87 = arith.constant dense<0.000000e+00> : vector<16xf32>
    %500 = vector.multi_reduction <add>, %499, %cst_87 [1] : vector<16x128xf32> to vector<16xf32>
    %501 = vector.shape_cast %500 : vector<16xf32> to vector<16x1xf32>
    %502 = math.tanh %501 : vector<16x1xf32>
    %cst_88 = arith.constant 0.000000e+00 : f32
    %503 = vector.broadcast %cst_88 : f32 to vector<16x1xf32>
    %504 = arith.cmpf ogt, %358, %503 : vector<16x1xf32>
    %cst_89 = arith.constant -1.000000e+30 : f32
    %505 = vector.broadcast %cst_89 : f32 to vector<16x1xf32>
    %506 = arith.select %504, %502, %505 : vector<16x1xi1>, vector<16x1xf32>
    %507 = arith.cmpi eq, %4, %5 : vector<16x16xi32>
    %cst_90 = arith.constant -1.000000e+30 : f32
    %508 = vector.shape_cast %506 : vector<16x1xf32> to vector<16x1xf32>
    %509 = vector.broadcast %508 : vector<16x1xf32> to vector<16x16xf32>
    %510 = vector.broadcast %cst_90 : f32 to vector<16x16xf32>
    %511 = arith.select %507, %509, %510 : vector<16x16xi1>, vector<16x16xf32>
    %cst_91 = arith.constant dense<0xFF800000> : vector<16xf32>
    %512 = vector.multi_reduction <maximumf>, %511, %cst_91 [0] : vector<16x16xf32> to vector<16xf32>
    %513 = vector.shape_cast %512 : vector<16xf32> to vector<1x16xf32>
    %514 = vector.broadcast %513 : vector<1x16xf32> to vector<16x16xf32>
    %515 = vector.broadcast %506 : vector<16x1xf32> to vector<16x16xf32>
    %516 = arith.cmpf ogt, %514, %515 : vector<16x16xf32>
    %517 = vector.broadcast %513 : vector<1x16xf32> to vector<16x16xf32>
    %518 = vector.broadcast %506 : vector<16x1xf32> to vector<16x16xf32>
    %519 = arith.cmpf oeq, %517, %518 : vector<16x16xf32>
    %520 = arith.cmpi slt, %5, %4 : vector<16x16xi32>
    %521 = arith.andi %519, %520 : vector<16x16xi1>
    %522 = arith.ori %516, %521 : vector<16x16xi1>
    %523 = arith.extui %522 : vector<16x16xi1> to vector<16x16xi32>
    %524 = arith.sitofp %523 : vector<16x16xi32> to vector<16x16xf32>
    %cst_92 = arith.constant dense<0.000000e+00> : vector<16xf32>
    %525 = vector.multi_reduction <add>, %524, %cst_92 [1] : vector<16x16xf32> to vector<16xf32>
    %526 = vector.shape_cast %525 : vector<16xf32> to vector<16x1xf32>
    %527 = vector.shape_cast %358 : vector<16x1xf32> to vector<1x16x1xf32>
    %cst_93 = arith.constant dense<0.000000e+00> : vector<1xf32>
    %528 = vector.multi_reduction <add>, %527, %cst_93 [1, 2] : vector<1x16x1xf32> to vector<1xf32>
    %529 = vector.shape_cast %528 : vector<1xf32> to vector<1x1x1xf32>
    %530 = vector.extract %529[0, 0, 0] : f32 from vector<1x1x1xf32>
    %cst_94 = arith.constant 8.000000e-01 : f32
    %531 = arith.mulf %cst_94, %530 : f32
    %532 = math.ceil %531 : f32
    %cst_95 = arith.constant 0.000000e+00 : f32
    %533 = vector.broadcast %cst_95 : f32 to vector<16x1xf32>
    %534 = arith.cmpf ogt, %358, %533 : vector<16x1xf32>
    %535 = vector.broadcast %532 : f32 to vector<16x1xf32>
    %536 = arith.cmpf olt, %526, %535 : vector<16x1xf32>
    %537 = arith.andi %534, %536 : vector<16x1xi1>
    %cst_96 = arith.constant 1.000000e+00 : f32
    %cst_97 = arith.constant 0.000000e+00 : f32
    %538 = vector.broadcast %cst_96 : f32 to vector<16x1xf32>
    %539 = vector.broadcast %cst_97 : f32 to vector<16x1xf32>
    %540 = arith.select %537, %538, %539 : vector<16x1xi1>, vector<16x1xf32>
    %541 = vector.broadcast %502 : vector<16x1xf32> to vector<16x128xf32>
    %542 = arith.mulf %495, %541 : vector<16x128xf32>
    %cst_98 = arith.constant 0.000000e+00 : f32
    %543 = vector.broadcast %cst_98 : f32 to vector<16x1xf32>
    %544 = arith.cmpf ogt, %540, %543 : vector<16x1xf32>
    %cst_99 = arith.constant -1.000000e+30 : f32
    %545 = vector.shape_cast %544 : vector<16x1xi1> to vector<16x1xi1>
    %546 = vector.broadcast %545 : vector<16x1xi1> to vector<16x128xi1>
    %547 = vector.broadcast %cst_99 : f32 to vector<16x128xf32>
    %548 = arith.select %546, %542, %547 : vector<16x128xi1>, vector<16x128xf32>
    %cst_100 = arith.constant dense<0xFF800000> : vector<128xf32>
    %549 = vector.multi_reduction <maximumf>, %548, %cst_100 [0] : vector<16x128xf32> to vector<128xf32>
    %550 = vector.shape_cast %549 : vector<128xf32> to vector<1x128xf32>
    %551 = arith.addf %369, %550 : vector<1x128xf32>
    %552 = vector.shape_cast %540 : vector<16x1xf32> to vector<1x16x1xf32>
    %cst_101 = arith.constant dense<0.000000e+00> : vector<1xf32>
    %553 = vector.multi_reduction <add>, %552, %cst_101 [1, 2] : vector<1x16x1xf32> to vector<1xf32>
    %554 = vector.shape_cast %553 : vector<1xf32> to vector<1x1x1xf32>
    %555 = vector.extract %554[0, 0, 0] : f32 from vector<1x1x1xf32>
    %cst_102 = arith.constant 1.000000e+00 : f32
    %556 = arith.maximumf %555, %cst_102 : f32
    %557 = vector.broadcast %540 : vector<16x1xf32> to vector<16x128xf32>
    %558 = arith.mulf %542, %557 : vector<16x128xf32>
    %cst_103 = arith.constant dense<0.000000e+00> : vector<128xf32>
    %559 = vector.multi_reduction <add>, %558, %cst_103 [0] : vector<16x128xf32> to vector<128xf32>
    %560 = vector.shape_cast %559 : vector<128xf32> to vector<1x128xf32>
    %561 = vector.broadcast %556 : f32 to vector<1x128xf32>
    %562 = arith.divf %560, %561 : vector<1x128xf32>
    %563 = arith.addf %381, %562 : vector<1x128xf32>
    %c0_104 = arith.constant 0 : index
    %c0_105 = arith.constant 0 : index
    %564 = vector.load %arg8[%c0_104, %c0_105] : memref<128x128xf32, #tpu.memory_space<vmem>>, vector<128x128xf32>
    %cst_106 = arith.constant dense<0.000000e+00> : vector<1x128xf32>
    %565 = tpu.matmul %551, %564, %cst_106 {dimension_numbers = #tpu.dot_dimension_numbers<[1], [0], [0], [1], [0, 0, 1, 1], [], []>} : vector<1x128xf32>, vector<128x128xf32>, vector<1x128xf32> -> vector<1x128xf32>
    %c0_107 = arith.constant 0 : index
    %c0_108 = arith.constant 0 : index
    %566 = vector.load %arg9[%c0_107, %c0_108] : memref<128x128xf32, #tpu.memory_space<vmem>>, vector<128x128xf32>
    %cst_109 = arith.constant dense<0.000000e+00> : vector<1x128xf32>
    %567 = tpu.matmul %563, %566, %cst_109 {dimension_numbers = #tpu.dot_dimension_numbers<[1], [0], [0], [1], [0, 0, 1, 1], [], []>} : vector<1x128xf32>, vector<128x128xf32>, vector<1x128xf32> -> vector<1x128xf32>
    %568 = arith.addf %565, %567 : vector<1x128xf32>
    %c0_110 = arith.constant 0 : index
    %c0_111 = arith.constant 0 : index
    %569 = vector.load %arg10[%c0_110, %c0_111] : memref<1x128xf32, #tpu.memory_space<vmem>>, vector<1x128xf32>
    %570 = arith.addf %568, %569 : vector<1x128xf32>
    %cst_112 = arith.constant 0.000000e+00 : f32
    %571 = vector.broadcast %cst_112 : f32 to vector<1x128xf32>
    %572 = arith.maximumf %570, %571 : vector<1x128xf32>
    %c0_113 = arith.constant 0 : index
    %c0_114 = arith.constant 0 : index
    %573 = vector.load %arg11[%c0_113, %c0_114] : memref<128x64xf32, #tpu.memory_space<vmem>>, vector<128x64xf32>
    %cst_115 = arith.constant dense<0.000000e+00> : vector<1x64xf32>
    %574 = tpu.matmul %572, %573, %cst_115 {dimension_numbers = #tpu.dot_dimension_numbers<[1], [0], [0], [1], [0, 0, 1, 1], [], []>} : vector<1x128xf32>, vector<128x64xf32>, vector<1x64xf32> -> vector<1x64xf32>
    %c0_116 = arith.constant 0 : index
    %c0_117 = arith.constant 0 : index
    %575 = vector.load %arg12[%c0_116, %c0_117] : memref<1x64xf32, #tpu.memory_space<vmem>>, vector<1x64xf32>
    %576 = arith.addf %574, %575 : vector<1x64xf32>
    %cst_118 = arith.constant 0.000000e+00 : f32
    %577 = vector.broadcast %cst_118 : f32 to vector<1x64xf32>
    %578 = arith.maximumf %576, %577 : vector<1x64xf32>
    %c0_119 = arith.constant 0 : index
    %c0_120 = arith.constant 0 : index
    %579 = vector.load %arg13[%c0_119, %c0_120] : memref<64x1xf32, #tpu.memory_space<vmem>>, vector<64x1xf32>
    %cst_121 = arith.constant dense<0.000000e+00> : vector<1x1xf32>
    %580 = tpu.matmul %578, %579, %cst_121 {dimension_numbers = #tpu.dot_dimension_numbers<[1], [0], [0], [1], [0, 0, 1, 1], [], []>} : vector<1x64xf32>, vector<64x1xf32>, vector<1x1xf32> -> vector<1x1xf32>
    %c0_122 = arith.constant 0 : index
    %c0_123 = arith.constant 0 : index
    %581 = vector.load %arg14[%c0_122, %c0_123] : memref<1x1xf32, #tpu.memory_space<vmem>>, vector<1x1xf32>
    %582 = arith.addf %580, %581 : vector<1x1xf32>
    %583 = math.absf %582 : vector<1x1xf32>
    %cst_124 = arith.constant 0.000000e+00 : f32
    %584 = vector.broadcast %cst_124 : f32 to vector<1x1xf32>
    %585 = arith.subf %584, %583 : vector<1x1xf32>
    %586 = math.exp %585 : vector<1x1xf32>
    %cst_125 = arith.constant 1.000000e+00 : f32
    %587 = vector.broadcast %cst_125 : f32 to vector<1x1xf32>
    %588 = arith.addf %587, %586 : vector<1x1xf32>
    %cst_126 = arith.constant 1.000000e+00 : f32
    %589 = vector.broadcast %cst_126 : f32 to vector<1x1xf32>
    %590 = arith.divf %589, %588 : vector<1x1xf32>
    %cst_127 = arith.constant 0.000000e+00 : f32
    %591 = vector.broadcast %cst_127 : f32 to vector<1x1xf32>
    %592 = arith.cmpf oge, %582, %591 : vector<1x1xf32>
    %cst_128 = arith.constant 1.000000e+00 : f32
    %593 = vector.broadcast %cst_128 : f32 to vector<1x1xf32>
    %594 = arith.subf %593, %590 : vector<1x1xf32>
    %595 = arith.select %592, %590, %594 : vector<1x1xi1>, vector<1x1xf32>
    %596 = vector.shape_cast %595 : vector<1x1xf32> to vector<1x1x1xf32>
    %597 = vector.shape_cast %596 : vector<1x1x1xf32> to vector<1x1x1xf32>
    %598 = vector.broadcast %597 : vector<1x1x1xf32> to vector<1x1x128xf32>
    %c0_129 = arith.constant 0 : index
    %c0_130 = arith.constant 0 : index
    %c0_131 = arith.constant 0 : index
    %599 = vector.load %arg15[%c0_129, %c0_130, %c0_131] : memref<1x1x128xf32, #tpu.memory_space<vmem>>, vector<1x1x128xf32>
    tpu.vector_store %arg15[%c0_129, %c0_130, %c0_131], %598 {strides = array<i32>} : memref<1x1x128xf32, #tpu.memory_space<vmem>>, vector<1x1x128xf32>,
    return
  }
  func.func @transform_0(%arg0: i32, %arg1: memref<2xi32, #tpu.memory_space<smem>>) -> (i32, i32, i32) {
    %c0_i32 = arith.constant 0 : i32
    %c0_i32_0 = arith.constant 0 : i32
    %c0_i32_1 = arith.constant 0 : i32
    return %arg0, %c0_i32, %c0_i32_0 : i32, i32, i32
  }
  func.func @transform_1(%arg0: i32, %arg1: memref<2xi32, #tpu.memory_space<smem>>) -> (i32, i32, i32) {
    %c0_i32 = arith.constant 0 : i32
    %c0_i32_0 = arith.constant 0 : i32
    %c0_i32_1 = arith.constant 0 : i32
    return %arg0, %c0_i32, %c0_i32_0 : i32, i32, i32
  }
  func.func @transform_2(%arg0: i32, %arg1: memref<2xi32, #tpu.memory_space<smem>>) -> (i32, i32, i32) {
    %c0_i32 = arith.constant 0 : i32
    %c0_i32_0 = arith.constant 0 : i32
    %c0_i32_1 = arith.constant 0 : i32
    %c0_i32_2 = arith.constant 0 : i32
    return %c0_i32, %c0_i32_0, %c0_i32_1 : i32, i32, i32
  }
  func.func @transform_3(%arg0: i32, %arg1: memref<2xi32, #tpu.memory_space<smem>>) -> (i32, i32, i32) {
    %c0_i32 = arith.constant 0 : i32
    %c0_i32_0 = arith.constant 0 : i32
    %c0_i32_1 = arith.constant 0 : i32
    %c0_i32_2 = arith.constant 0 : i32
    return %c0_i32, %c0_i32_0, %c0_i32_1 : i32, i32, i32
  }
  func.func @transform_4(%arg0: i32, %arg1: memref<2xi32, #tpu.memory_space<smem>>) -> (i32, i32, i32) {
    %c0_i32 = arith.constant 0 : i32
    %c0_i32_0 = arith.constant 0 : i32
    %c0_i32_1 = arith.constant 0 : i32
    %c0_i32_2 = arith.constant 0 : i32
    return %c0_i32, %c0_i32_0, %c0_i32_1 : i32, i32, i32
  }
  func.func @transform_5(%arg0: i32, %arg1: memref<2xi32, #tpu.memory_space<smem>>) -> (i32, i32, i32) {
    %c0_i32 = arith.constant 0 : i32
    %c0_i32_0 = arith.constant 0 : i32
    %c0_i32_1 = arith.constant 0 : i32
    %c0_i32_2 = arith.constant 0 : i32
    return %c0_i32, %c0_i32_0, %c0_i32_1 : i32, i32, i32
  }
  func.func @transform_6(%arg0: i32, %arg1: memref<2xi32, #tpu.memory_space<smem>>) -> (i32, i32) {
    %c0_i32 = arith.constant 0 : i32
    %c0_i32_0 = arith.constant 0 : i32
    %c0_i32_1 = arith.constant 0 : i32
    return %c0_i32, %c0_i32_0 : i32, i32
  }
  func.func @transform_7(%arg0: i32, %arg1: memref<2xi32, #tpu.memory_space<smem>>) -> (i32, i32) {
    %c0_i32 = arith.constant 0 : i32
    %c0_i32_0 = arith.constant 0 : i32
    %c0_i32_1 = arith.constant 0 : i32
    return %c0_i32, %c0_i32_0 : i32, i32
  }
  func.func @transform_8(%arg0: i32, %arg1: memref<2xi32, #tpu.memory_space<smem>>) -> (i32, i32) {
    %c0_i32 = arith.constant 0 : i32
    %c0_i32_0 = arith.constant 0 : i32
    %c0_i32_1 = arith.constant 0 : i32
    return %c0_i32, %c0_i32_0 : i32, i32
  }
  func.func @transform_9(%arg0: i32, %arg1: memref<2xi32, #tpu.memory_space<smem>>) -> (i32, i32) {
    %c0_i32 = arith.constant 0 : i32
    %c0_i32_0 = arith.constant 0 : i32
    %c0_i32_1 = arith.constant 0 : i32
    return %c0_i32, %c0_i32_0 : i32, i32
  }
  func.func @transform_10(%arg0: i32, %arg1: memref<2xi32, #tpu.memory_space<smem>>) -> (i32, i32) {
    %c0_i32 = arith.constant 0 : i32
    %c0_i32_0 = arith.constant 0 : i32
    %c0_i32_1 = arith.constant 0 : i32
    return %c0_i32, %c0_i32_0 : i32, i32
  }
  func.func @transform_11(%arg0: i32, %arg1: memref<2xi32, #tpu.memory_space<smem>>) -> (i32, i32) {
    %c0_i32 = arith.constant 0 : i32
    %c0_i32_0 = arith.constant 0 : i32
    %c0_i32_1 = arith.constant 0 : i32
    return %c0_i32, %c0_i32_0 : i32, i32
  }
  func.func @transform_12(%arg0: i32, %arg1: memref<2xi32, #tpu.memory_space<smem>>) -> (i32, i32) {
    %c0_i32 = arith.constant 0 : i32
    %c0_i32_0 = arith.constant 0 : i32
    %c0_i32_1 = arith.constant 0 : i32
    return %c0_i32, %c0_i32_0 : i32, i32
  }
  func.func @transform_13(%arg0: i32, %arg1: memref<2xi32, #tpu.memory_space<smem>>) -> (i32, i32, i32) {
    %c0_i32 = arith.constant 0 : i32
    %c0_i32_0 = arith.constant 0 : i32
    %c0_i32_1 = arith.constant 0 : i32
    return %arg0, %c0_i32, %c0_i32_0 : i32, i32, i32
  }
}

</mosaic_0001>

<llo_original>
// kernel: robotnet_forward.1
$region0: #{robotnet_forward.1}
  #allocation0 [shape = 'u32[]', space=smem, size = 0x4, offset = 0x4, fixed_abs, tag = 'smem constant byte address 0x4 - core index']
  #allocation1 [shape = 'u32[144,128]{1,0:T(1,128)}', space=vmem, size = 0x12000, scoped, tag = 'internal scratch']
  #allocation2 [shape = 's32[1]{0}', space=sflag, size = 0x4, scoped, tag = 'scoped memory for robotnet_forward.1']
  #allocation3 [shape = 'u8[512]{0}', space=smem, size = 0x200, scoped, tag = 'prefetched SMEM operand 0']
  #allocation4 [shape = 'f32[1,1]{1,0:T(1,128)S(1)}', space=vmem, size = 0x200, scoped, tag = 'scoped memory for robotnet_forward.1']
  %s0 = inlined_call_operand.vmem [shape: s32[2], index: 0, kind: input, shape index: {}]
  %s1 = inlined_call_operand.vmem [shape: f32[2,16,128], index: 1, kind: input, shape index: {}]
  %s2 = inlined_call_operand.vmem [shape: f32[2,16,16], index: 2, kind: input, shape index: {}]
  %s3 = inlined_call_operand.vmem [shape: f32[3,128,256], index: 3, kind: input, shape index: {}]
  %s4 = inlined_call_operand.vmem [shape: f32[3,1,128], index: 4, kind: input, shape index: {}]
  %s5 = inlined_call_operand.vmem [shape: f32[3,128,128], index: 5, kind: input, shape index: {}]
  %s6 = inlined_call_operand.vmem [shape: f32[3,1,128], index: 6, kind: input, shape index: {}]
  %s7 = inlined_call_operand.vmem [shape: f32[128,128], index: 7, kind: input, shape index: {}]
  %s8 = inlined_call_operand.vmem [shape: f32[128,128], index: 8, kind: input, shape index: {}]
  %s9 = inlined_call_operand.vmem [shape: f32[1,128], index: 9, kind: input, shape index: {}]
  %s10 = inlined_call_operand.vmem [shape: f32[128,64], index: 10, kind: input, shape index: {}]
  %s11 = inlined_call_operand.vmem [shape: f32[1,64], index: 11, kind: input, shape index: {}]
  %s12 = inlined_call_operand.vmem [shape: f32[64,1], index: 12, kind: input, shape index: {}]
  %s13 = inlined_call_operand.<no memory space> [shape: f32[1,1], index: 13, kind: input, shape index: {}]
  %s14 = inlined_call_operand.vmem [shape: f32[2,1,128], index: 14, kind: output, shape index: {}]
  %s15 = sld [smem:[#allocation0]]
  $region85: #{robotnet_forward.1} parent=0
    _
  %s17 = ssub.s32 1, %s15
  %s18 = scalar_select 0, %s17, %s15
  %s19 = sshll.u32 %s0, 4
  %s20 = int_to_ptr.vmem [resolvable:$true] %s19
  %22 = dma.vmem_to_smem %s20, 16, [#allocation3], [#allocation2]
  %v23 = vstv %s13
  %24 = vst [vmem:[#allocation4] sm:$0x1] %v23
  %25 = dma.done [#allocation2], 16
  %26 = sfence
  loop: start=0, step=1, limit=4
  $region2: #{robotnet_forward.1} parent=0 // loop_pre_header
    _
  $region3: #{robotnet_forward.1} parent=0 // loop_header
    %s28 = sphi 0, %s32
    %p29 = scmp.ge.s32.totalorder %s28, 4
    %s38 = sphi 0, %s40
    %s41 = sphi 0, %s38
    %s42 = sphi 0, %s41
    %s58 = sphi 0, %s42
    %s64 = sphi 0, %s66
    %s67 = sphi 0, %s64
    %s68 = sphi 0, %s67
    %s84 = sphi 0, %s68
    %s88 = sphi 0, %s88
    %s90 = sphi 0, %s88
    %s91 = sphi 0, %s90
    %s105 = sphi 0, %s91
    %s109 = sphi 0, %s109
    %s111 = sphi 0, %s109
    %s112 = sphi 0, %s111
    %s126 = sphi 0, %s112
    %s130 = sphi 0, %s130
    %s132 = sphi 0, %s130
    %s133 = sphi 0, %s132
    %s147 = sphi 0, %s133
    %s151 = sphi 0, %s151
    %s153 = sphi 0, %s151
    %s154 = sphi 0, %s153
    %s168 = sphi 0, %s154
    %s172 = sphi 0, %s172
    %s174 = sphi 0, %s172
    %s175 = sphi 0, %s174
    %s189 = sphi 0, %s175
    %s193 = sphi 0, %s193
    %s195 = sphi 0, %s193
    %s196 = sphi 0, %s195
    %s210 = sphi 0, %s196
    %s214 = sphi 0, %s214
    %s216 = sphi 0, %s214
    %s217 = sphi 0, %s216
    %s231 = sphi 0, %s217
    %s235 = sphi 0, %s235
    %s237 = sphi 0, %s235
    %s238 = sphi 0, %s237
    %s252 = sphi 0, %s238
    %s256 = sphi 0, %s256
    %s258 = sphi 0, %s256
    %s259 = sphi 0, %s258
    %s273 = sphi 0, %s259
    %s277 = sphi 0, %s277
    %s279 = sphi 0, %s277
    %s280 = sphi 0, %s279
    %s294 = sphi 0, %s280
    %s298 = sphi 0, %s298
    %s300 = sphi 0, %s298
    %s301 = sphi 0, %s300
    %s315 = sphi 0, %s301
    %s321 = sphi 0, %s323
    %s324 = sphi 0, %s321
    %s325 = sphi 0, %s324
    %s341 = sphi 0, %s325
  $region4: #{robotnet_forward.1} parent=0 // loop_header_branch
    %31 = sbr.rel (%p29) target = $region8
  $region5: #{robotnet_forward.1} parent=0 // loop_body
    %s33 = ssub.s32 %s28, 1
    %s34 = ssub.s32 %s28, 2
    %s35 = sadd.s32 %s28, 1
    %s36 = ssub.s32 %s28, %s35
    %p37 = scmp.eq.s32.totalorder %s36, 0
    %s39 = sadd.s32 %s38, 1
    %s40 = scalar_select %p37, %s38, %s39
    %p43 = pneg %p37
    %p44 = scmp.eq.s32.totalorder %s28, 1
    %p45 = por %p43, %p44
    %p46 = scmp.ne.s32.totalorder %s38, %s41
    %p47 = scmp.eq.s32.totalorder %s28, 0
    %p48 = por %p46, %p47
    %p49 = scmp.ne.s32.totalorder %s38, %s41
    %p50 = scmp.eq.s32.totalorder %s33, 1
    %p51 = por %p49, %p50
    %p52 = scmp.ne.s32.totalorder %s41, %s42
    %p53 = scmp.eq.s32.totalorder %s33, 0
    %p54 = por %p52, %p53
    %p55 = scmp.ne.s32.totalorder %s41, %s42
    %p56 = scmp.eq.s32.totalorder %s34, 1
    %p57 = por %p55, %p56
    %p59 = scmp.ne.s32.totalorder %s42, %s58
    %p60 = scmp.eq.s32.totalorder %s34, 0
    %p61 = por %p59, %p60
    %s62 = ssub.s32 %s28, %s35
    %p63 = scmp.eq.s32.totalorder %s62, 0
    %s65 = sadd.s32 %s64, 1
    %s66 = scalar_select %p63, %s64, %s65
    %p69 = pneg %p63
    %p70 = scmp.eq.s32.totalorder %s28, 1
    %p71 = por %p69, %p70
    %p72 = scmp.ne.s32.totalorder %s64, %s67
    %p73 = scmp.eq.s32.totalorder %s28, 0
    %p74 = por %p72, %p73
    %p75 = scmp.ne.s32.totalorder %s64, %s67
    %p76 = scmp.eq.s32.totalorder %s33, 1
    %p77 = por %p75, %p76
    %p78 = scmp.ne.s32.totalorder %s67, %s68
    %p79 = scmp.eq.s32.totalorder %s33, 0
    %p80 = por %p78, %p79
    %p81 = scmp.ne.s32.totalorder %s67, %s68
    %p82 = scmp.eq.s32.totalorder %s34, 1
    %p83 = por %p81, %p82
    %p85 = scmp.ne.s32.totalorder %s68, %s84
    %p86 = scmp.eq.s32.totalorder %s34, 0
    %p87 = por %p85, %p86
    %s89 = sadd.s32 %s88, 1
    %p92 = scmp.eq.s32.totalorder %s28, 1
    %p93 = scmp.ne.s32.totalorder %s88, %s90
    %p94 = scmp.eq.s32.totalorder %s28, 0
    %p95 = por %p93, %p94
    %p96 = scmp.ne.s32.totalorder %s88, %s90
    %p97 = scmp.eq.s32.totalorder %s33, 1
    %p98 = por %p96, %p97
    %p99 = scmp.ne.s32.totalorder %s90, %s91
    %p100 = scmp.eq.s32.totalorder %s33, 0
    %p101 = por %p99, %p100
    %p102 = scmp.ne.s32.totalorder %s90, %s91
    %p103 = scmp.eq.s32.totalorder %s34, 1
    %p104 = por %p102, %p103
    %p106 = scmp.ne.s32.totalorder %s91, %s105
    %p107 = scmp.eq.s32.totalorder %s34, 0
    %p108 = por %p106, %p107
    %s110 = sadd.s32 %s109, 1
    %p113 = scmp.eq.s32.totalorder %s28, 1
    %p114 = scmp.ne.s32.totalorder %s109, %s111
    %p115 = scmp.eq.s32.totalorder %s28, 0
    %p116 = por %p114, %p115
    %p117 = scmp.ne.s32.totalorder %s109, %s111
    %p118 = scmp.eq.s32.totalorder %s33, 1
    %p119 = por %p117, %p118
    %p120 = scmp.ne.s32.totalorder %s111, %s112
    %p121 = scmp.eq.s32.totalorder %s33, 0
    %p122 = por %p120, %p121
    %p123 = scmp.ne.s32.totalorder %s111, %s112
    %p124 = scmp.eq.s32.totalorder %s34, 1
    %p125 = por %p123, %p124
    %p127 = scmp.ne.s32.totalorder %s112, %s126
    %p128 = scmp.eq.s32.totalorder %s34, 0
    %p129 = por %p127, %p128
    %s131 = sadd.s32 %s130, 1
    %p134 = scmp.eq.s32.totalorder %s28, 1
    %p135 = scmp.ne.s32.totalorder %s130, %s132
    %p136 = scmp.eq.s32.totalorder %s28, 0
    %p137 = por %p135, %p136
    %p138 = scmp.ne.s32.totalorder %s130, %s132
    %p139 = scmp.eq.s32.totalorder %s33, 1
    %p140 = por %p138, %p139
    %p141 = scmp.ne.s32.totalorder %s132, %s133
    %p142 = scmp.eq.s32.totalorder %s33, 0
    %p143 = por %p141, %p142
    %p144 = scmp.ne.s32.totalorder %s132, %s133
    %p145 = scmp.eq.s32.totalorder %s34, 1
    %p146 = por %p144, %p145
    %p148 = scmp.ne.s32.totalorder %s133, %s147
    %p149 = scmp.eq.s32.totalorder %s34, 0
    %p150 = por %p148, %p149
    %s152 = sadd.s32 %s151, 1
    %p155 = scmp.eq.s32.totalorder %s28, 1
    %p156 = scmp.ne.s32.totalorder %s151, %s153
    %p157 = scmp.eq.s32.totalorder %s28, 0
    %p158 = por %p156, %p157
    %p159 = scmp.ne.s32.totalorder %s151, %s153
    %p160 = scmp.eq.s32.totalorder %s33, 1
    %p161 = por %p159, %p160
    %p162 = scmp.ne.s32.totalorder %s153, %s154
    %p163 = scmp.eq.s32.totalorder %s33, 0
    %p164 = por %p162, %p163
    %p165 = scmp.ne.s32.totalorder %s153, %s154
    %p166 = scmp.eq.s32.totalorder %s34, 1
    %p167 = por %p165, %p166
    %p169 = scmp.ne.s32.totalorder %s154, %s168
    %p170 = scmp.eq.s32.totalorder %s34, 0
    %p171 = por %p169, %p170
    %s173 = sadd.s32 %s172, 1
    %p176 = scmp.eq.s32.totalorder %s28, 1
    %p177 = scmp.ne.s32.totalorder %s172, %s174
    %p178 = scmp.eq.s32.totalorder %s28, 0
    %p179 = por %p177, %p178
    %p180 = scmp.ne.s32.totalorder %s172, %s174
    %p181 = scmp.eq.s32.totalorder %s33, 1
    %p182 = por %p180, %p181
    %p183 = scmp.ne.s32.totalorder %s174, %s175
    %p184 = scmp.eq.s32.totalorder %s33, 0
    %p185 = por %p183, %p184
    %p186 = scmp.ne.s32.totalorder %s174, %s175
    %p187 = scmp.eq.s32.totalorder %s34, 1
    %p188 = por %p186, %p187
    %p190 = scmp.ne.s32.totalorder %s175, %s189
    %p191 = scmp.eq.s32.totalorder %s34, 0
    %p192 = por %p190, %p191
    %s194 = sadd.s32 %s193, 1
    %p197 = scmp.eq.s32.totalorder %s28, 1
    %p198 = scmp.ne.s32.totalorder %s193, %s195
    %p199 = scmp.eq.s32.totalorder %s28, 0
    %p200 = por %p198, %p199
    %p201 = scmp.ne.s32.totalorder %s193, %s195
    %p202 = scmp.eq.s32.totalorder %s33, 1
    %p203 = por %p201, %p202
    %p204 = scmp.ne.s32.totalorder %s195, %s196
    %p205 = scmp.eq.s32.totalorder %s33, 0
    %p206 = por %p204, %p205
    %p207 = scmp.ne.s32.totalorder %s195, %s196
    %p208 = scmp.eq.s32.totalorder %s34, 1
    %p209 = por %p207, %p208
    %p211 = scmp.ne.s32.totalorder %s196, %s210
    %p212 = scmp.eq.s32.totalorder %s34, 0
    %p213 = por %p211, %p212
    %s215 = sadd.s32 %s214, 1
    %p218 = scmp.eq.s32.totalorder %s28, 1
    %p219 = scmp.ne.s32.totalorder %s214, %s216
    %p220 = scmp.eq.s32.totalorder %s28, 0
    %p221 = por %p219, %p220
    %p222 = scmp.ne.s32.totalorder %s214, %s216
    %p223 = scmp.eq.s32.totalorder %s33, 1
    %p224 = por %p222, %p223
    %p225 = scmp.ne.s32.totalorder %s216, %s217
    %p226 = scmp.eq.s32.totalorder %s33, 0
    %p227 = por %p225, %p226
    %p228 = scmp.ne.s32.totalorder %s216, %s217
    %p229 = scmp.eq.s32.totalorder %s34, 1
    %p230 = por %p228, %p229
    %p232 = scmp.ne.s32.totalorder %s217, %s231
    %p233 = scmp.eq.s32.totalorder %s34, 0
    %p234 = por %p232, %p233
    %s236 = sadd.s32 %s235, 1
    %p239 = scmp.eq.s32.totalorder %s28, 1
    %p240 = scmp.ne.s32.totalorder %s235, %s237
    %p241 = scmp.eq.s32.totalorder %s28, 0
    %p242 = por %p240, %p241
    %p243 = scmp.ne.s32.totalorder %s235, %s237
    %p244 = scmp.eq.s32.totalorder %s33, 1
    %p245 = por %p243, %p244
    %p246 = scmp.ne.s32.totalorder %s237, %s238
    %p247 = scmp.eq.s32.totalorder %s33, 0
    %p248 = por %p246, %p247
    %p249 = scmp.ne.s32.totalorder %s237, %s238
    %p250 = scmp.eq.s32.totalorder %s34, 1
    %p251 = por %p249, %p250
    %p253 = scmp.ne.s32.totalorder %s238, %s252
    %p254 = scmp.eq.s32.totalorder %s34, 0
    %p255 = por %p253, %p254
    %s257 = sadd.s32 %s256, 1
    %p260 = scmp.eq.s32.totalorder %s28, 1
    %p261 = scmp.ne.s32.totalorder %s256, %s258
    %p262 = scmp.eq.s32.totalorder %s28, 0
    %p263 = por %p261, %p262
    %p264 = scmp.ne.s32.totalorder %s256, %s258
    %p265 = scmp.eq.s32.totalorder %s33, 1
    %p266 = por %p264, %p265
    %p267 = scmp.ne.s32.totalorder %s258, %s259
    %p268 = scmp.eq.s32.totalorder %s33, 0
    %p269 = por %p267, %p268
    %p270 = scmp.ne.s32.totalorder %s258, %s259
    %p271 = scmp.eq.s32.totalorder %s34, 1
    %p272 = por %p270, %p271
    %p274 = scmp.ne.s32.totalorder %s259, %s273
    %p275 = scmp.eq.s32.totalorder %s34, 0
    %p276 = por %p274, %p275
    %s278 = sadd.s32 %s277, 1
    %p281 = scmp.eq.s32.totalorder %s28, 1
    %p282 = scmp.ne.s32.totalorder %s277, %s279
    %p283 = scmp.eq.s32.totalorder %s28, 0
    %p284 = por %p282, %p283
    %p285 = scmp.ne.s32.totalorder %s277, %s279
    %p286 = scmp.eq.s32.totalorder %s33, 1
    %p287 = por %p285, %p286
    %p288 = scmp.ne.s32.totalorder %s279, %s280
    %p289 = scmp.eq.s32.totalorder %s33, 0
    %p290 = por %p288, %p289
    %p291 = scmp.ne.s32.totalorder %s279, %s280
    %p292 = scmp.eq.s32.totalorder %s34, 1
    %p293 = por %p291, %p292
    %p295 = scmp.ne.s32.totalorder %s280, %s294
    %p296 = scmp.eq.s32.totalorder %s34, 0
    %p297 = por %p295, %p296
    %s299 = sadd.s32 %s298, 1
    %p302 = scmp.eq.s32.totalorder %s28, 1
    %p303 = scmp.ne.s32.totalorder %s298, %s300
    %p304 = scmp.eq.s32.totalorder %s28, 0
    %p305 = por %p303, %p304
    %p306 = scmp.ne.s32.totalorder %s298, %s300
    %p307 = scmp.eq.s32.totalorder %s33, 1
    %p308 = por %p306, %p307
    %p309 = scmp.ne.s32.totalorder %s300, %s301
    %p310 = scmp.eq.s32.totalorder %s33, 0
    %p311 = por %p309, %p310
    %p312 = scmp.ne.s32.totalorder %s300, %s301
    %p313 = scmp.eq.s32.totalorder %s34, 1
    %p314 = por %p312, %p313
    %p316 = scmp.ne.s32.totalorder %s301, %s315
    %p317 = scmp.eq.s32.totalorder %s34, 0
    %p318 = por %p316, %p317
    %s319 = ssub.s32 %s28, %s35
    %p320 = scmp.eq.s32.totalorder %s319, 0
    %s322 = sadd.s32 %s321, 1
    %s323 = scalar_select %p320, %s321, %s322
    %p326 = pneg %p320
    %p327 = scmp.eq.s32.totalorder %s28, 1
    %p328 = por %p326, %p327
    %p329 = scmp.ne.s32.totalorder %s321, %s324
    %p330 = scmp.eq.s32.totalorder %s28, 0
    %p331 = por %p329, %p330
    %p332 = scmp.ne.s32.totalorder %s321, %s324
    %p333 = scmp.eq.s32.totalorder %s33, 1
    %p334 = por %p332, %p333
    %p335 = scmp.ne.s32.totalorder %s324, %s325
    %p336 = scmp.eq.s32.totalorder %s33, 0
    %p337 = por %p335, %p336
    %p338 = scmp.ne.s32.totalorder %s324, %s325
    %p339 = scmp.eq.s32.totalorder %s34, 1
    %p340 = por %p338, %p339
    %p342 = scmp.ne.s32.totalorder %s325, %s341
    %p343 = scmp.eq.s32.totalorder %s34, 0
    %p344 = por %p342, %p343
    %p345 = scmp.le.s32.totalorder 1, %s28
    %p346 = scmp.lt.s32.totalorder %s28, 3
    %p347 = pnand %p345, %p346
    %p348 = pneg %p347
    // Predicated region
    $region9: #{robotnet_forward.1} parent=5 // pred_check
      _
    $region10: #{robotnet_forward.1} parent=5 // pred_check_branch
      %350 = sbr.rel (%p347) target = $region12
    $region11: #{robotnet_forward.1} parent=5 // pred_region
      %s351 = ssub.s32 %s28, 1
      // Predicated region
      $region13: #{robotnet_forward.1} parent=11 // pred_check
        %p352 = pneg %p101
      $region14: #{robotnet_forward.1} parent=11 // pred_check_branch
        %354 = sbr.rel (%p352) target = $region16
      $region15: #{robotnet_forward.1} parent=11 // pred_region
        _
      $region16: #{robotnet_forward.1} parent=11 // pred_fallthru
        _
      // Predicated region
      $region17: #{robotnet_forward.1} parent=11 // pred_check
        %p355 = pneg %p122
      $region18: #{robotnet_forward.1} parent=11 // pred_check_branch
        %357 = sbr.rel (%p355) target = $region20
      $region19: #{robotnet_forward.1} parent=11 // pred_region
        _
      $region20: #{robotnet_forward.1} parent=11 // pred_fallthru
        _
      // Predicated region
      $region21: #{robotnet_forward.1} parent=11 // pred_check
        %p358 = pneg %p143
      $region22: #{robotnet_forward.1} parent=11 // pred_check_branch
        %360 = sbr.rel (%p358) target = $region24
      $region23: #{robotnet_forward.1} parent=11 // pred_region
        _
      $region24: #{robotnet_forward.1} parent=11 // pred_fallthru
        _
      // Predicated region
      $region25: #{robotnet_forward.1} parent=11 // pred_check
        %p361 = pneg %p164
      $region26: #{robotnet_forward.1} parent=11 // pred_check_branch
        %363 = sbr.rel (%p361) target = $region28
      $region27: #{robotnet_forward.1} parent=11 // pred_region
        _
      $region28: #{robotnet_forward.1} parent=11 // pred_fallthru
        _
      // Predicated region
      $region29: #{robotnet_forward.1} parent=11 // pred_check
        %p364 = pneg %p185
      $region30: #{robotnet_forward.1} parent=11 // pred_check_branch
        %366 = sbr.rel (%p364) target = $region32
      $region31: #{robotnet_forward.1} parent=11 // pred_region
        _
      $region32: #{robotnet_forward.1} parent=11 // pred_fallthru
        _
      // Predicated region
      $region33: #{robotnet_forward.1} parent=11 // pred_check
        %p367 = pneg %p206
      $region34: #{robotnet_forward.1} parent=11 // pred_check_branch
        %369 = sbr.rel (%p367) target = $region36
      $region35: #{robotnet_forward.1} parent=11 // pred_region
        _
      $region36: #{robotnet_forward.1} parent=11 // pred_fallthru
        _
      // Predicated region
      $region37: #{robotnet_forward.1} parent=11 // pred_check
        %p370 = pneg %p227
      $region38: #{robotnet_forward.1} parent=11 // pred_check_branch
        %372 = sbr.rel (%p370) target = $region40
      $region39: #{robotnet_forward.1} parent=11 // pred_region
        _
      $region40: #{robotnet_forward.1} parent=11 // pred_fallthru
        _
      // Predicated region
      $region41: #{robotnet_forward.1} parent=11 // pred_check
        %p373 = pneg %p248
      $region42: #{robotnet_forward.1} parent=11 // pred_check_branch
        %375 = sbr.rel (%p373) target = $region44
      $region43: #{robotnet_forward.1} parent=11 // pred_region
        _
      $region44: #{robotnet_forward.1} parent=11 // pred_fallthru
        _
      // Predicated region
      $region45: #{robotnet_forward.1} parent=11 // pred_check
        %p376 = pneg %p269
      $region46: #{robotnet_forward.1} parent=11 // pred_check_branch
        %378 = sbr.rel (%p376) target = $region48
      $region47: #{robotnet_forward.1} parent=11 // pred_region
        _
      $region48: #{robotnet_forward.1} parent=11 // pred_fallthru
        _
      // Predicated region
      $region49: #{robotnet_forward.1} parent=11 // pred_check
        %p379 = pneg %p290
      $region50: #{robotnet_forward.1} parent=11 // pred_check_branch
        %381 = sbr.rel (%p379) target = $region52
      $region51: #{robotnet_forward.1} parent=11 // pred_region
        _
      $region52: #{robotnet_forward.1} parent=11 // pred_fallthru
        _
      // Predicated region
      $region53: #{robotnet_forward.1} parent=11 // pred_check
        %p382 = pneg %p311
      $region54: #{robotnet_forward.1} parent=11 // pred_check_branch
        %384 = sbr.rel (%p382) target = $region56
      $region55: #{robotnet_forward.1} parent=11 // pred_region
        _
      $region56: #{robotnet_forward.1} parent=11 // pred_fallthru
        _
    $region12: #{robotnet_forward.1} parent=5 // pred_fallthru
      _
    %p385 = scmp.lt.s32.totalorder %s28, 2
    // Predicated region
    $region57: #{robotnet_forward.1} parent=5 // pred_check
      %p386 = pneg %p385
    $region58: #{robotnet_forward.1} parent=5 // pred_check_branch
      %388 = sbr.rel (%p386) target = $region60
    $region59: #{robotnet_forward.1} parent=5 // pred_region
      // Predicated region
      $region61: #{robotnet_forward.1} parent=59 // pred_check
        %p389 = pneg %p48
      $region62: #{robotnet_forward.1} parent=59 // pred_check_branch
        %391 = sbr.rel (%p389) target = $region64
      $region63: #{robotnet_forward.1} parent=59 // pred_region
        %p392 = scmp.lt.s32.totalorder %s28, 1
        %s393 = scalar_select %p392, %s28, 1
        %s394 = smul.addr %s393, 2
        %s395 = smul.addr %s394, 8
        %s396 = scalar_lea.vmem %s1, %s395
      $region64: #{robotnet_forward.1} parent=59 // pred_fallthru
        _
      // Predicated region
      $region65: #{robotnet_forward.1} parent=59 // pred_check
        %p397 = pneg %p74
      $region66: #{robotnet_forward.1} parent=59 // pred_check_branch
        %399 = sbr.rel (%p397) target = $region68
      $region67: #{robotnet_forward.1} parent=59 // pred_region
        %p400 = scmp.lt.s32.totalorder %s28, 1
        %s401 = scalar_select %p400, %s28, 1
        %s402 = smul.addr %s401, 2
        %s403 = smul.addr %s402, 8
        %s404 = scalar_lea.vmem %s2, %s403
      $region68: #{robotnet_forward.1} parent=59 // pred_fallthru
        _
    $region60: #{robotnet_forward.1} parent=5 // pred_fallthru
      _
    %p405 = scmp.le.s32.totalorder 1, %s28
    %p406 = scmp.lt.s32.totalorder %s28, 3
    %p407 = pnand %p405, %p406
    %p408 = pneg %p407
    // Predicated region
    $region69: #{robotnet_forward.1} parent=5 // pred_check
      _
    $region70: #{robotnet_forward.1} parent=5 // pred_check_branch
      %410 = sbr.rel (%p407) target = $region72
    $region71: #{robotnet_forward.1} parent=5 // pred_region
      %s411 = ssub.s32 %s28, 1
      %p412 = scmp.lt.s32.totalorder %s33, 1
      %s413 = scalar_select %p412, %s33, 1
      %s414 = smul.addr %s413, 2
      %s415 = smul.addr %s414, 8
      %s416 = scalar_lea.vmem %s1, %s415
      %p417 = pneg %p54
      %p418 = pneg %p51
      %p419 = scmp.lt.s32.totalorder %s33, 1
      %s420 = scalar_select %p419, %s33, 1
      %s421 = smul.addr %s420, 2
      %s422 = smul.addr %s421, 8
      %s423 = scalar_lea.vmem %s2, %s422
      %p424 = pneg %p80
      %p425 = pneg %p77
      %p426 = pneg %p101
      %p427 = pneg %p98
      %p428 = pneg %p122
      %p429 = pneg %p119
      %p430 = pneg %p143
      %p431 = pneg %p140
      %p432 = pneg %p164
      %p433 = pneg %p161
      %p434 = pneg %p185
      %p435 = pneg %p182
      %p436 = pneg %p206
      %p437 = pneg %p203
      %p438 = pneg %p227
      %p439 = pneg %p224
      %p440 = pneg %p248
      %p441 = pneg %p245
      %p442 = pneg %p269
      %p443 = pneg %p266
      %p444 = pneg %p290
      %p445 = pneg %p287
      %p446 = pneg %p311
      %p447 = pneg %p308
      %p448 = pneg %p337
      %p449 = pneg %p334
      %p450 = scmp.lt.s32.totalorder %s33, 1
      %s451 = scalar_select %p450, %s33, 1
      %s452 = scalar_lea.vmem %s14, %s451
      %p453 = scmp.lt.s32.totalorder %s33, 1
      %s454 = scalar_select %p453, %s33, 1
      %s455 = smul.addr %s454, 2
      %s456 = smul.addr %s455, 8
      %s457 = scalar_lea.vmem %s1, %s456
      %p458 = scmp.lt.s32.totalorder %s33, 1
      %s459 = scalar_select %p458, %s33, 1
      %s460 = smul.addr %s459, 2
      %s461 = smul.addr %s460, 8
      %s462 = scalar_lea.vmem %s2, %s461
      %p463 = scmp.lt.s32.totalorder %s33, 1
      %s464 = scalar_select %p463, %s33, 1
      %s465 = scalar_lea.vmem %s14, %s464
      %v466 = vld [vmem:[%s457] sm:$0xff]
      %v467 = vld [vmem:[%s457 + $0x8] sm:$0xff]
      %v468 = vld [vmem:[%s462] sm:$0xff]
      %v469 = vld [vmem:[%s462 + $0x8] sm:$0xff]
      %v470 = vlaneseq
      %v471 = vshrl.u32 %v470, 7
      %v472 = vadd.s32 %v471, 8
      %v473 = vlaneseq
      %v474 = vand.u32 %v473, 127
      %vm475 = vcmp.eq.s32.totalorder %v471, %v474
      %vm476 = vcmp.eq.s32.totalorder %v472, %v474
      %v477 = vsel %vm475, 1.0, %v468
      %v478 = vsel %vm476, 1.0, %v469
      %s479 = sld [smem:[#allocation3 + %s33]]
      %v480 = vstv %s479
      %vm481 = vcmp.lt.s32.totalorder %v471, %v480
      %vm482 = vcmp.lt.s32.totalorder %v472, %v480
      %v483 = vsel %vm481, 1, 0
      %v484 = vsel %vm482, 1, 0
      %v485 = vcvt.s32.f32 %v483
      %v486 = vcvt.s32.f32 %v484
      %v487 = vld [vmem:[%s3] sm:$0xff]
      %v488 = vld [vmem:[%s3 + $0x8] sm:$0xff]
      %v489 = vld [vmem:[%s3 + $0x10] sm:$0xff]
      %v490 = vld [vmem:[%s3 + $0x18] sm:$0xff]
      %v491 = vld [vmem:[%s3 + $0x20] sm:$0xff]
      %v492 = vld [vmem:[%s3 + $0x28] sm:$0xff]
      %v493 = vld [vmem:[%s3 + $0x30] sm:$0xff]
      %v494 = vld [vmem:[%s3 + $0x38] sm:$0xff]
      %v495 = vld [vmem:[%s3 + $0x40] sm:$0xff]
      %v496 = vld [vmem:[%s3 + $0x48] sm:$0xff]
      %v497 = vld [vmem:[%s3 + $0x50] sm:$0xff]
      %v498 = vld [vmem:[%s3 + $0x58] sm:$0xff]
      %v499 = vld [vmem:[%s3 + $0x60] sm:$0xff]
      %v500 = vld [vmem:[%s3 + $0x68] sm:$0xff]
      %v501 = vld [vmem:[%s3 + $0x70] sm:$0xff]
      %v502 = vld [vmem:[%s3 + $0x78] sm:$0xff]
      %v503 = vld [vmem:[%s3 + $0x80] sm:$0xff]
      %v504 = vld [vmem:[%s3 + $0x88] sm:$0xff]
      %v505 = vld [vmem:[%s3 + $0x90] sm:$0xff]
      %v506 = vld [vmem:[%s3 + $0x98] sm:$0xff]
      %v507 = vld [vmem:[%s3 + $0xa0] sm:$0xff]
      %v508 = vld [vmem:[%s3 + $0xa8] sm:$0xff]
      %v509 = vld [vmem:[%s3 + $0xb0] sm:$0xff]
      %v510 = vld [vmem:[%s3 + $0xb8] sm:$0xff]
      %v511 = vld [vmem:[%s3 + $0xc0] sm:$0xff]
      %v512 = vld [vmem:[%s3 + $0xc8] sm:$0xff]
      %v513 = vld [vmem:[%s3 + $0xd0] sm:$0xff]
      %v514 = vld [vmem:[%s3 + $0xd8] sm:$0xff]
      %v515 = vld [vmem:[%s3 + $0xe0] sm:$0xff]
      %v516 = vld [vmem:[%s3 + $0xe8] sm:$0xff]
      %v517 = vld [vmem:[%s3 + $0xf0] sm:$0xff]
      %v518 = vld [vmem:[%s3 + $0xf8] sm:$0xff]
      %519 = vmatprep.subr.mxu0 %v488
      %520 = vmatpush1.msra.mxu0 %v487
      %521 = vmatprep.subr.mxu0 %v490
      %522 = vmatpush1.msra.mxu0 %v489
      %523 = vmatprep.subr.mxu0 %v492
      %524 = vmatpush1.msra.mxu0 %v491
      %525 = vmatprep.subr.mxu0 %v494
      %526 = vmatpush1.msra.mxu0 %v493
      %527 = vmatprep.subr.mxu0 %v496
      %528 = vmatpush1.msra.mxu0 %v495
      %529 = vmatprep.subr.mxu0 %v498
      %530 = vmatpush1.msra.mxu0 %v497
      %531 = vmatprep.subr.mxu0 %v500
      %532 = vmatpush1.msra.mxu0 %v499
      %533 = vmatprep.subr.mxu0 %v502
      %534 = vmatpush1.msra.mxu0 %v501
      %535 = vmatprep.subr.mxu0 %v504
      %536 = vmatpush1.msra.mxu0 %v503
      %537 = vmatprep.subr.mxu0 %v506
      %538 = vmatpush1.msra.mxu0 %v505
      %539 = vmatprep.subr.mxu0 %v508
      %540 = vmatpush1.msra.mxu0 %v507
      %541 = vmatprep.subr.mxu0 %v510
      %542 = vmatpush1.msra.mxu0 %v509
      %543 = vmatprep.subr.mxu0 %v512
      %544 = vmatpush1.msra.mxu0 %v511
      %545 = vmatprep.subr.mxu0 %v514
      %546 = vmatpush1.msra.mxu0 %v513
      %547 = vmatprep.subr.mxu0 %v516
      %548 = vmatpush1.msra.mxu0 %v515
      %549 = vmatprep.subr.mxu0 %v518
      %550 = vmatpush1.msra.mxu0 %v517
      %551 = vmatprep.subr.mxu0 0.0
      %552 = vmatpush1.msra.mxu0 0.0
      %553 = vmatprep.subr.mxu0 0.0
      %554 = vmatpush1.msra.mxu0 0.0
      %555 = vmatprep.subr.mxu0 0.0
      %556 = vmatpush1.msra.mxu0 0.0
      %557 = vmatprep.subr.mxu0 0.0
      %558 = vmatpush1.msra.mxu0 0.0
      %559 = vmatprep.subr.mxu0 0.0
      %560 = vmatpush1.msra.mxu0 0.0
      %561 = vmatprep.subr.mxu0 0.0
      %562 = vmatpush1.msra.mxu0 0.0
      %563 = vmatprep.subr.mxu0 0.0
      %564 = vmatpush1.msra.mxu0 0.0
      %565 = vmatprep.subr.mxu0 0.0
      %566 = vmatpush1.msra.mxu0 0.0
      %567 = vmatprep.subr.mxu0 0.0
      %568 = vmatpush1.msra.mxu0 0.0
      %569 = vmatprep.subr.mxu0 0.0
      %570 = vmatpush1.msra.mxu0 0.0
      %571 = vmatprep.subr.mxu0 0.0
      %572 = vmatpush1.msra.mxu0 0.0
      %573 = vmatprep.subr.mxu0 0.0
      %574 = vmatpush1.msra.mxu0 0.0
      %575 = vmatprep.subr.mxu0 0.0
      %576 = vmatpush1.msra.mxu0 0.0
      %577 = vmatprep.subr.mxu0 0.0
      %578 = vmatpush1.msra.mxu0 0.0
      %579 = vmatprep.subr.mxu0 0.0
      %580 = vmatpush1.msra.mxu0 0.0
      %581 = vmatprep.subr.mxu0 0.0
      %582 = vmatpush1.msra.mxu0 0.0
      %583 = vmatprep.mubr.f32.mxu0 0.0
      %584 = vmatmul.mubr.f32.gmra.mrb[0].mxu0 %v466
      %v585 = vpop.f32.mrb[0].mxu0
      %v586 = vadd.f32 0.0, %v585
      %v587 = vpop.f32.mrb[0].mxu0
      %v588 = vadd.f32 0.0, %v587
      %589 = vmatprep.mubr.f32.mxu0 0.0
      %590 = vmatmul.mubr.f32.gmra.mrb[0].mxu0 %v467
      %v591 = vpop.f32.mrb[0].mxu0
      %v592 = vadd.f32 0.0, %v591
      %v593 = vpop.f32.mrb[0].mxu0
      %v594 = vadd.f32 0.0, %v593
      %595 = vdwg.mxu0
      %v596 = vld [vmem:[%s4] sm:$0x1]
      %v598 = vlaneseq
      %v599 = vshrl.u32 %v598, 7
      %v600 = vsub.s32 0, %v599
      %v601 = vrot.slane %v596, %v600
      %v603 = vadd.f32 %v586, %v601
      %v604 = vadd.f32 %v592, %v601
      %v605 = vmax.f32 %v603, 0.0
      %v606 = vmax.f32 %v604, 0.0
      %v607 = vmul.f32 %v605, %v485
      %v608 = vmul.f32 %v606, %v486
      %610 = vset.pattern.permute.xlu0 0
      %611 = vperm.xlu0 %610, %v477
      %v612 = vpop.permute.xlu0 %611
      %615 = vset.pattern.permute.xlu0 0
      %616 = vperm.xlu0 %615, %v478
      %v617 = vpop.permute.xlu0 %616
      %v619 = vlaneseq
      %v620 = vshrl.u32 %v619, 7
      %v621 = vsub.s32 0, %v620
      %v622 = vrot.slane %v607, %v621
      %v623 = vmul.f32 %v612, %v622
      %v624 = vmul.f32 %v617, %v622
      %625 = vset.pattern.permute.xlu0 1
      %626 = vperm.xlu0 %625, %v477
      %v627 = vpop.permute.xlu0 %626
      %629 = vset.pattern.permute.xlu0 1
      %630 = vperm.xlu0 %629, %v478
      %v631 = vpop.permute.xlu0 %630
      %v633 = vlaneseq
      %v634 = vshrl.u32 %v633, 7
      %v635 = vsub.s32 1, %v634
      %v636 = vrot.slane %v607, %v635
      %v637 = vmul.f32 %v627, %v636
      %v638 = vmul.f32 %v631, %v636
      %v639 = vmax.f32 %v623, %v637
      %v640 = vmax.f32 %v624, %v638
      %641 = vset.pattern.permute.xlu0 2
      %642 = vperm.xlu0 %641, %v477
      %v643 = vpop.permute.xlu0 %642
      %645 = vset.pattern.permute.xlu0 2
      %646 = vperm.xlu0 %645, %v478
      %v647 = vpop.permute.xlu0 %646
      %v649 = vlaneseq
      %v650 = vshrl.u32 %v649, 7
      %v651 = vsub.s32 2, %v650
      %v652 = vrot.slane %v607, %v651
      %v653 = vmul.f32 %v643, %v652
      %v654 = vmul.f32 %v647, %v652
      %v655 = vmax.f32 %v639, %v653
      %v656 = vmax.f32 %v640, %v654
      %657 = vset.pattern.permute.xlu0 3
      %658 = vperm.xlu0 %657, %v477
      %v659 = vpop.permute.xlu0 %658
      %661 = vset.pattern.permute.xlu0 3
      %662 = vperm.xlu0 %661, %v478
      %v663 = vpop.permute.xlu0 %662
      %v665 = vlaneseq
      %v666 = vshrl.u32 %v665, 7
      %v667 = vsub.s32 3, %v666
      %v668 = vrot.slane %v607, %v667
      %v669 = vmul.f32 %v659, %v668
      %v670 = vmul.f32 %v663, %v668
      %v671 = vmax.f32 %v655, %v669
      %v672 = vmax.f32 %v656, %v670
      %673 = vset.pattern.permute.xlu0 4
      %674 = vperm.xlu0 %673, %v477
      %v675 = vpop.permute.xlu0 %674
      %677 = vset.pattern.permute.xlu0 4
      %678 = vperm.xlu0 %677, %v478
      %v679 = vpop.permute.xlu0 %678
      %v681 = vlaneseq
      %v682 = vshrl.u32 %v681, 7
      %v683 = vsub.s32 4, %v682
      %v684 = vrot.slane %v607, %v683
      %v685 = vmul.f32 %v675, %v684
      %v686 = vmul.f32 %v679, %v684
      %v687 = vmax.f32 %v671, %v685
      %v688 = vmax.f32 %v672, %v686
      %689 = vset.pattern.permute.xlu0 5
      %690 = vperm.xlu0 %689, %v477
      %v691 = vpop.permute.xlu0 %690
      %693 = vset.pattern.permute.xlu0 5
      %694 = vperm.xlu0 %693, %v478
      %v695 = vpop.permute.xlu0 %694
      %v697 = vlaneseq
      %v698 = vshrl.u32 %v697, 7
      %v699 = vsub.s32 5, %v698
      %v700 = vrot.slane %v607, %v699
      %v701 = vmul.f32 %v691, %v700
      %v702 = vmul.f32 %v695, %v700
      %v703 = vmax.f32 %v687, %v701
      %v704 = vmax.f32 %v688, %v702
      %705 = vset.pattern.permute.xlu0 6
      %706 = vperm.xlu0 %705, %v477
      %v707 = vpop.permute.xlu0 %706
      %709 = vset.pattern.permute.xlu0 6
      %710 = vperm.xlu0 %709, %v478
      %v711 = vpop.permute.xlu0 %710
      %v713 = vlaneseq
      %v714 = vshrl.u32 %v713, 7
      %v715 = vsub.s32 6, %v714
      %v716 = vrot.slane %v607, %v715
      %v717 = vmul.f32 %v707, %v716
      %v718 = vmul.f32 %v711, %v716
      %v719 = vmax.f32 %v703, %v717
      %v720 = vmax.f32 %v704, %v718
      %721 = vset.pattern.permute.xlu0 7
      %722 = vperm.xlu0 %721, %v477
      %v723 = vpop.permute.xlu0 %722
      %725 = vset.pattern.permute.xlu0 7
      %726 = vperm.xlu0 %725, %v478
      %v727 = vpop.permute.xlu0 %726
      %v729 = vlaneseq
      %v730 = vshrl.u32 %v729, 7
      %v731 = vsub.s32 7, %v730
      %v732 = vrot.slane %v607, %v731
      %v733 = vmul.f32 %v723, %v732
      %v734 = vmul.f32 %v727, %v732
      %v735 = vmax.f32 %v719, %v733
      %v736 = vmax.f32 %v720, %v734
      %737 = vset.pattern.permute.xlu0 8
      %738 = vperm.xlu0 %737, %v477
      %v739 = vpop.permute.xlu0 %738
      %741 = vset.pattern.permute.xlu0 8
      %742 = vperm.xlu0 %741, %v478
      %v743 = vpop.permute.xlu0 %742
      %v745 = vlaneseq
      %v746 = vshrl.u32 %v745, 7
      %v747 = vsub.s32 0, %v746
      %v748 = vrot.slane %v608, %v747
      %v749 = vmul.f32 %v739, %v748
      %v750 = vmul.f32 %v743, %v748
      %v751 = vmax.f32 %v735, %v749
      %v752 = vmax.f32 %v736, %v750
      %753 = vset.pattern.permute.xlu0 9
      %754 = vperm.xlu0 %753, %v477
      %v755 = vpop.permute.xlu0 %754
      %757 = vset.pattern.permute.xlu0 9
      %758 = vperm.xlu0 %757, %v478
      %v759 = vpop.permute.xlu0 %758
      %v761 = vlaneseq
      %v762 = vshrl.u32 %v761, 7
      %v763 = vsub.s32 1, %v762
      %v764 = vrot.slane %v608, %v763
      %v765 = vmul.f32 %v755, %v764
      %v766 = vmul.f32 %v759, %v764
      %v767 = vmax.f32 %v751, %v765
      %v768 = vmax.f32 %v752, %v766
      %769 = vset.pattern.permute.xlu0 10
      %770 = vperm.xlu0 %769, %v477
      %v771 = vpop.permute.xlu0 %770
      %773 = vset.pattern.permute.xlu0 10
      %774 = vperm.xlu0 %773, %v478
      %v775 = vpop.permute.xlu0 %774
      %v777 = vlaneseq
      %v778 = vshrl.u32 %v777, 7
      %v779 = vsub.s32 2, %v778
      %v780 = vrot.slane %v608, %v779
      %v781 = vmul.f32 %v771, %v780
      %v782 = vmul.f32 %v775, %v780
      %v783 = vmax.f32 %v767, %v781
      %v784 = vmax.f32 %v768, %v782
      %785 = vset.pattern.permute.xlu0 11
      %786 = vperm.xlu0 %785, %v477
      %v787 = vpop.permute.xlu0 %786
      %789 = vset.pattern.permute.xlu0 11
      %790 = vperm.xlu0 %789, %v478
      %v791 = vpop.permute.xlu0 %790
      %v793 = vlaneseq
      %v794 = vshrl.u32 %v793, 7
      %v795 = vsub.s32 3, %v794
      %v796 = vrot.slane %v608, %v795
      %v797 = vmul.f32 %v787, %v796
      %v798 = vmul.f32 %v791, %v796
      %v799 = vmax.f32 %v783, %v797
      %v800 = vmax.f32 %v784, %v798
      %801 = vset.pattern.permute.xlu0 12
      %802 = vperm.xlu0 %801, %v477
      %v803 = vpop.permute.xlu0 %802
      %805 = vset.pattern.permute.xlu0 12
      %806 = vperm.xlu0 %805, %v478
      %v807 = vpop.permute.xlu0 %806
      %v809 = vlaneseq
      %v810 = vshrl.u32 %v809, 7
      %v811 = vsub.s32 4, %v810
      %v812 = vrot.slane %v608, %v811
      %v813 = vmul.f32 %v803, %v812
      %v814 = vmul.f32 %v807, %v812
      %v815 = vmax.f32 %v799, %v813
      %v816 = vmax.f32 %v800, %v814
      %817 = vset.pattern.permute.xlu0 13
      %818 = vperm.xlu0 %817, %v477
      %v819 = vpop.permute.xlu0 %818
      %821 = vset.pattern.permute.xlu0 13
      %822 = vperm.xlu0 %821, %v478
      %v823 = vpop.permute.xlu0 %822
      %v825 = vlaneseq
      %v826 = vshrl.u32 %v825, 7
      %v827 = vsub.s32 5, %v826
      %v828 = vrot.slane %v608, %v827
      %v829 = vmul.f32 %v819, %v828
      %v830 = vmul.f32 %v823, %v828
      %v831 = vmax.f32 %v815, %v829
      %v832 = vmax.f32 %v816, %v830
      %833 = vset.pattern.permute.xlu0 14
      %834 = vperm.xlu0 %833, %v477
      %v835 = vpop.permute.xlu0 %834
      %837 = vset.pattern.permute.xlu0 14
      %838 = vperm.xlu0 %837, %v478
      %v839 = vpop.permute.xlu0 %838
      %v841 = vlaneseq
      %v842 = vshrl.u32 %v841, 7
      %v843 = vsub.s32 6, %v842
      %v844 = vrot.slane %v608, %v843
      %v845 = vmul.f32 %v835, %v844
      %v846 = vmul.f32 %v839, %v844
      %v847 = vmax.f32 %v831, %v845
      %v848 = vmax.f32 %v832, %v846
      %849 = vset.pattern.permute.xlu0 15
      %850 = vperm.xlu0 %849, %v477
      %v851 = vpop.permute.xlu0 %850
      %853 = vset.pattern.permute.xlu0 15
      %854 = vperm.xlu0 %853, %v478
      %v855 = vpop.permute.xlu0 %854
      %v857 = vlaneseq
      %v858 = vshrl.u32 %v857, 7
      %v859 = vsub.s32 7, %v858
      %v860 = vrot.slane %v608, %v859
      %v861 = vmul.f32 %v851, %v860
      %v862 = vmul.f32 %v855, %v860
      %v863 = vmax.f32 %v847, %v861
      %v864 = vmax.f32 %v848, %v862
      %v865 = vld [vmem:[%s5] sm:$0xff]
      %v866 = vld [vmem:[%s5 + $0x8] sm:$0xff]
      %v867 = vld [vmem:[%s5 + $0x10] sm:$0xff]
      %v868 = vld [vmem:[%s5 + $0x18] sm:$0xff]
      %v869 = vld [vmem:[%s5 + $0x20] sm:$0xff]
      %v870 = vld [vmem:[%s5 + $0x28] sm:$0xff]
      %v871 = vld [vmem:[%s5 + $0x30] sm:$0xff]
      %v872 = vld [vmem:[%s5 + $0x38] sm:$0xff]
      %v873 = vld [vmem:[%s5 + $0x40] sm:$0xff]
      %v874 = vld [vmem:[%s5 + $0x48] sm:$0xff]
      %v875 = vld [vmem:[%s5 + $0x50] sm:$0xff]
      %v876 = vld [vmem:[%s5 + $0x58] sm:$0xff]
      %v877 = vld [vmem:[%s5 + $0x60] sm:$0xff]
      %v878 = vld [vmem:[%s5 + $0x68] sm:$0xff]
      %v879 = vld [vmem:[%s5 + $0x70] sm:$0xff]
      %v880 = vld [vmem:[%s5 + $0x78] sm:$0xff]
      %881 = vmatprep.subr.mxu0 0.0
      %882 = vmatpush1.msra.mxu0 %v865
      %883 = vmatprep.subr.mxu0 0.0
      %884 = vmatpush1.msra.mxu0 %v866
      %885 = vmatprep.subr.mxu0 0.0
      %886 = vmatpush1.msra.mxu0 %v867
      %887 = vmatprep.subr.mxu0 0.0
      %888 = vmatpush1.msra.mxu0 %v868
      %889 = vmatprep.subr.mxu0 0.0
      %890 = vmatpush1.msra.mxu0 %v869
      %891 = vmatprep.subr.mxu0 0.0
      %892 = vmatpush1.msra.mxu0 %v870
      %893 = vmatprep.subr.mxu0 0.0
      %894 = vmatpush1.msra.mxu0 %v871
      %895 = vmatprep.subr.mxu0 0.0
      %896 = vmatpush1.msra.mxu0 %v872
      %897 = vmatprep.subr.mxu0 0.0
      %898 = vmatpush1.msra.mxu0 %v873
      %899 = vmatprep.subr.mxu0 0.0
      %900 = vmatpush1.msra.mxu0 %v874
      %901 = vmatprep.subr.mxu0 0.0
      %902 = vmatpush1.msra.mxu0 %v875
      %903 = vmatprep.subr.mxu0 0.0
      %904 = vmatpush1.msra.mxu0 %v876
      %905 = vmatprep.subr.mxu0 0.0
      %906 = vmatpush1.msra.mxu0 %v877
      %907 = vmatprep.subr.mxu0 0.0
      %908 = vmatpush1.msra.mxu0 %v878
      %909 = vmatprep.subr.mxu0 0.0
      %910 = vmatpush1.msra.mxu0 %v879
      %911 = vmatprep.subr.mxu0 0.0
      %912 = vmatpush1.msra.mxu0 %v880
      %913 = vmatprep.subr.mxu0 0.0
      %914 = vmatpush1.msra.mxu0 0.0
      %915 = vmatprep.subr.mxu0 0.0
      %916 = vmatpush1.msra.mxu0 0.0
      %917 = vmatprep.subr.mxu0 0.0
      %918 = vmatpush1.msra.mxu0 0.0
      %919 = vmatprep.subr.mxu0 0.0
      %920 = vmatpush1.msra.mxu0 0.0
      %921 = vmatprep.subr.mxu0 0.0
      %922 = vmatpush1.msra.mxu0 0.0
      %923 = vmatprep.subr.mxu0 0.0
      %924 = vmatpush1.msra.mxu0 0.0
      %925 = vmatprep.subr.mxu0 0.0
      %926 = vmatpush1.msra.mxu0 0.0
      %927 = vmatprep.subr.mxu0 0.0
      %928 = vmatpush1.msra.mxu0 0.0
      %929 = vmatprep.subr.mxu0 0.0
      %930 = vmatpush1.msra.mxu0 0.0
      %931 = vmatprep.subr.mxu0 0.0
      %932 = vmatpush1.msra.mxu0 0.0
      %933 = vmatprep.subr.mxu0 0.0
      %934 = vmatpush1.msra.mxu0 0.0
      %935 = vmatprep.subr.mxu0 0.0
      %936 = vmatpush1.msra.mxu0 0.0
      %937 = vmatprep.subr.mxu0 0.0
      %938 = vmatpush1.msra.mxu0 0.0
      %939 = vmatprep.subr.mxu0 0.0
      %940 = vmatpush1.msra.mxu0 0.0
      %941 = vmatprep.subr.mxu0 0.0
      %942 = vmatpush1.msra.mxu0 0.0
      %943 = vmatprep.subr.mxu0 0.0
      %944 = vmatpush1.msra.mxu0 0.0
      %945 = vmatprep.mubr.f32.mxu0 0.0
      %946 = vmatmul.mubr.f32.gmra.mrb[0].mxu0 %v863
      %v947 = vpop.f32.mrb[0].mxu0
      %v948 = vadd.f32 %v588, %v947
      %v949 = vpop.f32.mrb[0].mxu0
      %950 = vmatprep.mubr.f32.mxu0 0.0
      %951 = vmatmul.mubr.f32.gmra.mrb[0].mxu0 %v864
      %v952 = vpop.f32.mrb[0].mxu0
      %v953 = vadd.f32 %v594, %v952
      %v954 = vpop.f32.mrb[0].mxu0
      %955 = vdwg.mxu0
      %v956 = vmax.f32 %v948, 0.0
      %v957 = vmax.f32 %v953, 0.0
      %v958 = vld [vmem:[%s6] sm:$0x1]
      %v960 = vlaneseq
      %v961 = vshrl.u32 %v960, 7
      %v962 = vsub.s32 0, %v961
      %v963 = vrot.slane %v958, %v962
      %v965 = vmul.f32 %v956, %v963
      %v966 = vmul.f32 %v957, %v963
      %967 = vadd.xlane.f32.xlu0 %v965
      %v968 = vpop.xlane.xlu0 %967
      %969 = vadd.xlane.f32.xlu0 %v966
      %v970 = vpop.xlane.xlu0 %969
      %v971 = vtanh.pop %v968
      %v972 = vtanh.pop %v970
      %vm973 = vcmp.gt.f32.partialorder %v485, 0.0
      %vm974 = vcmp.gt.f32.partialorder %v486, 0.0
      %v975 = vsel %vm973, %v971, -1e+30
      %v976 = vsel %vm974, %v972, -1e+30
      %v977 = vsel %vm475, %v975, -1e+30
      %v978 = vsel %vm476, %v976, -1e+30
      %vm979 = vcmask 130048
      %v980 = vsel %vm979, %v977, -inf
      %v981 = vsel %vm979, %v978, -inf
      %v982 = vmax.f32 %v980, %v981
      %v983 = vrot.slane %v982, 4
      %v984 = vmax.f32 %v982, %v983
      %v985 = vrot.slane %v984, 2
      %v986 = vmax.f32 %v984, %v985
      %v987 = vrot.slane %v986, 1
      %v988 = vmax.f32 %v986, %v987
      %vm989 = vcmp.gt.f32.partialorder %v988, %v975
      %vm990 = vcmp.gt.f32.partialorder %v988, %v976
      %vm991 = vcmp.eq.f32.partialorder %v988, %v975
      %vm992 = vcmp.eq.f32.partialorder %v988, %v976
      %vm993 = vcmp.lt.s32.totalorder %v474, %v471
      %vm994 = vcmp.lt.s32.totalorder %v474, %v472
      %vm995 = vmand %vm991, %vm993
      %vm996 = vmand %vm992, %vm994
      %vm997 = vmor %vm989, %vm995
      %vm998 = vmor %vm990, %vm996
      %v999 = vsel %vm997, 1, 0
      %v1000 = vsel %vm998, 1, 0
      %v1001 = vcvt.s32.f32 %v999
      %v1002 = vcvt.s32.f32 %v1000
      %v1003 = vsel %vm979, %v1001, 0.0
      %1004 = vadd.xlane.f32.xlu0 %v1003
      %v1005 = vpop.xlane.xlu0 %1004
      %v1006 = vsel %vm979, %v1002, 0.0
      %1007 = vadd.xlane.f32.xlu0 %v1006
      %v1008 = vpop.xlane.xlu0 %1007
      %vm1009 = vcmask 7168
      %v1010 = vsel %vm1009, %v485, 0.0
      %v1011 = vsel %vm1009, %v486, 0.0
      %v1012 = vadd.f32 %v1010, %v1011
      %1013 = vadd.xlane.f32.xlu0 %v1012
      %v1014 = vpop.xlane.xlu0 %1013
      %v1015 = vrot.slane %v1014, 4
      %v1016 = vadd.f32 %v1014, %v1015
      %v1017 = vrot.slane %v1016, 2
      %v1018 = vadd.f32 %v1016, %v1017
      %v1019 = vrot.slane %v1018, 1
      %v1020 = vadd.f32 %v1018, %v1019
      %s1021 = vtos %v1020
      %s1022 = smul.f32 %s1021, 0.8
      %s1023 = sceil.f32 %s1022
      %v1024 = vstv %s1023
      %vm1025 = vcmp.lt.f32.partialorder %v1005, %v1024
      %vm1026 = vcmp.lt.f32.partialorder %v1008, %v1024
      %vm1027 = vmand %vm973, %vm1025
      %vm1028 = vmand %vm974, %vm1026
      %v1029 = vsel %vm1027, 1.0, 0.0
      %v1030 = vsel %vm1028, 1.0, 0.0
      %v1031 = vmul.f32 %v956, %v971
      %v1032 = vmul.f32 %v957, %v972
      %vm1033 = vcmp.gt.f32.partialorder %v1029, 0.0
      %vm1034 = vcmp.gt.f32.partialorder %v1030, 0.0
      %v1035 = vsel %vm1033, 1, 0
      %v1036 = vsel %vm1034, 1, 0
      %vm1037 = vcmp.eq.s32.totalorder %v1035, 1
      %vm1038 = vcmp.eq.s32.totalorder %v1036, 1
      %v1039 = vsel %vm1037, %v1031, -1e+30
      %v1040 = vsel %vm1038, %v1032, -1e+30
      %v1041 = vmax.f32 %v1039, %v1040
      %v1042 = vrot.slane %v1041, 4
      %v1043 = vmax.f32 %v1041, %v1042
      %v1044 = vrot.slane %v1043, 2
      %v1045 = vmax.f32 %v1043, %v1044
      %v1046 = vrot.slane %v1045, 1
      %v1047 = vmax.f32 %v1045, %v1046
      %v1048 = vadd.f32 %v1047, 0.0
      %v1049 = vsel %vm1009, %v1029, 0.0
      %v1050 = vsel %vm1009, %v1030, 0.0
      %v1051 = vadd.f32 %v1049, %v1050
      %1052 = vadd.xlane.f32.xlu0 %v1051
      %v1053 = vpop.xlane.xlu0 %1052
      %v1054 = vrot.slane %v1053, 4
      %v1055 = vadd.f32 %v1053, %v1054
      %v1056 = vrot.slane %v1055, 2
      %v1057 = vadd.f32 %v1055, %v1056
      %v1058 = vrot.slane %v1057, 1
      %v1059 = vadd.f32 %v1057, %v1058
      %s1060 = vtos %v1059
      %s1061 = smax.f32 %s1060, 1.0
      %v1062 = vmul.f32 %v1031, %v1029
      %v1063 = vmul.f32 %v1032, %v1030
      %v1064 = vadd.f32 %v1062, %v1063
      %v1065 = vrot.slane %v1064, 4
      %v1066 = vadd.f32 %v1064, %v1065
      %v1067 = vrot.slane %v1066, 2
      %v1068 = vadd.f32 %v1066, %v1067
      %v1069 = vrot.slane %v1068, 1
      %v1070 = vadd.f32 %v1068, %v1069
      %v1071 = vstv %s1061
      %v1072 = vrcp.pop %v1071
      %v1073 = vmul.f32 %v1070, %v1072
      %v1074 = vadd.f32 %v1073, 0.0
      %s1075 = scalar_lea.vmem %s3, 256
      %v1076 = vld [vmem:[%s1075] sm:$0xff]
      %v1077 = vld [vmem:[%s1075 + $0x8] sm:$0xff]
      %v1078 = vld [vmem:[%s1075 + $0x10] sm:$0xff]
      %v1079 = vld [vmem:[%s1075 + $0x18] sm:$0xff]
      %v1080 = vld [vmem:[%s1075 + $0x20] sm:$0xff]
      %v1081 = vld [vmem:[%s1075 + $0x28] sm:$0xff]
      %v1082 = vld [vmem:[%s1075 + $0x30] sm:$0xff]
      %v1083 = vld [vmem:[%s1075 + $0x38] sm:$0xff]
      %v1084 = vld [vmem:[%s1075 + $0x40] sm:$0xff]
      %v1085 = vld [vmem:[%s1075 + $0x48] sm:$0xff]
      %v1086 = vld [vmem:[%s1075 + $0x50] sm:$0xff]
      %v1087 = vld [vmem:[%s1075 + $0x58] sm:$0xff]
      %v1088 = vld [vmem:[%s1075 + $0x60] sm:$0xff]
      %v1089 = vld [vmem:[%s1075 + $0x68] sm:$0xff]
      %v1090 = vld [vmem:[%s1075 + $0x70] sm:$0xff]
      %v1091 = vld [vmem:[%s1075 + $0x78] sm:$0xff]
      %v1092 = vld [vmem:[%s1075 + $0x80] sm:$0xff]
      %v1093 = vld [vmem:[%s1075 + $0x88] sm:$0xff]
      %v1094 = vld [vmem:[%s1075 + $0x90] sm:$0xff]
      %v1095 = vld [vmem:[%s1075 + $0x98] sm:$0xff]
      %v1096 = vld [vmem:[%s1075 + $0xa0] sm:$0xff]
      %v1097 = vld [vmem:[%s1075 + $0xa8] sm:$0xff]
      %v1098 = vld [vmem:[%s1075 + $0xb0] sm:$0xff]
      %v1099 = vld [vmem:[%s1075 + $0xb8] sm:$0xff]
      %v1100 = vld [vmem:[%s1075 + $0xc0] sm:$0xff]
      %v1101 = vld [vmem:[%s1075 + $0xc8] sm:$0xff]
      %v1102 = vld [vmem:[%s1075 + $0xd0] sm:$0xff]
      %v1103 = vld [vmem:[%s1075 + $0xd8] sm:$0xff]
      %v1104 = vld [vmem:[%s1075 + $0xe0] sm:$0xff]
      %v1105 = vld [vmem:[%s1075 + $0xe8] sm:$0xff]
      %v1106 = vld [vmem:[%s1075 + $0xf0] sm:$0xff]
      %v1107 = vld [vmem:[%s1075 + $0xf8] sm:$0xff]
      %1108 = vmatprep.subr.mxu0 %v1077
      %1109 = vmatpush1.msra.mxu0 %v1076
      %1110 = vmatprep.subr.mxu0 %v1079
      %1111 = vmatpush1.msra.mxu0 %v1078
      %1112 = vmatprep.subr.mxu0 %v1081
      %1113 = vmatpush1.msra.mxu0 %v1080
      %1114 = vmatprep.subr.mxu0 %v1083
      %1115 = vmatpush1.msra.mxu0 %v1082
      %1116 = vmatprep.subr.mxu0 %v1085
      %1117 = vmatpush1.msra.mxu0 %v1084
      %1118 = vmatprep.subr.mxu0 %v1087
      %1119 = vmatpush1.msra.mxu0 %v1086
      %1120 = vmatprep.subr.mxu0 %v1089
      %1121 = vmatpush1.msra.mxu0 %v1088
      %1122 = vmatprep.subr.mxu0 %v1091
      %1123 = vmatpush1.msra.mxu0 %v1090
      %1124 = vmatprep.subr.mxu0 %v1093
      %1125 = vmatpush1.msra.mxu0 %v1092
      %1126 = vmatprep.subr.mxu0 %v1095
      %1127 = vmatpush1.msra.mxu0 %v1094
      %1128 = vmatprep.subr.mxu0 %v1097
      %1129 = vmatpush1.msra.mxu0 %v1096
      %1130 = vmatprep.subr.mxu0 %v1099
      %1131 = vmatpush1.msra.mxu0 %v1098
      %1132 = vmatprep.subr.mxu0 %v1101
      %1133 = vmatpush1.msra.mxu0 %v1100
      %1134 = vmatprep.subr.mxu0 %v1103
      %1135 = vmatpush1.msra.mxu0 %v1102
      %1136 = vmatprep.subr.mxu0 %v1105
      %1137 = vmatpush1.msra.mxu0 %v1104
      %1138 = vmatprep.subr.mxu0 %v1107
      %1139 = vmatpush1.msra.mxu0 %v1106
      %1140 = vmatprep.subr.mxu0 0.0
      %1141 = vmatpush1.msra.mxu0 0.0
      %1142 = vmatprep.subr.mxu0 0.0
      %1143 = vmatpush1.msra.mxu0 0.0
      %1144 = vmatprep.subr.mxu0 0.0
      %1145 = vmatpush1.msra.mxu0 0.0
      %1146 = vmatprep.subr.mxu0 0.0
      %1147 = vmatpush1.msra.mxu0 0.0
      %1148 = vmatprep.subr.mxu0 0.0
      %1149 = vmatpush1.msra.mxu0 0.0
      %1150 = vmatprep.subr.mxu0 0.0
      %1151 = vmatpush1.msra.mxu0 0.0
      %1152 = vmatprep.subr.mxu0 0.0
      %1153 = vmatpush1.msra.mxu0 0.0
      %1154 = vmatprep.subr.mxu0 0.0
      %1155 = vmatpush1.msra.mxu0 0.0
      %1156 = vmatprep.subr.mxu0 0.0
      %1157 = vmatpush1.msra.mxu0 0.0
      %1158 = vmatprep.subr.mxu0 0.0
      %1159 = vmatpush1.msra.mxu0 0.0
      %1160 = vmatprep.subr.mxu0 0.0
      %1161 = vmatpush1.msra.mxu0 0.0
      %1162 = vmatprep.subr.mxu0 0.0
      %1163 = vmatpush1.msra.mxu0 0.0
      %1164 = vmatprep.subr.mxu0 0.0
      %1165 = vmatpush1.msra.mxu0 0.0
      %1166 = vmatprep.subr.mxu0 0.0
      %1167 = vmatpush1.msra.mxu0 0.0
      %1168 = vmatprep.subr.mxu0 0.0
      %1169 = vmatpush1.msra.mxu0 0.0
      %1170 = vmatprep.subr.mxu0 0.0
      %1171 = vmatpush1.msra.mxu0 0.0
      %1172 = vmatprep.mubr.f32.mxu0 0.0
      %1173 = vmatmul.mubr.f32.gmra.mrb[0].mxu0 %v1031
      %v1174 = vpop.f32.mrb[0].mxu0
      %v1175 = vadd.f32 0.0, %v1174
      %v1176 = vpop.f32.mrb[0].mxu0
      %v1177 = vadd.f32 0.0, %v1176
      %1178 = vmatprep.mubr.f32.mxu0 0.0
      %1179 = vmatmul.mubr.f32.gmra.mrb[0].mxu0 %v1032
      %v1180 = vpop.f32.mrb[0].mxu0
      %v1181 = vadd.f32 0.0, %v1180
      %v1182 = vpop.f32.mrb[0].mxu0
      %v1183 = vadd.f32 0.0, %v1182
      %1184 = vdwg.mxu0
      %s1185 = scalar_lea.vmem %s4, 1
      %v1186 = vld [vmem:[%s1185] sm:$0x1]
      %v1188 = vlaneseq
      %v1189 = vshrl.u32 %v1188, 7
      %v1190 = vsub.s32 0, %v1189
      %v1191 = vrot.slane %v1186, %v1190
      %v1193 = vadd.f32 %v1175, %v1191
      %v1194 = vadd.f32 %v1181, %v1191
      %v1195 = vmax.f32 %v1193, 0.0
      %v1196 = vmax.f32 %v1194, 0.0
      %v1197 = vmul.f32 %v1195, %v1029
      %v1198 = vmul.f32 %v1196, %v1030
      %v1199 = vlaneseq
      %v1200 = vshrl.u32 %v1199, 7
      %v1201 = vsub.s32 0, %v1200
      %v1202 = vrot.slane %v1197, %v1201
      %v1203 = vmul.f32 %v612, %v1202
      %v1204 = vmul.f32 %v617, %v1202
      %v1205 = vlaneseq
      %v1206 = vshrl.u32 %v1205, 7
      %v1207 = vsub.s32 1, %v1206
      %v1208 = vrot.slane %v1197, %v1207
      %v1209 = vmul.f32 %v627, %v1208
      %v1210 = vmul.f32 %v631, %v1208
      %v1211 = vmax.f32 %v1203, %v1209
      %v1212 = vmax.f32 %v1204, %v1210
      %v1213 = vlaneseq
      %v1214 = vshrl.u32 %v1213, 7
      %v1215 = vsub.s32 2, %v1214
      %v1216 = vrot.slane %v1197, %v1215
      %v1217 = vmul.f32 %v643, %v1216
      %v1218 = vmul.f32 %v647, %v1216
      %v1219 = vmax.f32 %v1211, %v1217
      %v1220 = vmax.f32 %v1212, %v1218
      %v1221 = vlaneseq
      %v1222 = vshrl.u32 %v1221, 7
      %v1223 = vsub.s32 3, %v1222
      %v1224 = vrot.slane %v1197, %v1223
      %v1225 = vmul.f32 %v659, %v1224
      %v1226 = vmul.f32 %v663, %v1224
      %v1227 = vmax.f32 %v1219, %v1225
      %v1228 = vmax.f32 %v1220, %v1226
      %v1229 = vlaneseq
      %v1230 = vshrl.u32 %v1229, 7
      %v1231 = vsub.s32 4, %v1230
      %v1232 = vrot.slane %v1197, %v1231
      %v1233 = vmul.f32 %v675, %v1232
      %v1234 = vmul.f32 %v679, %v1232
      %v1235 = vmax.f32 %v1227, %v1233
      %v1236 = vmax.f32 %v1228, %v1234
      %v1237 = vlaneseq
      %v1238 = vshrl.u32 %v1237, 7
      %v1239 = vsub.s32 5, %v1238
      %v1240 = vrot.slane %v1197, %v1239
      %v1241 = vmul.f32 %v691, %v1240
      %v1242 = vmul.f32 %v695, %v1240
      %v1243 = vmax.f32 %v1235, %v1241
      %v1244 = vmax.f32 %v1236, %v1242
      %v1245 = vlaneseq
      %v1246 = vshrl.u32 %v1245, 7
      %v1247 = vsub.s32 6, %v1246
      %v1248 = vrot.slane %v1197, %v1247
      %v1249 = vmul.f32 %v707, %v1248
      %v1250 = vmul.f32 %v711, %v1248
      %v1251 = vmax.f32 %v1243, %v1249
      %v1252 = vmax.f32 %v1244, %v1250
      %v1253 = vlaneseq
      %v1254 = vshrl.u32 %v1253, 7
      %v1255 = vsub.s32 7, %v1254
      %v1256 = vrot.slane %v1197, %v1255
      %v1257 = vmul.f32 %v723, %v1256
      %v1258 = vmul.f32 %v727, %v1256
      %v1259 = vmax.f32 %v1251, %v1257
      %v1260 = vmax.f32 %v1252, %v1258
      %v1261 = vlaneseq
      %v1262 = vshrl.u32 %v1261, 7
      %v1263 = vsub.s32 0, %v1262
      %v1264 = vrot.slane %v1198, %v1263
      %v1265 = vmul.f32 %v739, %v1264
      %v1266 = vmul.f32 %v743, %v1264
      %v1267 = vmax.f32 %v1259, %v1265
      %v1268 = vmax.f32 %v1260, %v1266
      %v1269 = vlaneseq
      %v1270 = vshrl.u32 %v1269, 7
      %v1271 = vsub.s32 1, %v1270
      %v1272 = vrot.slane %v1198, %v1271
      %v1273 = vmul.f32 %v755, %v1272
      %v1274 = vmul.f32 %v759, %v1272
      %v1275 = vmax.f32 %v1267, %v1273
      %v1276 = vmax.f32 %v1268, %v1274
      %v1277 = vlaneseq
      %v1278 = vshrl.u32 %v1277, 7
      %v1279 = vsub.s32 2, %v1278
      %v1280 = vrot.slane %v1198, %v1279
      %v1281 = vmul.f32 %v771, %v1280
      %v1282 = vmul.f32 %v775, %v1280
      %v1283 = vmax.f32 %v1275, %v1281
      %v1284 = vmax.f32 %v1276, %v1282
      %v1285 = vlaneseq
      %v1286 = vshrl.u32 %v1285, 7
      %v1287 = vsub.s32 3, %v1286
      %v1288 = vrot.slane %v1198, %v1287
      %v1289 = vmul.f32 %v787, %v1288
      %v1290 = vmul.f32 %v791, %v1288
      %v1291 = vmax.f32 %v1283, %v1289
      %v1292 = vmax.f32 %v1284, %v1290
      %v1293 = vlaneseq
      %v1294 = vshrl.u32 %v1293, 7
      %v1295 = vsub.s32 4, %v1294
      %v1296 = vrot.slane %v1198, %v1295
      %v1297 = vmul.f32 %v803, %v1296
      %v1298 = vmul.f32 %v807, %v1296
      %v1299 = vmax.f32 %v1291, %v1297
      %v1300 = vmax.f32 %v1292, %v1298
      %v1301 = vlaneseq
      %v1302 = vshrl.u32 %v1301, 7
      %v1303 = vsub.s32 5, %v1302
      %v1304 = vrot.slane %v1198, %v1303
      %v1305 = vmul.f32 %v819, %v1304
      %v1306 = vmul.f32 %v823, %v1304
      %v1307 = vmax.f32 %v1299, %v1305
      %v1308 = vmax.f32 %v1300, %v1306
      %v1309 = vlaneseq
      %v1310 = vshrl.u32 %v1309, 7
      %v1311 = vsub.s32 6, %v1310
      %v1312 = vrot.slane %v1198, %v1311
      %v1313 = vmul.f32 %v835, %v1312
      %v1314 = vmul.f32 %v839, %v1312
      %v1315 = vmax.f32 %v1307, %v1313
      %v1316 = vmax.f32 %v1308, %v1314
      %v1317 = vlaneseq
      %v1318 = vshrl.u32 %v1317, 7
      %v1319 = vsub.s32 7, %v1318
      %v1320 = vrot.slane %v1198, %v1319
      %v1321 = vmul.f32 %v851, %v1320
      %v1322 = vmul.f32 %v855, %v1320
      %v1323 = vmax.f32 %v1315, %v1321
      %v1324 = vmax.f32 %v1316, %v1322
      %s1325 = scalar_lea.vmem %s5, 128
      %v1326 = vld [vmem:[%s1325] sm:$0xff]
      %v1327 = vld [vmem:[%s1325 + $0x8] sm:$0xff]
      %v1328 = vld [vmem:[%s1325 + $0x10] sm:$0xff]
      %v1329 = vld [vmem:[%s1325 + $0x18] sm:$0xff]
      %v1330 = vld [vmem:[%s1325 + $0x20] sm:$0xff]
      %v1331 = vld [vmem:[%s1325 + $0x28] sm:$0xff]
      %v1332 = vld [vmem:[%s1325 + $0x30] sm:$0xff]
      %v1333 = vld [vmem:[%s1325 + $0x38] sm:$0xff]
      %v1334 = vld [vmem:[%s1325 + $0x40] sm:$0xff]
      %v1335 = vld [vmem:[%s1325 + $0x48] sm:$0xff]
      %v1336 = vld [vmem:[%s1325 + $0x50] sm:$0xff]
      %v1337 = vld [vmem:[%s1325 + $0x58] sm:$0xff]
      %v1338 = vld [vmem:[%s1325 + $0x60] sm:$0xff]
      %v1339 = vld [vmem:[%s1325 + $0x68] sm:$0xff]
      %v1340 = vld [vmem:[%s1325 + $0x70] sm:$0xff]
      %v1341 = vld [vmem:[%s1325 + $0x78] sm:$0xff]
      %1342 = vmatprep.subr.mxu0 0.0
      %1343 = vmatpush1.msra.mxu0 %v1326
      %1344 = vmatprep.subr.mxu0 0.0
      %1345 = vmatpush1.msra.mxu0 %v1327
      %1346 = vmatprep.subr.mxu0 0.0
      %1347 = vmatpush1.msra.mxu0 %v1328
      %1348 = vmatprep.subr.mxu0 0.0
      %1349 = vmatpush1.msra.mxu0 %v1329
      %1350 = vmatprep.subr.mxu0 0.0
      %1351 = vmatpush1.msra.mxu0 %v1330
      %1352 = vmatprep.subr.mxu0 0.0
      %1353 = vmatpush1.msra.mxu0 %v1331
      %1354 = vmatprep.subr.mxu0 0.0
      %1355 = vmatpush1.msra.mxu0 %v1332
      %1356 = vmatprep.subr.mxu0 0.0
      %1357 = vmatpush1.msra.mxu0 %v1333
      %1358 = vmatprep.subr.mxu0 0.0
      %1359 = vmatpush1.msra.mxu0 %v1334
      %1360 = vmatprep.subr.mxu0 0.0
      %1361 = vmatpush1.msra.mxu0 %v1335
      %1362 = vmatprep.subr.mxu0 0.0
      %1363 = vmatpush1.msra.mxu0 %v1336
      %1364 = vmatprep.subr.mxu0 0.0
      %1365 = vmatpush1.msra.mxu0 %v1337
      %1366 = vmatprep.subr.mxu0 0.0
      %1367 = vmatpush1.msra.mxu0 %v1338
      %1368 = vmatprep.subr.mxu0 0.0
      %1369 = vmatpush1.msra.mxu0 %v1339
      %1370 = vmatprep.subr.mxu0 0.0
      %1371 = vmatpush1.msra.mxu0 %v1340
      %1372 = vmatprep.subr.mxu0 0.0
      %1373 = vmatpush1.msra.mxu0 %v1341
      %1374 = vmatprep.subr.mxu0 0.0
      %1375 = vmatpush1.msra.mxu0 0.0
      %1376 = vmatprep.subr.mxu0 0.0
      %1377 = vmatpush1.msra.mxu0 0.0
      %1378 = vmatprep.subr.mxu0 0.0
      %1379 = vmatpush1.msra.mxu0 0.0
      %1380 = vmatprep.subr.mxu0 0.0
      %1381 = vmatpush1.msra.mxu0 0.0
      %1382 = vmatprep.subr.mxu0 0.0
      %1383 = vmatpush1.msra.mxu0 0.0
      %1384 = vmatprep.subr.mxu0 0.0
      %1385 = vmatpush1.msra.mxu0 0.0
      %1386 = vmatprep.subr.mxu0 0.0
      %1387 = vmatpush1.msra.mxu0 0.0
      %1388 = vmatprep.subr.mxu0 0.0
      %1389 = vmatpush1.msra.mxu0 0.0
      %1390 = vmatprep.subr.mxu0 0.0
      %1391 = vmatpush1.msra.mxu0 0.0
      %1392 = vmatprep.subr.mxu0 0.0
      %1393 = vmatpush1.msra.mxu0 0.0
      %1394 = vmatprep.subr.mxu0 0.0
      %1395 = vmatpush1.msra.mxu0 0.0
      %1396 = vmatprep.subr.mxu0 0.0
      %1397 = vmatpush1.msra.mxu0 0.0
      %1398 = vmatprep.subr.mxu0 0.0
      %1399 = vmatpush1.msra.mxu0 0.0
      %1400 = vmatprep.subr.mxu0 0.0
      %1401 = vmatpush1.msra.mxu0 0.0
      %1402 = vmatprep.subr.mxu0 0.0
      %1403 = vmatpush1.msra.mxu0 0.0
      %1404 = vmatprep.subr.mxu0 0.0
      %1405 = vmatpush1.msra.mxu0 0.0
      %1406 = vmatprep.mubr.f32.mxu0 0.0
      %1407 = vmatmul.mubr.f32.gmra.mrb[0].mxu0 %v1323
      %v1408 = vpop.f32.mrb[0].mxu0
      %v1409 = vadd.f32 %v1177, %v1408
      %v1410 = vpop.f32.mrb[0].mxu0
      %1411 = vmatprep.mubr.f32.mxu0 0.0
      %1412 = vmatmul.mubr.f32.gmra.mrb[0].mxu0 %v1324
      %v1413 = vpop.f32.mrb[0].mxu0
      %v1414 = vadd.f32 %v1183, %v1413
      %v1415 = vpop.f32.mrb[0].mxu0
      %1416 = vdwg.mxu0
      %v1417 = vmax.f32 %v1409, 0.0
      %v1418 = vmax.f32 %v1414, 0.0
      %s1419 = scalar_lea.vmem %s6, 1
      %v1420 = vld [vmem:[%s1419] sm:$0x1]
      %v1422 = vlaneseq
      %v1423 = vshrl.u32 %v1422, 7
      %v1424 = vsub.s32 0, %v1423
      %v1425 = vrot.slane %v1420, %v1424
      %v1427 = vmul.f32 %v1417, %v1425
      %v1428 = vmul.f32 %v1418, %v1425
      %1429 = vadd.xlane.f32.xlu0 %v1427
      %v1430 = vpop.xlane.xlu0 %1429
      %1431 = vadd.xlane.f32.xlu0 %v1428
      %v1432 = vpop.xlane.xlu0 %1431
      %v1433 = vtanh.pop %v1430
      %v1434 = vtanh.pop %v1432
      %v1435 = vsel %vm1033, %v1433, -1e+30
      %v1436 = vsel %vm1034, %v1434, -1e+30
      %v1437 = vsel %vm475, %v1435, -1e+30
      %v1438 = vsel %vm476, %v1436, -1e+30
      %v1439 = vsel %vm979, %v1437, -inf
      %v1440 = vsel %vm979, %v1438, -inf
      %v1441 = vmax.f32 %v1439, %v1440
      %v1442 = vrot.slane %v1441, 4
      %v1443 = vmax.f32 %v1441, %v1442
      %v1444 = vrot.slane %v1443, 2
      %v1445 = vmax.f32 %v1443, %v1444
      %v1446 = vrot.slane %v1445, 1
      %v1447 = vmax.f32 %v1445, %v1446
      %vm1448 = vcmp.gt.f32.partialorder %v1447, %v1435
      %vm1449 = vcmp.gt.f32.partialorder %v1447, %v1436
      %vm1450 = vcmp.eq.f32.partialorder %v1447, %v1435
      %vm1451 = vcmp.eq.f32.partialorder %v1447, %v1436
      %vm1452 = vmand %vm1450, %vm993
      %vm1453 = vmand %vm1451, %vm994
      %vm1454 = vmor %vm1448, %vm1452
      %vm1455 = vmor %vm1449, %vm1453
      %v1456 = vsel %vm1454, 1, 0
      %v1457 = vsel %vm1455, 1, 0
      %v1458 = vcvt.s32.f32 %v1456
      %v1459 = vcvt.s32.f32 %v1457
      %v1460 = vsel %vm979, %v1458, 0.0
      %1461 = vadd.xlane.f32.xlu0 %v1460
      %v1462 = vpop.xlane.xlu0 %1461
      %v1463 = vsel %vm979, %v1459, 0.0
      %1464 = vadd.xlane.f32.xlu0 %v1463
      %v1465 = vpop.xlane.xlu0 %1464
      %s1466 = smul.f32 %s1060, 0.8
      %s1467 = sceil.f32 %s1466
      %v1468 = vstv %s1467
      %vm1469 = vcmp.lt.f32.partialorder %v1462, %v1468
      %vm1470 = vcmp.lt.f32.partialorder %v1465, %v1468
      %vm1471 = vmand %vm1033, %vm1469
      %vm1472 = vmand %vm1034, %vm1470
      %v1473 = vsel %vm1471, 1.0, 0.0
      %v1474 = vsel %vm1472, 1.0, 0.0
      %v1475 = vmul.f32 %v1417, %v1433
      %v1476 = vmul.f32 %v1418, %v1434
      %vm1477 = vcmp.gt.f32.partialorder %v1473, 0.0
      %vm1478 = vcmp.gt.f32.partialorder %v1474, 0.0
      %v1479 = vsel %vm1477, 1, 0
      %v1480 = vsel %vm1478, 1, 0
      %vm1481 = vcmp.eq.s32.totalorder %v1479, 1
      %vm1482 = vcmp.eq.s32.totalorder %v1480, 1
      %v1483 = vsel %vm1481, %v1475, -1e+30
      %v1484 = vsel %vm1482, %v1476, -1e+30
      %v1485 = vmax.f32 %v1483, %v1484
      %v1486 = vrot.slane %v1485, 4
      %v1487 = vmax.f32 %v1485, %v1486
      %v1488 = vrot.slane %v1487, 2
      %v1489 = vmax.f32 %v1487, %v1488
      %v1490 = vrot.slane %v1489, 1
      %v1491 = vmax.f32 %v1489, %v1490
      %v1492 = vadd.f32 %v1048, %v1491
      %v1493 = vsel %vm1009, %v1473, 0.0
      %v1494 = vsel %vm1009, %v1474, 0.0
      %v1495 = vadd.f32 %v1493, %v1494
      %1496 = vadd.xlane.f32.xlu0 %v1495
      %v1497 = vpop.xlane.xlu0 %1496
      %v1498 = vrot.slane %v1497, 4
      %v1499 = vadd.f32 %v1497, %v1498
      %v1500 = vrot.slane %v1499, 2
      %v1501 = vadd.f32 %v1499, %v1500
      %v1502 = vrot.slane %v1501, 1
      %v1503 = vadd.f32 %v1501, %v1502
      %s1504 = vtos %v1503
      %s1505 = smax.f32 %s1504, 1.0
      %v1506 = vmul.f32 %v1475, %v1473
      %v1507 = vmul.f32 %v1476, %v1474
      %v1508 = vadd.f32 %v1506, %v1507
      %v1509 = vrot.slane %v1508, 4
      %v1510 = vadd.f32 %v1508, %v1509
      %v1511 = vrot.slane %v1510, 2
      %v1512 = vadd.f32 %v1510, %v1511
      %v1513 = vrot.slane %v1512, 1
      %v1514 = vadd.f32 %v1512, %v1513
      %v1515 = vstv %s1505
      %v1516 = vrcp.pop %v1515
      %v1517 = vmul.f32 %v1514, %v1516
      %v1518 = vadd.f32 %v1074, %v1517
      %s1519 = scalar_lea.vmem %s3, 512
      %v1520 = vld [vmem:[%s1519] sm:$0xff]
      %v1521 = vld [vmem:[%s1519 + $0x8] sm:$0xff]
      %v1522 = vld [vmem:[%s1519 + $0x10] sm:$0xff]
      %v1523 = vld [vmem:[%s1519 + $0x18] sm:$0xff]
      %v1524 = vld [vmem:[%s1519 + $0x20] sm:$0xff]
      %v1525 = vld [vmem:[%s1519 + $0x28] sm:$0xff]
      %v1526 = vld [vmem:[%s1519 + $0x30] sm:$0xff]
      %v1527 = vld [vmem:[%s1519 + $0x38] sm:$0xff]
      %v1528 = vld [vmem:[%s1519 + $0x40] sm:$0xff]
      %v1529 = vld [vmem:[%s1519 + $0x48] sm:$0xff]
      %v1530 = vld [vmem:[%s1519 + $0x50] sm:$0xff]
      %v1531 = vld [vmem:[%s1519 + $0x58] sm:$0xff]
      %v1532 = vld [vmem:[%s1519 + $0x60] sm:$0xff]
      %v1533 = vld [vmem:[%s1519 + $0x68] sm:$0xff]
      %v1534 = vld [vmem:[%s1519 + $0x70] sm:$0xff]
      %v1535 = vld [vmem:[%s1519 + $0x78] sm:$0xff]
      %v1536 = vld [vmem:[%s1519 + $0x80] sm:$0xff]
      %v1537 = vld [vmem:[%s1519 + $0x88] sm:$0xff]
      %v1538 = vld [vmem:[%s1519 + $0x90] sm:$0xff]
      %v1539 = vld [vmem:[%s1519 + $0x98] sm:$0xff]
      %v1540 = vld [vmem:[%s1519 + $0xa0] sm:$0xff]
      %v1541 = vld [vmem:[%s1519 + $0xa8] sm:$0xff]
      %v1542 = vld [vmem:[%s1519 + $0xb0] sm:$0xff]
      %v1543 = vld [vmem:[%s1519 + $0xb8] sm:$0xff]
      %v1544 = vld [vmem:[%s1519 + $0xc0] sm:$0xff]
      %v1545 = vld [vmem:[%s1519 + $0xc8] sm:$0xff]
      %v1546 = vld [vmem:[%s1519 + $0xd0] sm:$0xff]
      %v1547 = vld [vmem:[%s1519 + $0xd8] sm:$0xff]
      %v1548 = vld [vmem:[%s1519 + $0xe0] sm:$0xff]
      %v1549 = vld [vmem:[%s1519 + $0xe8] sm:$0xff]
      %v1550 = vld [vmem:[%s1519 + $0xf0] sm:$0xff]
      %v1551 = vld [vmem:[%s1519 + $0xf8] sm:$0xff]
      %1552 = vmatprep.subr.mxu0 %v1521
      %1553 = vmatpush1.msra.mxu0 %v1520
      %1554 = vmatprep.subr.mxu0 %v1523
      %1555 = vmatpush1.msra.mxu0 %v1522
      %1556 = vmatprep.subr.mxu0 %v1525
      %1557 = vmatpush1.msra.mxu0 %v1524
      %1558 = vmatprep.subr.mxu0 %v1527
      %1559 = vmatpush1.msra.mxu0 %v1526
      %1560 = vmatprep.subr.mxu0 %v1529
      %1561 = vmatpush1.msra.mxu0 %v1528
      %1562 = vmatprep.subr.mxu0 %v1531
      %1563 = vmatpush1.msra.mxu0 %v1530
      %1564 = vmatprep.subr.mxu0 %v1533
      %1565 = vmatpush1.msra.mxu0 %v1532
      %1566 = vmatprep.subr.mxu0 %v1535
      %1567 = vmatpush1.msra.mxu0 %v1534
      %1568 = vmatprep.subr.mxu0 %v1537
      %1569 = vmatpush1.msra.mxu0 %v1536
      %1570 = vmatprep.subr.mxu0 %v1539
      %1571 = vmatpush1.msra.mxu0 %v1538
      %1572 = vmatprep.subr.mxu0 %v1541
      %1573 = vmatpush1.msra.mxu0 %v1540
      %1574 = vmatprep.subr.mxu0 %v1543
      %1575 = vmatpush1.msra.mxu0 %v1542
      %1576 = vmatprep.subr.mxu0 %v1545
      %1577 = vmatpush1.msra.mxu0 %v1544
      %1578 = vmatprep.subr.mxu0 %v1547
      %1579 = vmatpush1.msra.mxu0 %v1546
      %1580 = vmatprep.subr.mxu0 %v1549
      %1581 = vmatpush1.msra.mxu0 %v1548
      %1582 = vmatprep.subr.mxu0 %v1551
      %1583 = vmatpush1.msra.mxu0 %v1550
      %1584 = vmatprep.subr.mxu0 0.0
      %1585 = vmatpush1.msra.mxu0 0.0
      %1586 = vmatprep.subr.mxu0 0.0
      %1587 = vmatpush1.msra.mxu0 0.0
      %1588 = vmatprep.subr.mxu0 0.0
      %1589 = vmatpush1.msra.mxu0 0.0
      %1590 = vmatprep.subr.mxu0 0.0
      %1591 = vmatpush1.msra.mxu0 0.0
      %1592 = vmatprep.subr.mxu0 0.0
      %1593 = vmatpush1.msra.mxu0 0.0
      %1594 = vmatprep.subr.mxu0 0.0
      %1595 = vmatpush1.msra.mxu0 0.0
      %1596 = vmatprep.subr.mxu0 0.0
      %1597 = vmatpush1.msra.mxu0 0.0
      %1598 = vmatprep.subr.mxu0 0.0
      %1599 = vmatpush1.msra.mxu0 0.0
      %1600 = vmatprep.subr.mxu0 0.0
      %1601 = vmatpush1.msra.mxu0 0.0
      %1602 = vmatprep.subr.mxu0 0.0
      %1603 = vmatpush1.msra.mxu0 0.0
      %1604 = vmatprep.subr.mxu0 0.0
      %1605 = vmatpush1.msra.mxu0 0.0
      %1606 = vmatprep.subr.mxu0 0.0
      %1607 = vmatpush1.msra.mxu0 0.0
      %1608 = vmatprep.subr.mxu0 0.0
      %1609 = vmatpush1.msra.mxu0 0.0
      %1610 = vmatprep.subr.mxu0 0.0
      %1611 = vmatpush1.msra.mxu0 0.0
      %1612 = vmatprep.subr.mxu0 0.0
      %1613 = vmatpush1.msra.mxu0 0.0
      %1614 = vmatprep.subr.mxu0 0.0
      %1615 = vmatpush1.msra.mxu0 0.0
      %1616 = vmatprep.mubr.f32.mxu0 0.0
      %1617 = vmatmul.mubr.f32.gmra.mrb[0].mxu0 %v1475
      %v1618 = vpop.f32.mrb[0].mxu0
      %v1619 = vadd.f32 0.0, %v1618
      %v1620 = vpop.f32.mrb[0].mxu0
      %v1621 = vadd.f32 0.0, %v1620
      %1622 = vmatprep.mubr.f32.mxu0 0.0
      %1623 = vmatmul.mubr.f32.gmra.mrb[0].mxu0 %v1476
      %v1624 = vpop.f32.mrb[0].mxu0
      %v1625 = vadd.f32 0.0, %v1624
      %v1626 = vpop.f32.mrb[0].mxu0
      %v1627 = vadd.f32 0.0, %v1626
      %1628 = vdwg.mxu0
      %s1629 = scalar_lea.vmem %s4, 2
      %v1630 = vld [vmem:[%s1629] sm:$0x1]
      %v1632 = vlaneseq
      %v1633 = vshrl.u32 %v1632, 7
      %v1634 = vsub.s32 0, %v1633
      %v1635 = vrot.slane %v1630, %v1634
      %v1637 = vadd.f32 %v1619, %v1635
      %v1638 = vadd.f32 %v1625, %v1635
      %v1639 = vmax.f32 %v1637, 0.0
      %v1640 = vmax.f32 %v1638, 0.0
      %v1641 = vmul.f32 %v1639, %v1473
      %v1642 = vmul.f32 %v1640, %v1474
      %v1643 = vlaneseq
      %v1644 = vshrl.u32 %v1643, 7
      %v1645 = vsub.s32 0, %v1644
      %v1646 = vrot.slane %v1641, %v1645
      %v1647 = vmul.f32 %v612, %v1646
      %v1648 = vmul.f32 %v617, %v1646
      %v1649 = vlaneseq
      %v1650 = vshrl.u32 %v1649, 7
      %v1651 = vsub.s32 1, %v1650
      %v1652 = vrot.slane %v1641, %v1651
      %v1653 = vmul.f32 %v627, %v1652
      %v1654 = vmul.f32 %v631, %v1652
      %v1655 = vmax.f32 %v1647, %v1653
      %v1656 = vmax.f32 %v1648, %v1654
      %v1657 = vlaneseq
      %v1658 = vshrl.u32 %v1657, 7
      %v1659 = vsub.s32 2, %v1658
      %v1660 = vrot.slane %v1641, %v1659
      %v1661 = vmul.f32 %v643, %v1660
      %v1662 = vmul.f32 %v647, %v1660
      %v1663 = vmax.f32 %v1655, %v1661
      %v1664 = vmax.f32 %v1656, %v1662
      %v1665 = vlaneseq
      %v1666 = vshrl.u32 %v1665, 7
      %v1667 = vsub.s32 3, %v1666
      %v1668 = vrot.slane %v1641, %v1667
      %v1669 = vmul.f32 %v659, %v1668
      %v1670 = vmul.f32 %v663, %v1668
      %v1671 = vmax.f32 %v1663, %v1669
      %v1672 = vmax.f32 %v1664, %v1670
      %v1673 = vlaneseq
      %v1674 = vshrl.u32 %v1673, 7
      %v1675 = vsub.s32 4, %v1674
      %v1676 = vrot.slane %v1641, %v1675
      %v1677 = vmul.f32 %v675, %v1676
      %v1678 = vmul.f32 %v679, %v1676
      %v1679 = vmax.f32 %v1671, %v1677
      %v1680 = vmax.f32 %v1672, %v1678
      %v1681 = vlaneseq
      %v1682 = vshrl.u32 %v1681, 7
      %v1683 = vsub.s32 5, %v1682
      %v1684 = vrot.slane %v1641, %v1683
      %v1685 = vmul.f32 %v691, %v1684
      %v1686 = vmul.f32 %v695, %v1684
      %v1687 = vmax.f32 %v1679, %v1685
      %v1688 = vmax.f32 %v1680, %v1686
      %v1689 = vlaneseq
      %v1690 = vshrl.u32 %v1689, 7
      %v1691 = vsub.s32 6, %v1690
      %v1692 = vrot.slane %v1641, %v1691
      %v1693 = vmul.f32 %v707, %v1692
      %v1694 = vmul.f32 %v711, %v1692
      %v1695 = vmax.f32 %v1687, %v1693
      %v1696 = vmax.f32 %v1688, %v1694
      %v1697 = vlaneseq
      %v1698 = vshrl.u32 %v1697, 7
      %v1699 = vsub.s32 7, %v1698
      %v1700 = vrot.slane %v1641, %v1699
      %v1701 = vmul.f32 %v723, %v1700
      %v1702 = vmul.f32 %v727, %v1700
      %v1703 = vmax.f32 %v1695, %v1701
      %v1704 = vmax.f32 %v1696, %v1702
      %v1705 = vlaneseq
      %v1706 = vshrl.u32 %v1705, 7
      %v1707 = vsub.s32 0, %v1706
      %v1708 = vrot.slane %v1642, %v1707
      %v1709 = vmul.f32 %v739, %v1708
      %v1710 = vmul.f32 %v743, %v1708
      %v1711 = vmax.f32 %v1703, %v1709
      %v1712 = vmax.f32 %v1704, %v1710
      %v1713 = vlaneseq
      %v1714 = vshrl.u32 %v1713, 7
      %v1715 = vsub.s32 1, %v1714
      %v1716 = vrot.slane %v1642, %v1715
      %v1717 = vmul.f32 %v755, %v1716
      %v1718 = vmul.f32 %v759, %v1716
      %v1719 = vmax.f32 %v1711, %v1717
      %v1720 = vmax.f32 %v1712, %v1718
      %v1721 = vlaneseq
      %v1722 = vshrl.u32 %v1721, 7
      %v1723 = vsub.s32 2, %v1722
      %v1724 = vrot.slane %v1642, %v1723
      %v1725 = vmul.f32 %v771, %v1724
      %v1726 = vmul.f32 %v775, %v1724
      %v1727 = vmax.f32 %v1719, %v1725
      %v1728 = vmax.f32 %v1720, %v1726
      %v1729 = vlaneseq
      %v1730 = vshrl.u32 %v1729, 7
      %v1731 = vsub.s32 3, %v1730
      %v1732 = vrot.slane %v1642, %v1731
      %v1733 = vmul.f32 %v787, %v1732
      %v1734 = vmul.f32 %v791, %v1732
      %v1735 = vmax.f32 %v1727, %v1733
      %v1736 = vmax.f32 %v1728, %v1734
      %v1737 = vlaneseq
      %v1738 = vshrl.u32 %v1737, 7
      %v1739 = vsub.s32 4, %v1738
      %v1740 = vrot.slane %v1642, %v1739
      %v1741 = vmul.f32 %v803, %v1740
      %v1742 = vmul.f32 %v807, %v1740
      %v1743 = vmax.f32 %v1735, %v1741
      %v1744 = vmax.f32 %v1736, %v1742
      %v1745 = vlaneseq
      %v1746 = vshrl.u32 %v1745, 7
      %v1747 = vsub.s32 5, %v1746
      %v1748 = vrot.slane %v1642, %v1747
      %v1749 = vmul.f32 %v819, %v1748
      %v1750 = vmul.f32 %v823, %v1748
      %v1751 = vmax.f32 %v1743, %v1749
      %v1752 = vmax.f32 %v1744, %v1750
      %v1753 = vlaneseq
      %v1754 = vshrl.u32 %v1753, 7
      %v1755 = vsub.s32 6, %v1754
      %v1756 = vrot.slane %v1642, %v1755
      %v1757 = vmul.f32 %v835, %v1756
      %v1758 = vmul.f32 %v839, %v1756
      %v1759 = vmax.f32 %v1751, %v1757
      %v1760 = vmax.f32 %v1752, %v1758
      %v1761 = vlaneseq
      %v1762 = vshrl.u32 %v1761, 7
      %v1763 = vsub.s32 7, %v1762
      %v1764 = vrot.slane %v1642, %v1763
      %v1765 = vmul.f32 %v851, %v1764
      %v1766 = vmul.f32 %v855, %v1764
      %v1767 = vmax.f32 %v1759, %v1765
      %v1768 = vmax.f32 %v1760, %v1766
      %s1769 = scalar_lea.vmem %s5, 256
      %v1770 = vld [vmem:[%s1769] sm:$0xff]
      %v1771 = vld [vmem:[%s1769 + $0x8] sm:$0xff]
      %v1772 = vld [vmem:[%s1769 + $0x10] sm:$0xff]
      %v1773 = vld [vmem:[%s1769 + $0x18] sm:$0xff]
      %v1774 = vld [vmem:[%s1769 + $0x20] sm:$0xff]
      %v1775 = vld [vmem:[%s1769 + $0x28] sm:$0xff]
      %v1776 = vld [vmem:[%s1769 + $0x30] sm:$0xff]
      %v1777 = vld [vmem:[%s1769 + $0x38] sm:$0xff]
      %v1778 = vld [vmem:[%s1769 + $0x40] sm:$0xff]
      %v1779 = vld [vmem:[%s1769 + $0x48] sm:$0xff]
      %v1780 = vld [vmem:[%s1769 + $0x50] sm:$0xff]
      %v1781 = vld [vmem:[%s1769 + $0x58] sm:$0xff]
      %v1782 = vld [vmem:[%s1769 + $0x60] sm:$0xff]
      %v1783 = vld [vmem:[%s1769 + $0x68] sm:$0xff]
      %v1784 = vld [vmem:[%s1769 + $0x70] sm:$0xff]
      %v1785 = vld [vmem:[%s1769 + $0x78] sm:$0xff]
      %1786 = vmatprep.subr.mxu0 0.0
      %1787 = vmatpush1.msra.mxu0 %v1770
      %1788 = vmatprep.subr.mxu0 0.0
      %1789 = vmatpush1.msra.mxu0 %v1771
      %1790 = vmatprep.subr.mxu0 0.0
      %1791 = vmatpush1.msra.mxu0 %v1772
      %1792 = vmatprep.subr.mxu0 0.0
      %1793 = vmatpush1.msra.mxu0 %v1773
      %1794 = vmatprep.subr.mxu0 0.0
      %1795 = vmatpush1.msra.mxu0 %v1774
      %1796 = vmatprep.subr.mxu0 0.0
      %1797 = vmatpush1.msra.mxu0 %v1775
      %1798 = vmatprep.subr.mxu0 0.0
      %1799 = vmatpush1.msra.mxu0 %v1776
      %1800 = vmatprep.subr.mxu0 0.0
      %1801 = vmatpush1.msra.mxu0 %v1777
      %1802 = vmatprep.subr.mxu0 0.0
      %1803 = vmatpush1.msra.mxu0 %v1778
      %1804 = vmatprep.subr.mxu0 0.0
      %1805 = vmatpush1.msra.mxu0 %v1779
      %1806 = vmatprep.subr.mxu0 0.0
      %1807 = vmatpush1.msra.mxu0 %v1780
      %1808 = vmatprep.subr.mxu0 0.0
      %1809 = vmatpush1.msra.mxu0 %v1781
      %1810 = vmatprep.subr.mxu0 0.0
      %1811 = vmatpush1.msra.mxu0 %v1782
      %1812 = vmatprep.subr.mxu0 0.0
      %1813 = vmatpush1.msra.mxu0 %v1783
      %1814 = vmatprep.subr.mxu0 0.0
      %1815 = vmatpush1.msra.mxu0 %v1784
      %1816 = vmatprep.subr.mxu0 0.0
      %1817 = vmatpush1.msra.mxu0 %v1785
      %1818 = vmatprep.subr.mxu0 0.0
      %1819 = vmatpush1.msra.mxu0 0.0
      %1820 = vmatprep.subr.mxu0 0.0
      %1821 = vmatpush1.msra.mxu0 0.0
      %1822 = vmatprep.subr.mxu0 0.0
      %1823 = vmatpush1.msra.mxu0 0.0
      %1824 = vmatprep.subr.mxu0 0.0
      %1825 = vmatpush1.msra.mxu0 0.0
      %1826 = vmatprep.subr.mxu0 0.0
      %1827 = vmatpush1.msra.mxu0 0.0
      %1828 = vmatprep.subr.mxu0 0.0
      %1829 = vmatpush1.msra.mxu0 0.0
      %1830 = vmatprep.subr.mxu0 0.0
      %1831 = vmatpush1.msra.mxu0 0.0
      %1832 = vmatprep.subr.mxu0 0.0
      %1833 = vmatpush1.msra.mxu0 0.0
      %1834 = vmatprep.subr.mxu0 0.0
      %1835 = vmatpush1.msra.mxu0 0.0
      %1836 = vmatprep.subr.mxu0 0.0
      %1837 = vmatpush1.msra.mxu0 0.0
      %1838 = vmatprep.subr.mxu0 0.0
      %1839 = vmatpush1.msra.mxu0 0.0
      %1840 = vmatprep.subr.mxu0 0.0
      %1841 = vmatpush1.msra.mxu0 0.0
      %1842 = vmatprep.subr.mxu0 0.0
      %1843 = vmatpush1.msra.mxu0 0.0
      %1844 = vmatprep.subr.mxu0 0.0
      %1845 = vmatpush1.msra.mxu0 0.0
      %1846 = vmatprep.subr.mxu0 0.0
      %1847 = vmatpush1.msra.mxu0 0.0
      %1848 = vmatprep.subr.mxu0 0.0
      %1849 = vmatpush1.msra.mxu0 0.0
      %1850 = vmatprep.mubr.f32.mxu0 0.0
      %1851 = vmatmul.mubr.f32.gmra.mrb[0].mxu0 %v1767
      %v1852 = vpop.f32.mrb[0].mxu0
      %v1853 = vadd.f32 %v1621, %v1852
      %v1854 = vpop.f32.mrb[0].mxu0
      %1855 = vmatprep.mubr.f32.mxu0 0.0
      %1856 = vmatmul.mubr.f32.gmra.mrb[0].mxu0 %v1768
      %v1857 = vpop.f32.mrb[0].mxu0
      %v1858 = vadd.f32 %v1627, %v1857
      %v1859 = vpop.f32.mrb[0].mxu0
      %1860 = vdwg.mxu0
      %v1861 = vmax.f32 %v1853, 0.0
      %v1862 = vmax.f32 %v1858, 0.0
      %s1863 = scalar_lea.vmem %s6, 2
      %v1864 = vld [vmem:[%s1863] sm:$0x1]
      %v1866 = vlaneseq
      %v1867 = vshrl.u32 %v1866, 7
      %v1868 = vsub.s32 0, %v1867
      %v1869 = vrot.slane %v1864, %v1868
      %v1871 = vmul.f32 %v1861, %v1869
      %v1872 = vmul.f32 %v1862, %v1869
      %1873 = vadd.xlane.f32.xlu0 %v1871
      %v1874 = vpop.xlane.xlu0 %1873
      %1875 = vadd.xlane.f32.xlu0 %v1872
      %v1876 = vpop.xlane.xlu0 %1875
      %v1877 = vtanh.pop %v1874
      %v1878 = vtanh.pop %v1876
      %v1879 = vsel %vm1477, %v1877, -1e+30
      %v1880 = vsel %vm1478, %v1878, -1e+30
      %v1881 = vsel %vm475, %v1879, -1e+30
      %v1882 = vsel %vm476, %v1880, -1e+30
      %v1883 = vsel %vm979, %v1881, -inf
      %v1884 = vsel %vm979, %v1882, -inf
      %v1885 = vmax.f32 %v1883, %v1884
      %v1886 = vrot.slane %v1885, 4
      %v1887 = vmax.f32 %v1885, %v1886
      %v1888 = vrot.slane %v1887, 2
      %v1889 = vmax.f32 %v1887, %v1888
      %v1890 = vrot.slane %v1889, 1
      %v1891 = vmax.f32 %v1889, %v1890
      %vm1892 = vcmp.gt.f32.partialorder %v1891, %v1879
      %vm1893 = vcmp.gt.f32.partialorder %v1891, %v1880
      %vm1894 = vcmp.eq.f32.partialorder %v1891, %v1879
      %vm1895 = vcmp.eq.f32.partialorder %v1891, %v1880
      %vm1896 = vmand %vm1894, %vm993
      %vm1897 = vmand %vm1895, %vm994
      %vm1898 = vmor %vm1892, %vm1896
      %vm1899 = vmor %vm1893, %vm1897
      %v1900 = vsel %vm1898, 1, 0
      %v1901 = vsel %vm1899, 1, 0
      %v1902 = vcvt.s32.f32 %v1900
      %v1903 = vcvt.s32.f32 %v1901
      %v1904 = vsel %vm979, %v1902, 0.0
      %1905 = vadd.xlane.f32.xlu0 %v1904
      %v1906 = vpop.xlane.xlu0 %1905
      %v1907 = vsel %vm979, %v1903, 0.0
      %1908 = vadd.xlane.f32.xlu0 %v1907
      %v1909 = vpop.xlane.xlu0 %1908
      %s1910 = smul.f32 %s1504, 0.8
      %s1911 = sceil.f32 %s1910
      %v1912 = vstv %s1911
      %vm1913 = vcmp.lt.f32.partialorder %v1906, %v1912
      %vm1914 = vcmp.lt.f32.partialorder %v1909, %v1912
      %vm1915 = vmand %vm1477, %vm1913
      %vm1916 = vmand %vm1478, %vm1914
      %v1917 = vsel %vm1915, 1.0, 0.0
      %v1918 = vsel %vm1916, 1.0, 0.0
      %v1919 = vmul.f32 %v1861, %v1877
      %v1920 = vmul.f32 %v1862, %v1878
      %vm1921 = vcmp.gt.f32.partialorder %v1917, 0.0
      %vm1922 = vcmp.gt.f32.partialorder %v1918, 0.0
      %v1923 = vsel %vm1921, 1, 0
      %v1924 = vsel %vm1922, 1, 0
      %vm1925 = vcmp.eq.s32.totalorder %v1923, 1
      %vm1926 = vcmp.eq.s32.totalorder %v1924, 1
      %v1927 = vsel %vm1925, %v1919, -1e+30
      %v1928 = vsel %vm1926, %v1920, -1e+30
      %v1929 = vmax.f32 %v1927, %v1928
      %v1930 = vrot.slane %v1929, 4
      %v1931 = vmax.f32 %v1929, %v1930
      %v1932 = vrot.slane %v1931, 2
      %v1933 = vmax.f32 %v1931, %v1932
      %v1934 = vrot.slane %v1933, 1
      %v1935 = vmax.f32 %v1933, %v1934
      %v1936 = vadd.f32 %v1492, %v1935
      %v1937 = vsel %vm1009, %v1917, 0.0
      %v1938 = vsel %vm1009, %v1918, 0.0
      %v1939 = vadd.f32 %v1937, %v1938
      %1940 = vadd.xlane.f32.xlu0 %v1939
      %v1941 = vpop.xlane.xlu0 %1940
      %v1942 = vrot.slane %v1941, 4
      %v1943 = vadd.f32 %v1941, %v1942
      %v1944 = vrot.slane %v1943, 2
      %v1945 = vadd.f32 %v1943, %v1944
      %v1946 = vrot.slane %v1945, 1
      %v1947 = vadd.f32 %v1945, %v1946
      %s1948 = vtos %v1947
      %s1949 = smax.f32 %s1948, 1.0
      %v1950 = vmul.f32 %v1919, %v1917
      %v1951 = vmul.f32 %v1920, %v1918
      %v1952 = vadd.f32 %v1950, %v1951
      %v1953 = vrot.slane %v1952, 4
      %v1954 = vadd.f32 %v1952, %v1953
      %v1955 = vrot.slane %v1954, 2
      %v1956 = vadd.f32 %v1954, %v1955
      %v1957 = vrot.slane %v1956, 1
      %v1958 = vadd.f32 %v1956, %v1957
      %v1959 = vstv %s1949
      %v1960 = vrcp.pop %v1959
      %v1961 = vmul.f32 %v1958, %v1960
      %v1962 = vadd.f32 %v1518, %v1961
      %v1963 = vld [vmem:[%s7] sm:$0xff]
      %v1964 = vld [vmem:[%s7 + $0x8] sm:$0xff]
      %v1965 = vld [vmem:[%s7 + $0x10] sm:$0xff]
      %v1966 = vld [vmem:[%s7 + $0x18] sm:$0xff]
      %v1967 = vld [vmem:[%s7 + $0x20] sm:$0xff]
      %v1968 = vld [vmem:[%s7 + $0x28] sm:$0xff]
      %v1969 = vld [vmem:[%s7 + $0x30] sm:$0xff]
      %v1970 = vld [vmem:[%s7 + $0x38] sm:$0xff]
      %v1971 = vld [vmem:[%s7 + $0x40] sm:$0xff]
      %v1972 = vld [vmem:[%s7 + $0x48] sm:$0xff]
      %v1973 = vld [vmem:[%s7 + $0x50] sm:$0xff]
      %v1974 = vld [vmem:[%s7 + $0x58] sm:$0xff]
      %v1975 = vld [vmem:[%s7 + $0x60] sm:$0xff]
      %v1976 = vld [vmem:[%s7 + $0x68] sm:$0xff]
      %v1977 = vld [vmem:[%s7 + $0x70] sm:$0xff]
      %v1978 = vld [vmem:[%s7 + $0x78] sm:$0xff]
      %v1979 = vld [vmem:[%s8] sm:$0xff]
      %v1980 = vld [vmem:[%s8 + $0x8] sm:$0xff]
      %v1981 = vld [vmem:[%s8 + $0x10] sm:$0xff]
      %v1982 = vld [vmem:[%s8 + $0x18] sm:$0xff]
      %v1983 = vld [vmem:[%s8 + $0x20] sm:$0xff]
      %v1984 = vld [vmem:[%s8 + $0x28] sm:$0xff]
      %v1985 = vld [vmem:[%s8 + $0x30] sm:$0xff]
      %v1986 = vld [vmem:[%s8 + $0x38] sm:$0xff]
      %v1987 = vld [vmem:[%s8 + $0x40] sm:$0xff]
      %v1988 = vld [vmem:[%s8 + $0x48] sm:$0xff]
      %v1989 = vld [vmem:[%s8 + $0x50] sm:$0xff]
      %v1990 = vld [vmem:[%s8 + $0x58] sm:$0xff]
      %v1991 = vld [vmem:[%s8 + $0x60] sm:$0xff]
      %v1992 = vld [vmem:[%s8 + $0x68] sm:$0xff]
      %v1993 = vld [vmem:[%s8 + $0x70] sm:$0xff]
      %v1994 = vld [vmem:[%s8 + $0x78] sm:$0xff]
      %1995 = vmatprep.subr.mxu0 0.0
      %1996 = vmatpush1.msra.mxu0 %v1979
      %1997 = vmatprep.subr.mxu0 0.0
      %1998 = vmatpush1.msra.mxu0 %v1980
      %1999 = vmatprep.subr.mxu0 0.0
      %2000 = vmatpush1.msra.mxu0 %v1981
      %2001 = vmatprep.subr.mxu0 0.0
      %2002 = vmatpush1.msra.mxu0 %v1982
      %2003 = vmatprep.subr.mxu0 0.0
      %2004 = vmatpush1.msra.mxu0 %v1983
      %2005 = vmatprep.subr.mxu0 0.0
      %2006 = vmatpush1.msra.mxu0 %v1984
      %2007 = vmatprep.subr.mxu0 0.0
      %2008 = vmatpush1.msra.mxu0 %v1985
      %2009 = vmatprep.subr.mxu0 0.0
      %2010 = vmatpush1.msra.mxu0 %v1986
      %2011 = vmatprep.subr.mxu0 0.0
      %2012 = vmatpush1.msra.mxu0 %v1987
      %2013 = vmatprep.subr.mxu0 0.0
      %2014 = vmatpush1.msra.mxu0 %v1988
      %2015 = vmatprep.subr.mxu0 0.0
      %2016 = vmatpush1.msra.mxu0 %v1989
      %2017 = vmatprep.subr.mxu0 0.0
      %2018 = vmatpush1.msra.mxu0 %v1990
      %2019 = vmatprep.subr.mxu0 0.0
      %2020 = vmatpush1.msra.mxu0 %v1991
      %2021 = vmatprep.subr.mxu0 0.0
      %2022 = vmatpush1.msra.mxu0 %v1992
      %2023 = vmatprep.subr.mxu0 0.0
      %2024 = vmatpush1.msra.mxu0 %v1993
      %2025 = vmatprep.subr.mxu0 0.0
      %2026 = vmatpush1.msra.mxu0 %v1994
      %2027 = vmatprep.subr.mxu0 0.0
      %2028 = vmatpush1.msra.mxu0 0.0
      %2029 = vmatprep.subr.mxu0 0.0
      %2030 = vmatpush1.msra.mxu0 0.0
      %2031 = vmatprep.subr.mxu0 0.0
      %2032 = vmatpush1.msra.mxu0 0.0
      %2033 = vmatprep.subr.mxu0 0.0
      %2034 = vmatpush1.msra.mxu0 0.0
      %2035 = vmatprep.subr.mxu0 0.0
      %2036 = vmatpush1.msra.mxu0 0.0
      %2037 = vmatprep.subr.mxu0 0.0
      %2038 = vmatpush1.msra.mxu0 0.0
      %2039 = vmatprep.subr.mxu0 0.0
      %2040 = vmatpush1.msra.mxu0 0.0
      %2041 = vmatprep.subr.mxu0 0.0
      %2042 = vmatpush1.msra.mxu0 0.0
      %2043 = vmatprep.subr.mxu0 0.0
      %2044 = vmatpush1.msra.mxu0 0.0
      %2045 = vmatprep.subr.mxu0 0.0
      %2046 = vmatpush1.msra.mxu0 0.0
      %2047 = vmatprep.subr.mxu0 0.0
      %2048 = vmatpush1.msra.mxu0 0.0
      %2049 = vmatprep.subr.mxu0 0.0
      %2050 = vmatpush1.msra.mxu0 0.0
      %2051 = vmatprep.subr.mxu0 0.0
      %2052 = vmatpush1.msra.mxu0 0.0
      %2053 = vmatprep.subr.mxu0 0.0
      %2054 = vmatpush1.msra.mxu0 0.0
      %2055 = vmatprep.subr.mxu0 0.0
      %2056 = vmatpush1.msra.mxu0 0.0
      %2057 = vmatprep.subr.mxu0 0.0
      %2058 = vmatpush1.msra.mxu0 0.0
      %2059 = vmatprep.mubr.f32.mxu0 0.0
      %2060 = vmatmul.mubr.f32.gmra.mrb[0].mxu0 %v1962
      %v2061 = vpop.f32.mrb[0].mxu0
      %v2062 = vadd.f32 0.0, %v2061
      %v2063 = vpop.f32.mrb[0].mxu0
      %2064 = vdwg.mxu0
      %2065 = vmatprep.subr.mxu0 0.0
      %2066 = vmatpush1.msra.mxu0 %v1963
      %2067 = vmatprep.subr.mxu0 0.0
      %2068 = vmatpush1.msra.mxu0 %v1964
      %2069 = vmatprep.subr.mxu0 0.0
      %2070 = vmatpush1.msra.mxu0 %v1965
      %2071 = vmatprep.subr.mxu0 0.0
      %2072 = vmatpush1.msra.mxu0 %v1966
      %2073 = vmatprep.subr.mxu0 0.0
      %2074 = vmatpush1.msra.mxu0 %v1967
      %2075 = vmatprep.subr.mxu0 0.0
      %2076 = vmatpush1.msra.mxu0 %v1968
      %2077 = vmatprep.subr.mxu0 0.0
      %2078 = vmatpush1.msra.mxu0 %v1969
      %2079 = vmatprep.subr.mxu0 0.0
      %2080 = vmatpush1.msra.mxu0 %v1970
      %2081 = vmatprep.subr.mxu0 0.0
      %2082 = vmatpush1.msra.mxu0 %v1971
      %2083 = vmatprep.subr.mxu0 0.0
      %2084 = vmatpush1.msra.mxu0 %v1972
      %2085 = vmatprep.subr.mxu0 0.0
      %2086 = vmatpush1.msra.mxu0 %v1973
      %2087 = vmatprep.subr.mxu0 0.0
      %2088 = vmatpush1.msra.mxu0 %v1974
      %2089 = vmatprep.subr.mxu0 0.0
      %2090 = vmatpush1.msra.mxu0 %v1975
      %2091 = vmatprep.subr.mxu0 0.0
      %2092 = vmatpush1.msra.mxu0 %v1976
      %2093 = vmatprep.subr.mxu0 0.0
      %2094 = vmatpush1.msra.mxu0 %v1977
      %2095 = vmatprep.subr.mxu0 0.0
      %2096 = vmatpush1.msra.mxu0 %v1978
      %2097 = vmatprep.subr.mxu0 0.0
      %2098 = vmatpush1.msra.mxu0 0.0
      %2099 = vmatprep.subr.mxu0 0.0
      %2100 = vmatpush1.msra.mxu0 0.0
      %2101 = vmatprep.subr.mxu0 0.0
      %2102 = vmatpush1.msra.mxu0 0.0
      %2103 = vmatprep.subr.mxu0 0.0
      %2104 = vmatpush1.msra.mxu0 0.0
      %2105 = vmatprep.subr.mxu0 0.0
      %2106 = vmatpush1.msra.mxu0 0.0
      %2107 = vmatprep.subr.mxu0 0.0
      %2108 = vmatpush1.msra.mxu0 0.0
      %2109 = vmatprep.subr.mxu0 0.0
      %2110 = vmatpush1.msra.mxu0 0.0
      %2111 = vmatprep.subr.mxu0 0.0
      %2112 = vmatpush1.msra.mxu0 0.0
      %2113 = vmatprep.subr.mxu0 0.0
      %2114 = vmatpush1.msra.mxu0 0.0
      %2115 = vmatprep.subr.mxu0 0.0
      %2116 = vmatpush1.msra.mxu0 0.0
      %2117 = vmatprep.subr.mxu0 0.0
      %2118 = vmatpush1.msra.mxu0 0.0
      %2119 = vmatprep.subr.mxu0 0.0
      %2120 = vmatpush1.msra.mxu0 0.0
      %2121 = vmatprep.subr.mxu0 0.0
      %2122 = vmatpush1.msra.mxu0 0.0
      %2123 = vmatprep.subr.mxu0 0.0
      %2124 = vmatpush1.msra.mxu0 0.0
      %2125 = vmatprep.subr.mxu0 0.0
      %2126 = vmatpush1.msra.mxu0 0.0
      %2127 = vmatprep.subr.mxu0 0.0
      %2128 = vmatpush1.msra.mxu0 0.0
      %2129 = vmatprep.mubr.f32.mxu0 0.0
      %2130 = vmatmul.mubr.f32.gmra.mrb[0].mxu0 %v1936
      %v2131 = vpop.f32.mrb[0].mxu0
      %v2132 = vadd.f32 %v2062, %v2131
      %v2133 = vpop.f32.mrb[0].mxu0
      %2134 = vdwg.mxu0
      %v2135 = vld [vmem:[%s9] sm:$0x1]
      %v2136 = vadd.f32 %v2132, %v2135
      %v2137 = vmax.f32 %v2136, 0.0
      %v2138 = vld [vmem:[%s10] sm:$0xff]
      %v2139 = vld [vmem:[%s10 + $0x8] sm:$0xff]
      %v2140 = vld [vmem:[%s10 + $0x10] sm:$0xff]
      %v2141 = vld [vmem:[%s10 + $0x18] sm:$0xff]
      %v2142 = vld [vmem:[%s10 + $0x20] sm:$0xff]
      %v2143 = vld [vmem:[%s10 + $0x28] sm:$0xff]
      %v2144 = vld [vmem:[%s10 + $0x30] sm:$0xff]
      %v2145 = vld [vmem:[%s10 + $0x38] sm:$0xff]
      %v2146 = vld [vmem:[%s10 + $0x40] sm:$0xff]
      %v2147 = vld [vmem:[%s10 + $0x48] sm:$0xff]
      %v2148 = vld [vmem:[%s10 + $0x50] sm:$0xff]
      %v2149 = vld [vmem:[%s10 + $0x58] sm:$0xff]
      %v2150 = vld [vmem:[%s10 + $0x60] sm:$0xff]
      %v2151 = vld [vmem:[%s10 + $0x68] sm:$0xff]
      %v2152 = vld [vmem:[%s10 + $0x70] sm:$0xff]
      %v2153 = vld [vmem:[%s10 + $0x78] sm:$0xff]
      %v2154 = vld [vmem:[%s11] sm:$0x1]
      %2155 = vmatprep.subr.mxu0 0.0
      %2156 = vmatpush1.msra.mxu0 %v2138
      %2157 = vmatprep.subr.mxu0 0.0
      %2158 = vmatpush1.msra.mxu0 %v2139
      %2159 = vmatprep.subr.mxu0 0.0
      %2160 = vmatpush1.msra.mxu0 %v2140
      %2161 = vmatprep.subr.mxu0 0.0
      %2162 = vmatpush1.msra.mxu0 %v2141
      %2163 = vmatprep.subr.mxu0 0.0
      %2164 = vmatpush1.msra.mxu0 %v2142
      %2165 = vmatprep.subr.mxu0 0.0
      %2166 = vmatpush1.msra.mxu0 %v2143
      %2167 = vmatprep.subr.mxu0 0.0
      %2168 = vmatpush1.msra.mxu0 %v2144
      %2169 = vmatprep.subr.mxu0 0.0
      %2170 = vmatpush1.msra.mxu0 %v2145
      %2171 = vmatprep.subr.mxu0 0.0
      %2172 = vmatpush1.msra.mxu0 %v2146
      %2173 = vmatprep.subr.mxu0 0.0
      %2174 = vmatpush1.msra.mxu0 %v2147
      %2175 = vmatprep.subr.mxu0 0.0
      %2176 = vmatpush1.msra.mxu0 %v2148
      %2177 = vmatprep.subr.mxu0 0.0
      %2178 = vmatpush1.msra.mxu0 %v2149
      %2179 = vmatprep.subr.mxu0 0.0
      %2180 = vmatpush1.msra.mxu0 %v2150
      %2181 = vmatprep.subr.mxu0 0.0
      %2182 = vmatpush1.msra.mxu0 %v2151
      %2183 = vmatprep.subr.mxu0 0.0
      %2184 = vmatpush1.msra.mxu0 %v2152
      %2185 = vmatprep.subr.mxu0 0.0
      %2186 = vmatpush1.msra.mxu0 %v2153
      %2187 = vmatprep.subr.mxu0 0.0
      %2188 = vmatpush1.msra.mxu0 0.0
      %2189 = vmatprep.subr.mxu0 0.0
      %2190 = vmatpush1.msra.mxu0 0.0
      %2191 = vmatprep.subr.mxu0 0.0
      %2192 = vmatpush1.msra.mxu0 0.0
      %2193 = vmatprep.subr.mxu0 0.0
      %2194 = vmatpush1.msra.mxu0 0.0
      %2195 = vmatprep.subr.mxu0 0.0
      %2196 = vmatpush1.msra.mxu0 0.0
      %2197 = vmatprep.subr.mxu0 0.0
      %2198 = vmatpush1.msra.mxu0 0.0
      %2199 = vmatprep.subr.mxu0 0.0
      %2200 = vmatpush1.msra.mxu0 0.0
      %2201 = vmatprep.subr.mxu0 0.0
      %2202 = vmatpush1.msra.mxu0 0.0
      %2203 = vmatprep.subr.mxu0 0.0
      %2204 = vmatpush1.msra.mxu0 0.0
      %2205 = vmatprep.subr.mxu0 0.0
      %2206 = vmatpush1.msra.mxu0 0.0
      %2207 = vmatprep.subr.mxu0 0.0
      %2208 = vmatpush1.msra.mxu0 0.0
      %2209 = vmatprep.subr.mxu0 0.0
      %2210 = vmatpush1.msra.mxu0 0.0
      %2211 = vmatprep.subr.mxu0 0.0
      %2212 = vmatpush1.msra.mxu0 0.0
      %2213 = vmatprep.subr.mxu0 0.0
      %2214 = vmatpush1.msra.mxu0 0.0
      %2215 = vmatprep.subr.mxu0 0.0
      %2216 = vmatpush1.msra.mxu0 0.0
      %2217 = vmatprep.subr.mxu0 0.0
      %2218 = vmatpush1.msra.mxu0 0.0
      %2219 = vmatprep.mubr.f32.mxu0 0.0
      %2220 = vmatmul.mubr.f32.gmra.mrb[0].mxu0 %v2137
      %v2221 = vpop.f32.mrb[0].mxu0
      %v2222 = vadd.f32 %v2154, %v2221
      %v2223 = vpop.f32.mrb[0].mxu0
      %2224 = vdwg.mxu0
      %v2225 = vmax.f32 %v2222, 0.0
      %v2226 = vld [vmem:[%s12] sm:$0xff]
      %v2227 = vld [vmem:[%s12 + $0x8] sm:$0xff]
      %v2228 = vld [vmem:[%s12 + $0x10] sm:$0xff]
      %v2229 = vld [vmem:[%s12 + $0x18] sm:$0xff]
      %v2230 = vld [vmem:[%s12 + $0x20] sm:$0xff]
      %v2231 = vld [vmem:[%s12 + $0x28] sm:$0xff]
      %v2232 = vld [vmem:[%s12 + $0x30] sm:$0xff]
      %v2233 = vld [vmem:[%s12 + $0x38] sm:$0xff]
      %v2234 = vld [vmem:[#allocation4] sm:$0x1]
      %vm2235 = vcmask 523264
      %v2237 = vsel %vm2235, %v2225, 0
      %2239 = vmatprep.subr.mxu0 0.0
      %2240 = vmatpush1.msra.mxu0 %v2226
      %2241 = vmatprep.subr.mxu0 0.0
      %2242 = vmatpush1.msra.mxu0 %v2227
      %2243 = vmatprep.subr.mxu0 0.0
      %2244 = vmatpush1.msra.mxu0 %v2228
      %2245 = vmatprep.subr.mxu0 0.0
      %2246 = vmatpush1.msra.mxu0 %v2229
      %2247 = vmatprep.subr.mxu0 0.0
      %2248 = vmatpush1.msra.mxu0 %v2230
      %2249 = vmatprep.subr.mxu0 0.0
      %2250 = vmatpush1.msra.mxu0 %v2231
      %2251 = vmatprep.subr.mxu0 0.0
      %2252 = vmatpush1.msra.mxu0 %v2232
      %2253 = vmatprep.subr.mxu0 0.0
      %2254 = vmatpush1.msra.mxu0 %v2233
      %2255 = vmatprep.subr.mxu0 0.0
      %2256 = vmatpush1.msra.mxu0 0.0
      %2257 = vmatprep.subr.mxu0 0.0
      %2258 = vmatpush1.msra.mxu0 0.0
      %2259 = vmatprep.subr.mxu0 0.0
      %2260 = vmatpush1.msra.mxu0 0.0
      %2261 = vmatprep.subr.mxu0 0.0
      %2262 = vmatpush1.msra.mxu0 0.0
      %2263 = vmatprep.subr.mxu0 0.0
      %2264 = vmatpush1.msra.mxu0 0.0
      %2265 = vmatprep.subr.mxu0 0.0
      %2266 = vmatpush1.msra.mxu0 0.0
      %2267 = vmatprep.subr.mxu0 0.0
      %2268 = vmatpush1.msra.mxu0 0.0
      %2269 = vmatprep.subr.mxu0 0.0
      %2270 = vmatpush1.msra.mxu0 0.0
      %2271 = vmatprep.subr.mxu0 0.0
      %2272 = vmatpush1.msra.mxu0 0.0
      %2273 = vmatprep.subr.mxu0 0.0
      %2274 = vmatpush1.msra.mxu0 0.0
      %2275 = vmatprep.subr.mxu0 0.0
      %2276 = vmatpush1.msra.mxu0 0.0
      %2277 = vmatprep.subr.mxu0 0.0
      %2278 = vmatpush1.msra.mxu0 0.0
      %2279 = vmatprep.subr.mxu0 0.0
      %2280 = vmatpush1.msra.mxu0 0.0
      %2281 = vmatprep.subr.mxu0 0.0
      %2282 = vmatpush1.msra.mxu0 0.0
      %2283 = vmatprep.subr.mxu0 0.0
      %2284 = vmatpush1.msra.mxu0 0.0
      %2285 = vmatprep.subr.mxu0 0.0
      %2286 = vmatpush1.msra.mxu0 0.0
      %2287 = vmatprep.subr.mxu0 0.0
      %2288 = vmatpush1.msra.mxu0 0.0
      %2289 = vmatprep.subr.mxu0 0.0
      %2290 = vmatpush1.msra.mxu0 0.0
      %2291 = vmatprep.subr.mxu0 0.0
      %2292 = vmatpush1.msra.mxu0 0.0
      %2293 = vmatprep.subr.mxu0 0.0
      %2294 = vmatpush1.msra.mxu0 0.0
      %2295 = vmatprep.subr.mxu0 0.0
      %2296 = vmatpush1.msra.mxu0 0.0
      %2297 = vmatprep.subr.mxu0 0.0
      %2298 = vmatpush1.msra.mxu0 0.0
      %2299 = vmatprep.subr.mxu0 0.0
      %2300 = vmatpush1.msra.mxu0 0.0
      %2301 = vmatprep.subr.mxu0 0.0
      %2302 = vmatpush1.msra.mxu0 0.0
      %2303 = vmatprep.mubr.f32.mxu0 0.0
      %2304 = vmatmul.mubr.f32.gmra.mrb[0].mxu0 %v2237
      %v2305 = vpop.f32.mrb[0].mxu0
      %v2306 = vadd.f32 %v2234, %v2305
      %v2307 = vpop.f32.mrb[0].mxu0
      %2308 = vdwg.mxu0
      %v2309 = vand.u32 2147483647, %v2306
      %v2310 = vsub.f32 0.0, %v2309
      %v2311 = vmul.f32 %v2310, 1.442695
      %v2312 = vpow.pop %v2311
      %v2313 = vadd.f32 %v2312, 1.0
      %v2314 = vrcp.pop %v2313
      %v2315 = vmul.f32 1.0, %v2314
      %vm2316 = vcmp.ge.f32.partialorder %v2306, 0.0
      %v2317 = vsub.f32 1.0, %v2315
      %v2318 = vsel %vm2316, %v2315, %v2317
      %2320 = vset.pattern.permute.xlu0 0
      %2321 = vperm.xlu0 %2320, %v2318
      %v2322 = vpop.permute.xlu0 %2321
      %2324 = vst [vmem:[%s465] sm:$0x1] %v2322
      %p2325 = scmp.lt.s32.totalorder %s33, 1
      %s2326 = scalar_select %p2325, %s33, 1
      %s2327 = scalar_lea.vmem %s14, %s2326
      // Predicated region
      $region73: #{robotnet_forward.1} parent=71 // pred_check
        %p2328 = pneg %p334
      $region74: #{robotnet_forward.1} parent=71 // pred_check_branch
        %2330 = sbr.rel (%p2328) target = $region76
      $region75: #{robotnet_forward.1} parent=71 // pred_region
        _
      $region76: #{robotnet_forward.1} parent=71 // pred_fallthru
        _
    $region72: #{robotnet_forward.1} parent=5 // pred_fallthru
      _
    %p2331 = scmp.le.s32.totalorder 2, %s28
    // Predicated region
    $region77: #{robotnet_forward.1} parent=5 // pred_check
      %p2332 = pneg %p2331
    $region78: #{robotnet_forward.1} parent=5 // pred_check_branch
      %2334 = sbr.rel (%p2332) target = $region80
    $region79: #{robotnet_forward.1} parent=5 // pred_region
      %s2335 = ssub.s32 %s28, 2
      // Predicated region
      $region81: #{robotnet_forward.1} parent=79 // pred_check
        %p2336 = pneg %p340
      $region82: #{robotnet_forward.1} parent=79 // pred_check_branch
        %2338 = sbr.rel (%p2336) target = $region84
      $region83: #{robotnet_forward.1} parent=79 // pred_region
        %p2339 = scmp.lt.s32.totalorder %s34, 1
        %s2340 = scalar_select %p2339, %s34, 1
        %s2341 = scalar_lea.vmem %s14, %s2340
      $region84: #{robotnet_forward.1} parent=79 // pred_fallthru
        _
    $region80: #{robotnet_forward.1} parent=5 // pred_fallthru
      _
  $region6: #{robotnet_forward.1} parent=0 // loop_footer
    %s32 = sadd.s32 1, %s28
  $region7: #{robotnet_forward.1} parent=0 // loop_footer_branch
    %27 = sbr.rel target = $region3
  $region8: #{robotnet_forward.1} parent=0 // loop_exit
    _

</llo_original>
